<compile_context>
chip_gen: v6e
topology: v6e:2x2x1
jax: 0.10.0
libtpu: 0.0.40
codegen_flags: <defaults>
</compile_context>

<pallas_src>
import numpy as np

import jax
import jax.numpy as jnp
from jax.experimental import pallas as pl
from jax.experimental.pallas import tpu as pltpu


# --------------------------- host-side constant prep ---------------------------
def _tap_selectors(h, w, ksize, stride, pad):
    """0/1 matrices T[t]: (x2d @ T[t])[c, oh*Wo+ow] == x_padded[c, oh*s+kh-pad, ow*s+kw-pad]."""
    ho = (h + 2 * pad - ksize) // stride + 1
    wo = (w + 2 * pad - ksize) // stride + 1
    sel = np.zeros((ksize * ksize, h * w, ho * wo), np.float32)
    for kh in range(ksize):
        for kw in range(ksize):
            t = kh * ksize + kw
            for oh in range(ho):
                ih = oh * stride + kh - pad
                if ih < 0 or ih >= h:
                    continue
                for ow in range(wo):
                    iw = ow * stride + kw - pad
                    if iw < 0 or iw >= w:
                        continue
                    sel[t, ih * w + iw, oh * wo + ow] = 1.0
    return sel, ho, wo


# --------------------------------- the kernel ----------------------------------
def _encoder_kernel(x_ref, w1_ref, t1_ref, b1_ref,
                    w2_ref, t2_ref, b2_ref, mlin_ref, blin_ref, o_ref):
    f32, bf16 = jnp.float32, jnp.bfloat16
    n_tap, c1, _ = w1_ref.shape
    p1 = t1_ref.shape[2]
    c2 = w2_ref.shape[1]
    p2 = t2_ref.shape[2]

    x = x_ref[0]                                             # (Cin, H*W) bf16

    # conv1 (3x3, stride 2, pad 1): gather-by-matmul taps, bf16 MXU, f32 accumulate.
    acc = jnp.zeros((c1, p1), f32)
    for t in range(n_tap):
        tap = jnp.dot(x, t1_ref[t], preferred_element_type=f32).astype(bf16)
        acc = acc + jnp.dot(w1_ref[t], tap, preferred_element_type=f32)
    y1 = jnp.maximum(acc + b1_ref[...], 0.0).astype(bf16)    # (C1, Ho1*Wo1)

    # conv2 (3x3, stride 2, pad 1)
    acc = jnp.zeros((c2, p2), f32)
    for t in range(n_tap):
        tap = jnp.dot(y1, t2_ref[t], preferred_element_type=f32).astype(bf16)
        acc = acc + jnp.dot(w2_ref[t], tap, preferred_element_type=f32)
    y2 = jnp.maximum(acc + b2_ref[...], 0.0).astype(bf16)    # (C2, Ho2*Wo2)

    # width-Linear folded in as a block-diagonal matmul -> lane-dense (C2, Ho2*E).
    out = jnp.dot(y2, mlin_ref[...], preferred_element_type=f32) + blin_ref[...]
    o_ref[0] = out.astype(o_ref.dtype)


# --------------------------------- the wrapper ----------------------------------
def encoder_forward(params, x_nchw):
    """Exact data flow of Encoder.forward (the unassigned .view() is a no-op)."""
    b, c, h, w = x_nchw.shape
    w1, b1 = params["w1"], params["b1"]
    w2, b2 = params["w2"], params["b2"]
    w_lin, b_lin = params["w_lin"], params["b_lin"]
    c1, c2, embed = w1.shape[0], w2.shape[0], w_lin.shape[0]
    k = w1.shape[2]
    bf16, f32 = jnp.bfloat16, jnp.float32

    t1_np, ho1, wo1 = _tap_selectors(h, w, k, 2, 1)
    t2_np, ho2, wo2 = _tap_selectors(ho1, wo1, k, 2, 1)
    p1, p2 = ho1 * wo1, ho2 * wo2
    assert w_lin.shape[1] == wo2  # literal forward: Linear acts on the width axis

    # Weight / input packing (tiny host ops; bf16 MXU operands).
    x2d = x_nchw.reshape(b, c, h * w).astype(bf16)
    w1_t = jnp.transpose(w1, (2, 3, 0, 1)).reshape(k * k, c1, c).astype(bf16)
    w2_t = jnp.transpose(w2, (2, 3, 0, 1)).reshape(k * k, c2, c1).astype(bf16)
    t1 = jnp.asarray(t1_np, bf16)                     # (9, H*W, P1)   constant
    t2 = jnp.asarray(t2_np, bf16)                     # (9, P1, P2)    constant
    b1c = b1.reshape(c1, 1).astype(f32)
    b2c = b2.reshape(c2, 1).astype(f32)
    # Block-diagonal Linear: M[(ho*Wo2+w), (ho*E+e)] = w_lin[e, w]
    m_lin = jnp.kron(jnp.eye(ho2, dtype=f32), jnp.transpose(w_lin)).astype(bf16)
    blin = jnp.tile(b_lin, ho2).reshape(1, ho2 * embed).astype(f32)

    out = pl.pallas_call(
        _encoder_kernel,
        out_shape=jax.ShapeDtypeStruct((b, c2, ho2 * embed), f32),
        grid_spec=pltpu.PrefetchScalarGridSpec(
            num_scalar_prefetch=0,
            grid=(b,),
            in_specs=[
                pl.BlockSpec((1, c, h * w), lambda i: (i, 0, 0)),        # x (per image)
                pl.BlockSpec((k * k, c1, c), lambda i: (0, 0, 0)),       # conv1 weights
                pl.BlockSpec((k * k, h * w, p1), lambda i: (0, 0, 0)),   # conv1 tap sel
                pl.BlockSpec((c1, 1), lambda i: (0, 0)),                 # conv1 bias
                pl.BlockSpec((k * k, c2, c1), lambda i: (0, 0, 0)),      # conv2 weights
                pl.BlockSpec((k * k, p1, p2), lambda i: (0, 0, 0)),      # conv2 tap sel
                pl.BlockSpec((c2, 1), lambda i: (0, 0)),                 # conv2 bias
                pl.BlockSpec((p2, ho2 * embed), lambda i: (0, 0)),       # linear (blockdiag)
                pl.BlockSpec((1, ho2 * embed), lambda i: (0, 0)),        # linear bias
            ],
            out_specs=pl.BlockSpec((1, c2, ho2 * embed), lambda i: (i, 0, 0)),
        ),
        compiler_params=pltpu.CompilerParams(dimension_semantics=("parallel",)),
    )(x2d, w1_t, t1, b1c, w2_t, t2, b2c, m_lin, blin)

    return out.reshape(b, c2, ho2, embed)   # (B, 8c, h//4, embed); contiguous reshape


# --------------------------- pure-JAX f32 reference ------------------------------
def encoder_reference(params, x_nchw):
    dn = ("NCHW", "OIHW", "NCHW")
    y = jax.lax.conv_general_dilated(
        x_nchw, params["w1"], (2, 2), ((1, 1), (1, 1)), dimension_numbers=dn)
    y = jax.nn.relu(y + params["b1"].reshape(1, -1, 1, 1))
    y = jax.lax.conv_general_dilated(
        y, params["w2"], (2, 2), ((1, 1), (1, 1)), dimension_numbers=dn)
    y = jax.nn.relu(y + params["b2"].reshape(1, -1, 1, 1))
    return jnp.einsum("bchw,ew->bche", y, params["w_lin"]) + params["b_lin"]


# ------------------------------------ main ---------------------------------------
if __name__ == "__main__":
    B, c, h, w, embed = 2, 4, 16, 16, 32
    key = jax.random.PRNGKey(0)
    k1, k2, k3, k4, k5, k6, kx = jax.random.split(key, 7)

    lin_in = w // 4   # see TODO(synk) above
    params = {
        "w1": 0.1 * jax.random.normal(k1, (c * 4, c, 3, 3), jnp.float32),
        "b1": 0.1 * jax.random.normal(k2, (c * 4,), jnp.float32),
        "w2": 0.1 * jax.random.normal(k3, (c * 8, c * 4, 3, 3), jnp.float32),
        "b2": 0.1 * jax.random.normal(k4, (c * 8,), jnp.float32),
        "w_lin": 0.1 * jax.random.normal(k5, (embed, lin_in), jnp.float32),
        "b_lin": 0.1 * jax.random.normal(k6, (embed,), jnp.float32),
    }
    x = jax.random.normal(kx, (B, c, h, w), jnp.float32)

    out = jax.jit(encoder_forward)(params, x)
    out = jax.block_until_ready(out)

    ref = jax.block_until_ready(encoder_reference(params, x))
    assert out.shape == (B, c * 8, h // 4, embed), out.shape
    # bf16 MXU operands (f32 accumulation) vs pure-f32 reference -> relaxed tolerance.
    np.testing.assert_allclose(np.asarray(out), np.asarray(ref),
                               rtol=2e-2, atol=2e-2)
    print("KERNEL_OK")
</pallas_src>

<mosaic_0001>
module attributes {stable_mosaic.version = 11 : i64} {
  func.func @_encoder_kernel(%arg0: i32, %arg1: memref<1x4x256xbf16, #tpu.memory_space<vmem>>, %arg2: memref<9x16x4xbf16, #tpu.memory_space<vmem>>, %arg3: memref<9x256x64xbf16, #tpu.memory_space<vmem>>, %arg4: memref<16x1xf32, #tpu.memory_space<vmem>>, %arg5: memref<9x32x16xbf16, #tpu.memory_space<vmem>>, %arg6: memref<9x64x16xbf16, #tpu.memory_space<vmem>>, %arg7: memref<32x1xf32, #tpu.memory_space<vmem>>, %arg8: memref<16x128xbf16, #tpu.memory_space<vmem>>, %arg9: memref<1x128xf32, #tpu.memory_space<vmem>>, %arg10: memref<1x32x128xf32, #tpu.memory_space<vmem>>) attributes {dimension_semantics = [#tpu.dimension_semantics<parallel>], iteration_bounds = array<i64: 2>, scalar_prefetch = 0 : i64, scratch_operands = 0 : i64, tpu.core_type = #tpu.core_type<tc>, window_params = [{transform_indices = @transform_0, window_bounds = array<i64: 1, 4, 256>}, {pipeline_mode = #tpu.pipeline_mode<synchronous>, transform_indices = @transform_1, window_bounds = array<i64: 9, 16, 4>}, {pipeline_mode = #tpu.pipeline_mode<synchronous>, transform_indices = @transform_2, window_bounds = array<i64: 9, 256, 64>}, {pipeline_mode = #tpu.pipeline_mode<synchronous>, transform_indices = @transform_3, window_bounds = array<i64: 16, 1>}, {pipeline_mode = #tpu.pipeline_mode<synchronous>, transform_indices = @transform_4, window_bounds = array<i64: 9, 32, 16>}, {pipeline_mode = #tpu.pipeline_mode<synchronous>, transform_indices = @transform_5, window_bounds = array<i64: 9, 64, 16>}, {pipeline_mode = #tpu.pipeline_mode<synchronous>, transform_indices = @transform_6, window_bounds = array<i64: 32, 1>}, {pipeline_mode = #tpu.pipeline_mode<synchronous>, transform_indices = @transform_7, window_bounds = array<i64: 16, 128>}, {pipeline_mode = #tpu.pipeline_mode<synchronous>, transform_indices = @transform_8, window_bounds = array<i64: 1, 128>}, {transform_indices = @transform_9, window_bounds = array<i64: 1, 32, 128>}]} {
    %c0 = arith.constant 0 : index
    %c0_0 = arith.constant 0 : index
    %c0_1 = arith.constant 0 : index
    %0 = vector.load %arg1[%c0, %c0_0, %c0_1] : memref<1x4x256xbf16, #tpu.memory_space<vmem>>, vector<1x4x256xbf16>
    %1 = vector.shape_cast %0 : vector<1x4x256xbf16> to vector<4x256xbf16>
    %cst = arith.constant 0.000000e+00 : f32
    %2 = vector.broadcast %cst : f32 to vector<16x64xf32>
    %c0_2 = arith.constant 0 : index
    %c0_3 = arith.constant 0 : index
    %c0_4 = arith.constant 0 : index
    %3 = vector.load %arg3[%c0_2, %c0_3, %c0_4] : memref<9x256x64xbf16, #tpu.memory_space<vmem>>, vector<1x256x64xbf16>
    %4 = vector.shape_cast %3 : vector<1x256x64xbf16> to vector<256x64xbf16>
    %cst_5 = arith.constant dense<0.000000e+00> : vector<4x64xf32>
    %5 = tpu.matmul %1, %4, %cst_5 {dimension_numbers = #tpu.dot_dimension_numbers<[1], [0], [0], [1], [0, 0, 1, 1], [], []>} : vector<4x256xbf16>, vector<256x64xbf16>, vector<4x64xf32> -> vector<4x64xf32>
    %6 = arith.truncf %5 : vector<4x64xf32> to vector<4x64xbf16>
    %c0_6 = arith.constant 0 : index
    %c0_7 = arith.constant 0 : index
    %c0_8 = arith.constant 0 : index
    %7 = vector.load %arg2[%c0_6, %c0_7, %c0_8] : memref<9x16x4xbf16, #tpu.memory_space<vmem>>, vector<1x16x4xbf16>
    %8 = vector.shape_cast %7 : vector<1x16x4xbf16> to vector<16x4xbf16>
    %cst_9 = arith.constant dense<0.000000e+00> : vector<16x64xf32>
    %9 = tpu.matmul %8, %6, %cst_9 {dimension_numbers = #tpu.dot_dimension_numbers<[1], [0], [0], [1], [0, 0, 1, 1], [], []>} : vector<16x4xbf16>, vector<4x64xbf16>, vector<16x64xf32> -> vector<16x64xf32>
    %10 = arith.addf %2, %9 : vector<16x64xf32>
    %c1 = arith.constant 1 : index
    %c0_10 = arith.constant 0 : index
    %c0_11 = arith.constant 0 : index
    %11 = vector.load %arg3[%c1, %c0_10, %c0_11] : memref<9x256x64xbf16, #tpu.memory_space<vmem>>, vector<1x256x64xbf16>
    %12 = vector.shape_cast %11 : vector<1x256x64xbf16> to vector<256x64xbf16>
    %cst_12 = arith.constant dense<0.000000e+00> : vector<4x64xf32>
    %13 = tpu.matmul %1, %12, %cst_12 {dimension_numbers = #tpu.dot_dimension_numbers<[1], [0], [0], [1], [0, 0, 1, 1], [], []>} : vector<4x256xbf16>, vector<256x64xbf16>, vector<4x64xf32> -> vector<4x64xf32>
    %14 = arith.truncf %13 : vector<4x64xf32> to vector<4x64xbf16>
    %c1_13 = arith.constant 1 : index
    %c0_14 = arith.constant 0 : index
    %c0_15 = arith.constant 0 : index
    %15 = vector.load %arg2[%c1_13, %c0_14, %c0_15] : memref<9x16x4xbf16, #tpu.memory_space<vmem>>, vector<1x16x4xbf16>
    %16 = vector.shape_cast %15 : vector<1x16x4xbf16> to vector<16x4xbf16>
    %cst_16 = arith.constant dense<0.000000e+00> : vector<16x64xf32>
    %17 = tpu.matmul %16, %14, %cst_16 {dimension_numbers = #tpu.dot_dimension_numbers<[1], [0], [0], [1], [0, 0, 1, 1], [], []>} : vector<16x4xbf16>, vector<4x64xbf16>, vector<16x64xf32> -> vector<16x64xf32>
    %18 = arith.addf %10, %17 : vector<16x64xf32>
    %c2 = arith.constant 2 : index
    %c0_17 = arith.constant 0 : index
    %c0_18 = arith.constant 0 : index
    %19 = vector.load %arg3[%c2, %c0_17, %c0_18] : memref<9x256x64xbf16, #tpu.memory_space<vmem>>, vector<1x256x64xbf16>
    %20 = vector.shape_cast %19 : vector<1x256x64xbf16> to vector<256x64xbf16>
    %cst_19 = arith.constant dense<0.000000e+00> : vector<4x64xf32>
    %21 = tpu.matmul %1, %20, %cst_19 {dimension_numbers = #tpu.dot_dimension_numbers<[1], [0], [0], [1], [0, 0, 1, 1], [], []>} : vector<4x256xbf16>, vector<256x64xbf16>, vector<4x64xf32> -> vector<4x64xf32>
    %22 = arith.truncf %21 : vector<4x64xf32> to vector<4x64xbf16>
    %c2_20 = arith.constant 2 : index
    %c0_21 = arith.constant 0 : index
    %c0_22 = arith.constant 0 : index
    %23 = vector.load %arg2[%c2_20, %c0_21, %c0_22] : memref<9x16x4xbf16, #tpu.memory_space<vmem>>, vector<1x16x4xbf16>
    %24 = vector.shape_cast %23 : vector<1x16x4xbf16> to vector<16x4xbf16>
    %cst_23 = arith.constant dense<0.000000e+00> : vector<16x64xf32>
    %25 = tpu.matmul %24, %22, %cst_23 {dimension_numbers = #tpu.dot_dimension_numbers<[1], [0], [0], [1], [0, 0, 1, 1], [], []>} : vector<16x4xbf16>, vector<4x64xbf16>, vector<16x64xf32> -> vector<16x64xf32>
    %26 = arith.addf %18, %25 : vector<16x64xf32>
    %c3 = arith.constant 3 : index
    %c0_24 = arith.constant 0 : index
    %c0_25 = arith.constant 0 : index
    %27 = vector.load %arg3[%c3, %c0_24, %c0_25] : memref<9x256x64xbf16, #tpu.memory_space<vmem>>, vector<1x256x64xbf16>
    %28 = vector.shape_cast %27 : vector<1x256x64xbf16> to vector<256x64xbf16>
    %cst_26 = arith.constant dense<0.000000e+00> : vector<4x64xf32>
    %29 = tpu.matmul %1, %28, %cst_26 {dimension_numbers = #tpu.dot_dimension_numbers<[1], [0], [0], [1], [0, 0, 1, 1], [], []>} : vector<4x256xbf16>, vector<256x64xbf16>, vector<4x64xf32> -> vector<4x64xf32>
    %30 = arith.truncf %29 : vector<4x64xf32> to vector<4x64xbf16>
    %c3_27 = arith.constant 3 : index
    %c0_28 = arith.constant 0 : index
    %c0_29 = arith.constant 0 : index
    %31 = vector.load %arg2[%c3_27, %c0_28, %c0_29] : memref<9x16x4xbf16, #tpu.memory_space<vmem>>, vector<1x16x4xbf16>
    %32 = vector.shape_cast %31 : vector<1x16x4xbf16> to vector<16x4xbf16>
    %cst_30 = arith.constant dense<0.000000e+00> : vector<16x64xf32>
    %33 = tpu.matmul %32, %30, %cst_30 {dimension_numbers = #tpu.dot_dimension_numbers<[1], [0], [0], [1], [0, 0, 1, 1], [], []>} : vector<16x4xbf16>, vector<4x64xbf16>, vector<16x64xf32> -> vector<16x64xf32>
    %34 = arith.addf %26, %33 : vector<16x64xf32>
    %c4 = arith.constant 4 : index
    %c0_31 = arith.constant 0 : index
    %c0_32 = arith.constant 0 : index
    %35 = vector.load %arg3[%c4, %c0_31, %c0_32] : memref<9x256x64xbf16, #tpu.memory_space<vmem>>, vector<1x256x64xbf16>
    %36 = vector.shape_cast %35 : vector<1x256x64xbf16> to vector<256x64xbf16>
    %cst_33 = arith.constant dense<0.000000e+00> : vector<4x64xf32>
    %37 = tpu.matmul %1, %36, %cst_33 {dimension_numbers = #tpu.dot_dimension_numbers<[1], [0], [0], [1], [0, 0, 1, 1], [], []>} : vector<4x256xbf16>, vector<256x64xbf16>, vector<4x64xf32> -> vector<4x64xf32>
    %38 = arith.truncf %37 : vector<4x64xf32> to vector<4x64xbf16>
    %c4_34 = arith.constant 4 : index
    %c0_35 = arith.constant 0 : index
    %c0_36 = arith.constant 0 : index
    %39 = vector.load %arg2[%c4_34, %c0_35, %c0_36] : memref<9x16x4xbf16, #tpu.memory_space<vmem>>, vector<1x16x4xbf16>
    %40 = vector.shape_cast %39 : vector<1x16x4xbf16> to vector<16x4xbf16>
    %cst_37 = arith.constant dense<0.000000e+00> : vector<16x64xf32>
    %41 = tpu.matmul %40, %38, %cst_37 {dimension_numbers = #tpu.dot_dimension_numbers<[1], [0], [0], [1], [0, 0, 1, 1], [], []>} : vector<16x4xbf16>, vector<4x64xbf16>, vector<16x64xf32> -> vector<16x64xf32>
    %42 = arith.addf %34, %41 : vector<16x64xf32>
    %c5 = arith.constant 5 : index
    %c0_38 = arith.constant 0 : index
    %c0_39 = arith.constant 0 : index
    %43 = vector.load %arg3[%c5, %c0_38, %c0_39] : memref<9x256x64xbf16, #tpu.memory_space<vmem>>, vector<1x256x64xbf16>
    %44 = vector.shape_cast %43 : vector<1x256x64xbf16> to vector<256x64xbf16>
    %cst_40 = arith.constant dense<0.000000e+00> : vector<4x64xf32>
    %45 = tpu.matmul %1, %44, %cst_40 {dimension_numbers = #tpu.dot_dimension_numbers<[1], [0], [0], [1], [0, 0, 1, 1], [], []>} : vector<4x256xbf16>, vector<256x64xbf16>, vector<4x64xf32> -> vector<4x64xf32>
    %46 = arith.truncf %45 : vector<4x64xf32> to vector<4x64xbf16>
    %c5_41 = arith.constant 5 : index
    %c0_42 = arith.constant 0 : index
    %c0_43 = arith.constant 0 : index
    %47 = vector.load %arg2[%c5_41, %c0_42, %c0_43] : memref<9x16x4xbf16, #tpu.memory_space<vmem>>, vector<1x16x4xbf16>
    %48 = vector.shape_cast %47 : vector<1x16x4xbf16> to vector<16x4xbf16>
    %cst_44 = arith.constant dense<0.000000e+00> : vector<16x64xf32>
    %49 = tpu.matmul %48, %46, %cst_44 {dimension_numbers = #tpu.dot_dimension_numbers<[1], [0], [0], [1], [0, 0, 1, 1], [], []>} : vector<16x4xbf16>, vector<4x64xbf16>, vector<16x64xf32> -> vector<16x64xf32>
    %50 = arith.addf %42, %49 : vector<16x64xf32>
    %c6 = arith.constant 6 : index
    %c0_45 = arith.constant 0 : index
    %c0_46 = arith.constant 0 : index
    %51 = vector.load %arg3[%c6, %c0_45, %c0_46] : memref<9x256x64xbf16, #tpu.memory_space<vmem>>, vector<1x256x64xbf16>
    %52 = vector.shape_cast %51 : vector<1x256x64xbf16> to vector<256x64xbf16>
    %cst_47 = arith.constant dense<0.000000e+00> : vector<4x64xf32>
    %53 = tpu.matmul %1, %52, %cst_47 {dimension_numbers = #tpu.dot_dimension_numbers<[1], [0], [0], [1], [0, 0, 1, 1], [], []>} : vector<4x256xbf16>, vector<256x64xbf16>, vector<4x64xf32> -> vector<4x64xf32>
    %54 = arith.truncf %53 : vector<4x64xf32> to vector<4x64xbf16>
    %c6_48 = arith.constant 6 : index
    %c0_49 = arith.constant 0 : index
    %c0_50 = arith.constant 0 : index
    %55 = vector.load %arg2[%c6_48, %c0_49, %c0_50] : memref<9x16x4xbf16, #tpu.memory_space<vmem>>, vector<1x16x4xbf16>
    %56 = vector.shape_cast %55 : vector<1x16x4xbf16> to vector<16x4xbf16>
    %cst_51 = arith.constant dense<0.000000e+00> : vector<16x64xf32>
    %57 = tpu.matmul %56, %54, %cst_51 {dimension_numbers = #tpu.dot_dimension_numbers<[1], [0], [0], [1], [0, 0, 1, 1], [], []>} : vector<16x4xbf16>, vector<4x64xbf16>, vector<16x64xf32> -> vector<16x64xf32>
    %58 = arith.addf %50, %57 : vector<16x64xf32>
    %c7 = arith.constant 7 : index
    %c0_52 = arith.constant 0 : index
    %c0_53 = arith.constant 0 : index
    %59 = vector.load %arg3[%c7, %c0_52, %c0_53] : memref<9x256x64xbf16, #tpu.memory_space<vmem>>, vector<1x256x64xbf16>
    %60 = vector.shape_cast %59 : vector<1x256x64xbf16> to vector<256x64xbf16>
    %cst_54 = arith.constant dense<0.000000e+00> : vector<4x64xf32>
    %61 = tpu.matmul %1, %60, %cst_54 {dimension_numbers = #tpu.dot_dimension_numbers<[1], [0], [0], [1], [0, 0, 1, 1], [], []>} : vector<4x256xbf16>, vector<256x64xbf16>, vector<4x64xf32> -> vector<4x64xf32>
    %62 = arith.truncf %61 : vector<4x64xf32> to vector<4x64xbf16>
    %c7_55 = arith.constant 7 : index
    %c0_56 = arith.constant 0 : index
    %c0_57 = arith.constant 0 : index
    %63 = vector.load %arg2[%c7_55, %c0_56, %c0_57] : memref<9x16x4xbf16, #tpu.memory_space<vmem>>, vector<1x16x4xbf16>
    %64 = vector.shape_cast %63 : vector<1x16x4xbf16> to vector<16x4xbf16>
    %cst_58 = arith.constant dense<0.000000e+00> : vector<16x64xf32>
    %65 = tpu.matmul %64, %62, %cst_58 {dimension_numbers = #tpu.dot_dimension_numbers<[1], [0], [0], [1], [0, 0, 1, 1], [], []>} : vector<16x4xbf16>, vector<4x64xbf16>, vector<16x64xf32> -> vector<16x64xf32>
    %66 = arith.addf %58, %65 : vector<16x64xf32>
    %c8 = arith.constant 8 : index
    %c0_59 = arith.constant 0 : index
    %c0_60 = arith.constant 0 : index
    %67 = vector.load %arg3[%c8, %c0_59, %c0_60] : memref<9x256x64xbf16, #tpu.memory_space<vmem>>, vector<1x256x64xbf16>
    %68 = vector.shape_cast %67 : vector<1x256x64xbf16> to vector<256x64xbf16>
    %cst_61 = arith.constant dense<0.000000e+00> : vector<4x64xf32>
    %69 = tpu.matmul %1, %68, %cst_61 {dimension_numbers = #tpu.dot_dimension_numbers<[1], [0], [0], [1], [0, 0, 1, 1], [], []>} : vector<4x256xbf16>, vector<256x64xbf16>, vector<4x64xf32> -> vector<4x64xf32>
    %70 = arith.truncf %69 : vector<4x64xf32> to vector<4x64xbf16>
    %c8_62 = arith.constant 8 : index
    %c0_63 = arith.constant 0 : index
    %c0_64 = arith.constant 0 : index
    %71 = vector.load %arg2[%c8_62, %c0_63, %c0_64] : memref<9x16x4xbf16, #tpu.memory_space<vmem>>, vector<1x16x4xbf16>
    %72 = vector.shape_cast %71 : vector<1x16x4xbf16> to vector<16x4xbf16>
    %cst_65 = arith.constant dense<0.000000e+00> : vector<16x64xf32>
    %73 = tpu.matmul %72, %70, %cst_65 {dimension_numbers = #tpu.dot_dimension_numbers<[1], [0], [0], [1], [0, 0, 1, 1], [], []>} : vector<16x4xbf16>, vector<4x64xbf16>, vector<16x64xf32> -> vector<16x64xf32>
    %74 = arith.addf %66, %73 : vector<16x64xf32>
    %c0_66 = arith.constant 0 : index
    %c0_67 = arith.constant 0 : index
    %75 = vector.load %arg4[%c0_66, %c0_67] : memref<16x1xf32, #tpu.memory_space<vmem>>, vector<16x1xf32>
    %76 = vector.broadcast %75 : vector<16x1xf32> to vector<16x64xf32>
    %77 = arith.addf %74, %76 : vector<16x64xf32>
    %cst_68 = arith.constant 0.000000e+00 : f32
    %78 = vector.broadcast %cst_68 : f32 to vector<16x64xf32>
    %79 = arith.maximumf %77, %78 : vector<16x64xf32>
    %80 = arith.truncf %79 : vector<16x64xf32> to vector<16x64xbf16>
    %cst_69 = arith.constant 0.000000e+00 : f32
    %81 = vector.broadcast %cst_69 : f32 to vector<32x16xf32>
    %c0_70 = arith.constant 0 : index
    %c0_71 = arith.constant 0 : index
    %c0_72 = arith.constant 0 : index
    %82 = vector.load %arg6[%c0_70, %c0_71, %c0_72] : memref<9x64x16xbf16, #tpu.memory_space<vmem>>, vector<1x64x16xbf16>
    %83 = vector.shape_cast %82 : vector<1x64x16xbf16> to vector<64x16xbf16>
    %cst_73 = arith.constant dense<0.000000e+00> : vector<16x16xf32>
    %84 = tpu.matmul %80, %83, %cst_73 {dimension_numbers = #tpu.dot_dimension_numbers<[1], [0], [0], [1], [0, 0, 1, 1], [], []>} : vector<16x64xbf16>, vector<64x16xbf16>, vector<16x16xf32> -> vector<16x16xf32>
    %85 = arith.truncf %84 : vector<16x16xf32> to vector<16x16xbf16>
    %c0_74 = arith.constant 0 : index
    %c0_75 = arith.constant 0 : index
    %c0_76 = arith.constant 0 : index
    %86 = vector.load %arg5[%c0_74, %c0_75, %c0_76] : memref<9x32x16xbf16, #tpu.memory_space<vmem>>, vector<1x32x16xbf16>
    %87 = vector.shape_cast %86 : vector<1x32x16xbf16> to vector<32x16xbf16>
    %cst_77 = arith.constant dense<0.000000e+00> : vector<32x16xf32>
    %88 = tpu.matmul %87, %85, %cst_77 {dimension_numbers = #tpu.dot_dimension_numbers<[1], [0], [0], [1], [0, 0, 1, 1], [], []>} : vector<32x16xbf16>, vector<16x16xbf16>, vector<32x16xf32> -> vector<32x16xf32>
    %89 = arith.addf %81, %88 : vector<32x16xf32>
    %c1_78 = arith.constant 1 : index
    %c0_79 = arith.constant 0 : index
    %c0_80 = arith.constant 0 : index
    %90 = vector.load %arg6[%c1_78, %c0_79, %c0_80] : memref<9x64x16xbf16, #tpu.memory_space<vmem>>, vector<1x64x16xbf16>
    %91 = vector.shape_cast %90 : vector<1x64x16xbf16> to vector<64x16xbf16>
    %cst_81 = arith.constant dense<0.000000e+00> : vector<16x16xf32>
    %92 = tpu.matmul %80, %91, %cst_81 {dimension_numbers = #tpu.dot_dimension_numbers<[1], [0], [0], [1], [0, 0, 1, 1], [], []>} : vector<16x64xbf16>, vector<64x16xbf16>, vector<16x16xf32> -> vector<16x16xf32>
    %93 = arith.truncf %92 : vector<16x16xf32> to vector<16x16xbf16>
    %c1_82 = arith.constant 1 : index
    %c0_83 = arith.constant 0 : index
    %c0_84 = arith.constant 0 : index
    %94 = vector.load %arg5[%c1_82, %c0_83, %c0_84] : memref<9x32x16xbf16, #tpu.memory_space<vmem>>, vector<1x32x16xbf16>
    %95 = vector.shape_cast %94 : vector<1x32x16xbf16> to vector<32x16xbf16>
    %cst_85 = arith.constant dense<0.000000e+00> : vector<32x16xf32>
    %96 = tpu.matmul %95, %93, %cst_85 {dimension_numbers = #tpu.dot_dimension_numbers<[1], [0], [0], [1], [0, 0, 1, 1], [], []>} : vector<32x16xbf16>, vector<16x16xbf16>, vector<32x16xf32> -> vector<32x16xf32>
    %97 = arith.addf %89, %96 : vector<32x16xf32>
    %c2_86 = arith.constant 2 : index
    %c0_87 = arith.constant 0 : index
    %c0_88 = arith.constant 0 : index
    %98 = vector.load %arg6[%c2_86, %c0_87, %c0_88] : memref<9x64x16xbf16, #tpu.memory_space<vmem>>, vector<1x64x16xbf16>
    %99 = vector.shape_cast %98 : vector<1x64x16xbf16> to vector<64x16xbf16>
    %cst_89 = arith.constant dense<0.000000e+00> : vector<16x16xf32>
    %100 = tpu.matmul %80, %99, %cst_89 {dimension_numbers = #tpu.dot_dimension_numbers<[1], [0], [0], [1], [0, 0, 1, 1], [], []>} : vector<16x64xbf16>, vector<64x16xbf16>, vector<16x16xf32> -> vector<16x16xf32>
    %101 = arith.truncf %100 : vector<16x16xf32> to vector<16x16xbf16>
    %c2_90 = arith.constant 2 : index
    %c0_91 = arith.constant 0 : index
    %c0_92 = arith.constant 0 : index
    %102 = vector.load %arg5[%c2_90, %c0_91, %c0_92] : memref<9x32x16xbf16, #tpu.memory_space<vmem>>, vector<1x32x16xbf16>
    %103 = vector.shape_cast %102 : vector<1x32x16xbf16> to vector<32x16xbf16>
    %cst_93 = arith.constant dense<0.000000e+00> : vector<32x16xf32>
    %104 = tpu.matmul %103, %101, %cst_93 {dimension_numbers = #tpu.dot_dimension_numbers<[1], [0], [0], [1], [0, 0, 1, 1], [], []>} : vector<32x16xbf16>, vector<16x16xbf16>, vector<32x16xf32> -> vector<32x16xf32>
    %105 = arith.addf %97, %104 : vector<32x16xf32>
    %c3_94 = arith.constant 3 : index
    %c0_95 = arith.constant 0 : index
    %c0_96 = arith.constant 0 : index
    %106 = vector.load %arg6[%c3_94, %c0_95, %c0_96] : memref<9x64x16xbf16, #tpu.memory_space<vmem>>, vector<1x64x16xbf16>
    %107 = vector.shape_cast %106 : vector<1x64x16xbf16> to vector<64x16xbf16>
    %cst_97 = arith.constant dense<0.000000e+00> : vector<16x16xf32>
    %108 = tpu.matmul %80, %107, %cst_97 {dimension_numbers = #tpu.dot_dimension_numbers<[1], [0], [0], [1], [0, 0, 1, 1], [], []>} : vector<16x64xbf16>, vector<64x16xbf16>, vector<16x16xf32> -> vector<16x16xf32>
    %109 = arith.truncf %108 : vector<16x16xf32> to vector<16x16xbf16>
    %c3_98 = arith.constant 3 : index
    %c0_99 = arith.constant 0 : index
    %c0_100 = arith.constant 0 : index
    %110 = vector.load %arg5[%c3_98, %c0_99, %c0_100] : memref<9x32x16xbf16, #tpu.memory_space<vmem>>, vector<1x32x16xbf16>
    %111 = vector.shape_cast %110 : vector<1x32x16xbf16> to vector<32x16xbf16>
    %cst_101 = arith.constant dense<0.000000e+00> : vector<32x16xf32>
    %112 = tpu.matmul %111, %109, %cst_101 {dimension_numbers = #tpu.dot_dimension_numbers<[1], [0], [0], [1], [0, 0, 1, 1], [], []>} : vector<32x16xbf16>, vector<16x16xbf16>, vector<32x16xf32> -> vector<32x16xf32>
    %113 = arith.addf %105, %112 : vector<32x16xf32>
    %c4_102 = arith.constant 4 : index
    %c0_103 = arith.constant 0 : index
    %c0_104 = arith.constant 0 : index
    %114 = vector.load %arg6[%c4_102, %c0_103, %c0_104] : memref<9x64x16xbf16, #tpu.memory_space<vmem>>, vector<1x64x16xbf16>
    %115 = vector.shape_cast %114 : vector<1x64x16xbf16> to vector<64x16xbf16>
    %cst_105 = arith.constant dense<0.000000e+00> : vector<16x16xf32>
    %116 = tpu.matmul %80, %115, %cst_105 {dimension_numbers = #tpu.dot_dimension_numbers<[1], [0], [0], [1], [0, 0, 1, 1], [], []>} : vector<16x64xbf16>, vector<64x16xbf16>, vector<16x16xf32> -> vector<16x16xf32>
    %117 = arith.truncf %116 : vector<16x16xf32> to vector<16x16xbf16>
    %c4_106 = arith.constant 4 : index
    %c0_107 = arith.constant 0 : index
    %c0_108 = arith.constant 0 : index
    %118 = vector.load %arg5[%c4_106, %c0_107, %c0_108] : memref<9x32x16xbf16, #tpu.memory_space<vmem>>, vector<1x32x16xbf16>
    %119 = vector.shape_cast %118 : vector<1x32x16xbf16> to vector<32x16xbf16>
    %cst_109 = arith.constant dense<0.000000e+00> : vector<32x16xf32>
    %120 = tpu.matmul %119, %117, %cst_109 {dimension_numbers = #tpu.dot_dimension_numbers<[1], [0], [0], [1], [0, 0, 1, 1], [], []>} : vector<32x16xbf16>, vector<16x16xbf16>, vector<32x16xf32> -> vector<32x16xf32>
    %121 = arith.addf %113, %120 : vector<32x16xf32>
    %c5_110 = arith.constant 5 : index
    %c0_111 = arith.constant 0 : index
    %c0_112 = arith.constant 0 : index
    %122 = vector.load %arg6[%c5_110, %c0_111, %c0_112] : memref<9x64x16xbf16, #tpu.memory_space<vmem>>, vector<1x64x16xbf16>
    %123 = vector.shape_cast %122 : vector<1x64x16xbf16> to vector<64x16xbf16>
    %cst_113 = arith.constant dense<0.000000e+00> : vector<16x16xf32>
    %124 = tpu.matmul %80, %123, %cst_113 {dimension_numbers = #tpu.dot_dimension_numbers<[1], [0], [0], [1], [0, 0, 1, 1], [], []>} : vector<16x64xbf16>, vector<64x16xbf16>, vector<16x16xf32> -> vector<16x16xf32>
    %125 = arith.truncf %124 : vector<16x16xf32> to vector<16x16xbf16>
    %c5_114 = arith.constant 5 : index
    %c0_115 = arith.constant 0 : index
    %c0_116 = arith.constant 0 : index
    %126 = vector.load %arg5[%c5_114, %c0_115, %c0_116] : memref<9x32x16xbf16, #tpu.memory_space<vmem>>, vector<1x32x16xbf16>
    %127 = vector.shape_cast %126 : vector<1x32x16xbf16> to vector<32x16xbf16>
    %cst_117 = arith.constant dense<0.000000e+00> : vector<32x16xf32>
    %128 = tpu.matmul %127, %125, %cst_117 {dimension_numbers = #tpu.dot_dimension_numbers<[1], [0], [0], [1], [0, 0, 1, 1], [], []>} : vector<32x16xbf16>, vector<16x16xbf16>, vector<32x16xf32> -> vector<32x16xf32>
    %129 = arith.addf %121, %128 : vector<32x16xf32>
    %c6_118 = arith.constant 6 : index
    %c0_119 = arith.constant 0 : index
    %c0_120 = arith.constant 0 : index
    %130 = vector.load %arg6[%c6_118, %c0_119, %c0_120] : memref<9x64x16xbf16, #tpu.memory_space<vmem>>, vector<1x64x16xbf16>
    %131 = vector.shape_cast %130 : vector<1x64x16xbf16> to vector<64x16xbf16>
    %cst_121 = arith.constant dense<0.000000e+00> : vector<16x16xf32>
    %132 = tpu.matmul %80, %131, %cst_121 {dimension_numbers = #tpu.dot_dimension_numbers<[1], [0], [0], [1], [0, 0, 1, 1], [], []>} : vector<16x64xbf16>, vector<64x16xbf16>, vector<16x16xf32> -> vector<16x16xf32>
    %133 = arith.truncf %132 : vector<16x16xf32> to vector<16x16xbf16>
    %c6_122 = arith.constant 6 : index
    %c0_123 = arith.constant 0 : index
    %c0_124 = arith.constant 0 : index
    %134 = vector.load %arg5[%c6_122, %c0_123, %c0_124] : memref<9x32x16xbf16, #tpu.memory_space<vmem>>, vector<1x32x16xbf16>
    %135 = vector.shape_cast %134 : vector<1x32x16xbf16> to vector<32x16xbf16>
    %cst_125 = arith.constant dense<0.000000e+00> : vector<32x16xf32>
    %136 = tpu.matmul %135, %133, %cst_125 {dimension_numbers = #tpu.dot_dimension_numbers<[1], [0], [0], [1], [0, 0, 1, 1], [], []>} : vector<32x16xbf16>, vector<16x16xbf16>, vector<32x16xf32> -> vector<32x16xf32>
    %137 = arith.addf %129, %136 : vector<32x16xf32>
    %c7_126 = arith.constant 7 : index
    %c0_127 = arith.constant 0 : index
    %c0_128 = arith.constant 0 : index
    %138 = vector.load %arg6[%c7_126, %c0_127, %c0_128] : memref<9x64x16xbf16, #tpu.memory_space<vmem>>, vector<1x64x16xbf16>
    %139 = vector.shape_cast %138 : vector<1x64x16xbf16> to vector<64x16xbf16>
    %cst_129 = arith.constant dense<0.000000e+00> : vector<16x16xf32>
    %140 = tpu.matmul %80, %139, %cst_129 {dimension_numbers = #tpu.dot_dimension_numbers<[1], [0], [0], [1], [0, 0, 1, 1], [], []>} : vector<16x64xbf16>, vector<64x16xbf16>, vector<16x16xf32> -> vector<16x16xf32>
    %141 = arith.truncf %140 : vector<16x16xf32> to vector<16x16xbf16>
    %c7_130 = arith.constant 7 : index
    %c0_131 = arith.constant 0 : index
    %c0_132 = arith.constant 0 : index
    %142 = vector.load %arg5[%c7_130, %c0_131, %c0_132] : memref<9x32x16xbf16, #tpu.memory_space<vmem>>, vector<1x32x16xbf16>
    %143 = vector.shape_cast %142 : vector<1x32x16xbf16> to vector<32x16xbf16>
    %cst_133 = arith.constant dense<0.000000e+00> : vector<32x16xf32>
    %144 = tpu.matmul %143, %141, %cst_133 {dimension_numbers = #tpu.dot_dimension_numbers<[1], [0], [0], [1], [0, 0, 1, 1], [], []>} : vector<32x16xbf16>, vector<16x16xbf16>, vector<32x16xf32> -> vector<32x16xf32>
    %145 = arith.addf %137, %144 : vector<32x16xf32>
    %c8_134 = arith.constant 8 : index
    %c0_135 = arith.constant 0 : index
    %c0_136 = arith.constant 0 : index
    %146 = vector.load %arg6[%c8_134, %c0_135, %c0_136] : memref<9x64x16xbf16, #tpu.memory_space<vmem>>, vector<1x64x16xbf16>
    %147 = vector.shape_cast %146 : vector<1x64x16xbf16> to vector<64x16xbf16>
    %cst_137 = arith.constant dense<0.000000e+00> : vector<16x16xf32>
    %148 = tpu.matmul %80, %147, %cst_137 {dimension_numbers = #tpu.dot_dimension_numbers<[1], [0], [0], [1], [0, 0, 1, 1], [], []>} : vector<16x64xbf16>, vector<64x16xbf16>, vector<16x16xf32> -> vector<16x16xf32>
    %149 = arith.truncf %148 : vector<16x16xf32> to vector<16x16xbf16>
    %c8_138 = arith.constant 8 : index
    %c0_139 = arith.constant 0 : index
    %c0_140 = arith.constant 0 : index
    %150 = vector.load %arg5[%c8_138, %c0_139, %c0_140] : memref<9x32x16xbf16, #tpu.memory_space<vmem>>, vector<1x32x16xbf16>
    %151 = vector.shape_cast %150 : vector<1x32x16xbf16> to vector<32x16xbf16>
    %cst_141 = arith.constant dense<0.000000e+00> : vector<32x16xf32>
    %152 = tpu.matmul %151, %149, %cst_141 {dimension_numbers = #tpu.dot_dimension_numbers<[1], [0], [0], [1], [0, 0, 1, 1], [], []>} : vector<32x16xbf16>, vector<16x16xbf16>, vector<32x16xf32> -> vector<32x16xf32>
    %153 = arith.addf %145, %152 : vector<32x16xf32>
    %c0_142 = arith.constant 0 : index
    %c0_143 = arith.constant 0 : index
    %154 = vector.load %arg7[%c0_142, %c0_143] : memref<32x1xf32, #tpu.memory_space<vmem>>, vector<32x1xf32>
    %155 = vector.broadcast %154 : vector<32x1xf32> to vector<32x16xf32>
    %156 = arith.addf %153, %155 : vector<32x16xf32>
    %cst_144 = arith.constant 0.000000e+00 : f32
    %157 = vector.broadcast %cst_144 : f32 to vector<32x16xf32>
    %158 = arith.maximumf %156, %157 : vector<32x16xf32>
    %159 = arith.truncf %158 : vector<32x16xf32> to vector<32x16xbf16>
    %c0_145 = arith.constant 0 : index
    %c0_146 = arith.constant 0 : index
    %160 = vector.load %arg8[%c0_145, %c0_146] : memref<16x128xbf16, #tpu.memory_space<vmem>>, vector<16x128xbf16>
    %cst_147 = arith.constant dense<0.000000e+00> : vector<32x128xf32>
    %161 = tpu.matmul %159, %160, %cst_147 {dimension_numbers = #tpu.dot_dimension_numbers<[1], [0], [0], [1], [0, 0, 1, 1], [], []>} : vector<32x16xbf16>, vector<16x128xbf16>, vector<32x128xf32> -> vector<32x128xf32>
    %c0_148 = arith.constant 0 : index
    %c0_149 = arith.constant 0 : index
    %162 = vector.load %arg9[%c0_148, %c0_149] : memref<1x128xf32, #tpu.memory_space<vmem>>, vector<1x128xf32>
    %163 = vector.broadcast %162 : vector<1x128xf32> to vector<32x128xf32>
    %164 = arith.addf %161, %163 : vector<32x128xf32>
    %c0_150 = arith.constant 0 : index
    %c0_151 = arith.constant 0 : index
    %c0_152 = arith.constant 0 : index
    %165 = vector.load %arg10[%c0_150, %c0_151, %c0_152] : memref<1x32x128xf32, #tpu.memory_space<vmem>>, vector<1x32x128xf32>
    %166 = vector.shape_cast %165 : vector<1x32x128xf32> to vector<32x128xf32>
    %167 = vector.shape_cast %164 : vector<32x128xf32> to vector<1x32x128xf32>
    tpu.vector_store %arg10[%c0_150, %c0_151, %c0_152], %167 {strides = array<i32>} : memref<1x32x128xf32, #tpu.memory_space<vmem>>, vector<1x32x128xf32>,
    return
  }
  func.func @transform_0(%arg0: i32) -> (i32, i32, i32) {
    %c0_i32 = arith.constant 0 : i32
    %c0_i32_0 = arith.constant 0 : i32
    %c0_i32_1 = arith.constant 0 : i32
    return %arg0, %c0_i32, %c0_i32_0 : i32, i32, i32
  }
  func.func @transform_1(%arg0: i32) -> (i32, i32, i32) {
    %c0_i32 = arith.constant 0 : i32
    %c0_i32_0 = arith.constant 0 : i32
    %c0_i32_1 = arith.constant 0 : i32
    %c0_i32_2 = arith.constant 0 : i32
    return %c0_i32, %c0_i32_0, %c0_i32_1 : i32, i32, i32
  }
  func.func @transform_2(%arg0: i32) -> (i32, i32, i32) {
    %c0_i32 = arith.constant 0 : i32
    %c0_i32_0 = arith.constant 0 : i32
    %c0_i32_1 = arith.constant 0 : i32
    %c0_i32_2 = arith.constant 0 : i32
    return %c0_i32, %c0_i32_0, %c0_i32_1 : i32, i32, i32
  }
  func.func @transform_3(%arg0: i32) -> (i32, i32) {
    %c0_i32 = arith.constant 0 : i32
    %c0_i32_0 = arith.constant 0 : i32
    %c0_i32_1 = arith.constant 0 : i32
    return %c0_i32, %c0_i32_0 : i32, i32
  }
  func.func @transform_4(%arg0: i32) -> (i32, i32, i32) {
    %c0_i32 = arith.constant 0 : i32
    %c0_i32_0 = arith.constant 0 : i32
    %c0_i32_1 = arith.constant 0 : i32
    %c0_i32_2 = arith.constant 0 : i32
    return %c0_i32, %c0_i32_0, %c0_i32_1 : i32, i32, i32
  }
  func.func @transform_5(%arg0: i32) -> (i32, i32, i32) {
    %c0_i32 = arith.constant 0 : i32
    %c0_i32_0 = arith.constant 0 : i32
    %c0_i32_1 = arith.constant 0 : i32
    %c0_i32_2 = arith.constant 0 : i32
    return %c0_i32, %c0_i32_0, %c0_i32_1 : i32, i32, i32
  }
  func.func @transform_6(%arg0: i32) -> (i32, i32) {
    %c0_i32 = arith.constant 0 : i32
    %c0_i32_0 = arith.constant 0 : i32
    %c0_i32_1 = arith.constant 0 : i32
    return %c0_i32, %c0_i32_0 : i32, i32
  }
  func.func @transform_7(%arg0: i32) -> (i32, i32) {
    %c0_i32 = arith.constant 0 : i32
    %c0_i32_0 = arith.constant 0 : i32
    %c0_i32_1 = arith.constant 0 : i32
    return %c0_i32, %c0_i32_0 : i32, i32
  }
  func.func @transform_8(%arg0: i32) -> (i32, i32) {
    %c0_i32 = arith.constant 0 : i32
    %c0_i32_0 = arith.constant 0 : i32
    %c0_i32_1 = arith.constant 0 : i32
    return %c0_i32, %c0_i32_0 : i32, i32
  }
  func.func @transform_9(%arg0: i32) -> (i32, i32, i32) {
    %c0_i32 = arith.constant 0 : i32
    %c0_i32_0 = arith.constant 0 : i32
    %c0_i32_1 = arith.constant 0 : i32
    return %arg0, %c0_i32, %c0_i32_0 : i32, i32, i32
  }
}

</mosaic_0001>

<llo_original>
// kernel: tile.8
$region0: #{tile.8}
  #allocation0 [shape = 's32[1]{0}', space=sflag, size = 0x4, scoped, tag = 'scoped memory for tile.8']
  %s0 = inlined_call_operand.vmem [shape: f32[32], index: 0, kind: input, shape index: {}]
  %s1 = inlined_call_operand.vmem [shape: f32[4,32], index: 1, kind: output, shape index: {}]
  // Predicated region
  $region2: #{tile.8} parent=0 // pred_check
    _
  $region3: #{tile.8} parent=0 // pred_check_branch
    %3 = sbr.rel (0) target = $region5
  $region4: #{tile.8} parent=0 // pred_region
    _
  $region5: #{tile.8} parent=0 // pred_fallthru
    _
  %v4 = vld [vmem:[%s0] ss:$0 sm:$0xff]
  %5 = vst [vmem:[%s1] sm:$0xf] %v4

// kernel: tile.9
$region0: #{tile.9}
  %s0 = inlined_call_operand.vmem [shape: f32[4,32], index: 0, kind: input, shape index: {}]
  %s1 = inlined_call_operand.vmem [shape: f32[1,128], index: 1, kind: output, shape index: {}]
  $region1: #{tile.9} parent=0
    #allocation0 [shape = 'u8[4096]{0}', space=vmem, size = 0x1000, scoped, tag = 'scoped mem for output reshape']
    #allocation1 [shape = 'u8[4096]{0}', space=vmem, size = 0x1000, scoped, tag = 'scoped mem for input reshape']
    %s3 = sshll.u32 1, 4
    %s4 = ssub.s32 %s3, 1
    %v5 = vld [vmem:[%s0] sm:%s4]
    %6 = vst [vmem:[#allocation1] sm:%s4] %v5
    %v7 = vld [vmem:[#allocation1] sm:$0x1]
    %vm8 = vcmask 261120
    %9 = vst.msk [vmem:[#allocation0] sm:$0x1] %vm8, %v7
    %s10 = scalar_lea.vmem [#allocation1], 3
    %v11 = vld [vmem:[%s10] sm:$0x1]
    %12 = vrot.lane.b32.xlu0 %v11, 96
    %v13 = vpop.permute.xlu0 %12
    %vm14 = vcmask 1048320
    %15 = vst.msk [vmem:[#allocation0] sm:$0x1] %vm14, %v13
    %s16 = scalar_lea.vmem [#allocation1], 2
    %v17 = vld [vmem:[%s16] sm:$0x1]
    %18 = vrot.lane.b32.xlu0 %v17, 64
    %v19 = vpop.permute.xlu0 %18
    %vm20 = vcmask 785920
    %21 = vst.msk [vmem:[#allocation0] sm:$0x1] %vm20, %v19
    %s22 = scalar_lea.vmem [#allocation1], 1
    %v23 = vld [vmem:[%s22] sm:$0x1]
    %24 = vrot.lane.b32.xlu0 %v23, 32
    %v25 = vpop.permute.xlu0 %24
    %vm26 = vcmask 523520
    %27 = vst.msk [vmem:[#allocation0] sm:$0x1] %vm26, %v25
    %s29 = sshll.u32 1, 1
    %s30 = ssub.s32 %s29, 1
    %v32 = vld [vmem:[#allocation0] sm:%s30]
    %s33 = sshll.u32 1, 1
    %s34 = ssub.s32 %s33, 1
    %35 = vst [vmem:[%s1] sm:%s34] %v32

// kernel: encoder_forward.1
$region0: #{encoder_forward.1}
  #allocation0 [shape = 'u32[]', space=smem, size = 0x4, offset = 0x4, fixed_abs, tag = 'smem constant byte address 0x4 - core index']
  #allocation1 [shape = 'u32[144,128]{1,0:T(1,128)}', space=vmem, size = 0x12000, scoped, tag = 'internal scratch']
  %s0 = inlined_call_operand.vmem [shape: bf16[2,4,256], index: 0, kind: input, shape index: {}]
  %s1 = inlined_call_operand.vmem [shape: bf16[9,16,4], index: 1, kind: input, shape index: {}]
  %s2 = inlined_call_operand.hbm [shape: bf16[9,256,64], index: 2, kind: input, shape index: {}]
  %s3 = inlined_call_operand.vmem [shape: f32[16,1], index: 3, kind: input, shape index: {}]
  %s4 = inlined_call_operand.vmem [shape: bf16[9,32,16], index: 4, kind: input, shape index: {}]
  %s5 = inlined_call_operand.vmem [shape: bf16[9,64,16], index: 5, kind: input, shape index: {}]
  %s6 = inlined_call_operand.vmem [shape: f32[32,1], index: 6, kind: input, shape index: {}]
  %s7 = inlined_call_operand.vmem [shape: bf16[16,128], index: 7, kind: input, shape index: {}]
  %s8 = inlined_call_operand.vmem [shape: f32[1,128], index: 8, kind: input, shape index: {}]
  %s9 = inlined_call_operand.vmem [shape: f32[2,32,128], index: 9, kind: output, shape index: {}]
  %s10 = sld [smem:[#allocation0]]
  $region73: #{encoder_forward.1} parent=0
    _
  %s12 = ssub.s32 1, %s10
  %s13 = scalar_select 0, %s12, %s10
  $region1: #{encoder_forward.1} parent=0
    #allocation2 [shape = 'u8[589824]{0}', space=vmem, size = 0x90000, scoped, tag = 'input window, operand 2, single buffered']
    #allocation3 [shape = 's32[2]{0}', space=sflag, size = 0x8, scoped, tag = 'scoped memory for encoder_forward.1']
    %14 = vsyncpa [#allocation3], 0
    loop: start=0, step=1, limit=4
    $region2: #{encoder_forward.1} parent=1 // loop_pre_header
      _
    $region3: #{encoder_forward.1} parent=1 // loop_header
      %s16 = sphi 0, %s20
      %p17 = scmp.ge.s32.totalorder %s16, 4
      %s26 = sphi 0, %s28
      %s29 = sphi 0, %s26
      %s30 = sphi 0, %s29
      %s46 = sphi 0, %s30
      %s50 = sphi 0, %s50
      %s52 = sphi 0, %s50
      %s53 = sphi 0, %s52
      %s67 = sphi 0, %s53
      %s71 = sphi 0, %s71
      %s73 = sphi 0, %s71
      %s74 = sphi 0, %s73
      %s88 = sphi 0, %s74
      %s92 = sphi 0, %s92
      %s94 = sphi 0, %s92
      %s95 = sphi 0, %s94
      %s109 = sphi 0, %s95
      %s113 = sphi 0, %s113
      %s115 = sphi 0, %s113
      %s116 = sphi 0, %s115
      %s130 = sphi 0, %s116
      %s134 = sphi 0, %s134
      %s136 = sphi 0, %s134
      %s137 = sphi 0, %s136
      %s151 = sphi 0, %s137
      %s155 = sphi 0, %s155
      %s157 = sphi 0, %s155
      %s158 = sphi 0, %s157
      %s172 = sphi 0, %s158
      %s176 = sphi 0, %s176
      %s178 = sphi 0, %s176
      %s179 = sphi 0, %s178
      %s193 = sphi 0, %s179
      %s197 = sphi 0, %s197
      %s199 = sphi 0, %s197
      %s200 = sphi 0, %s199
      %s214 = sphi 0, %s200
      %s220 = sphi 0, %s222
      %s223 = sphi 0, %s220
      %s224 = sphi 0, %s223
      %s240 = sphi 0, %s224
    $region4: #{encoder_forward.1} parent=1 // loop_header_branch
      %19 = sbr.rel (%p17) target = $region8
    $region5: #{encoder_forward.1} parent=1 // loop_body
      %s21 = ssub.s32 %s16, 1
      %s22 = ssub.s32 %s16, 2
      %s23 = sadd.s32 %s16, 1
      %s24 = ssub.s32 %s16, %s23
      %p25 = scmp.eq.s32.totalorder %s24, 0
      %s27 = sadd.s32 %s26, 1
      %s28 = scalar_select %p25, %s26, %s27
      %p31 = pneg %p25
      %p32 = scmp.eq.s32.totalorder %s16, 1
      %p33 = por %p31, %p32
      %p34 = scmp.ne.s32.totalorder %s26, %s29
      %p35 = scmp.eq.s32.totalorder %s16, 0
      %p36 = por %p34, %p35
      %p37 = scmp.ne.s32.totalorder %s26, %s29
      %p38 = scmp.eq.s32.totalorder %s21, 1
      %p39 = por %p37, %p38
      %p40 = scmp.ne.s32.totalorder %s29, %s30
      %p41 = scmp.eq.s32.totalorder %s21, 0
      %p42 = por %p40, %p41
      %p43 = scmp.ne.s32.totalorder %s29, %s30
      %p44 = scmp.eq.s32.totalorder %s22, 1
      %p45 = por %p43, %p44
      %p47 = scmp.ne.s32.totalorder %s30, %s46
      %p48 = scmp.eq.s32.totalorder %s22, 0
      %p49 = por %p47, %p48
      %s51 = sadd.s32 %s50, 1
      %p54 = scmp.eq.s32.totalorder %s16, 1
      %p55 = scmp.ne.s32.totalorder %s50, %s52
      %p56 = scmp.eq.s32.totalorder %s16, 0
      %p57 = por %p55, %p56
      %p58 = scmp.ne.s32.totalorder %s50, %s52
      %p59 = scmp.eq.s32.totalorder %s21, 1
      %p60 = por %p58, %p59
      %p61 = scmp.ne.s32.totalorder %s52, %s53
      %p62 = scmp.eq.s32.totalorder %s21, 0
      %p63 = por %p61, %p62
      %p64 = scmp.ne.s32.totalorder %s52, %s53
      %p65 = scmp.eq.s32.totalorder %s22, 1
      %p66 = por %p64, %p65
      %p68 = scmp.ne.s32.totalorder %s53, %s67
      %p69 = scmp.eq.s32.totalorder %s22, 0
      %p70 = por %p68, %p69
      %s72 = sadd.s32 %s71, 1
      %p75 = scmp.eq.s32.totalorder %s16, 1
      %p76 = scmp.ne.s32.totalorder %s71, %s73
      %p77 = scmp.eq.s32.totalorder %s16, 0
      %p78 = por %p76, %p77
      %p79 = scmp.ne.s32.totalorder %s71, %s73
      %p80 = scmp.eq.s32.totalorder %s21, 1
      %p81 = por %p79, %p80
      %p82 = scmp.ne.s32.totalorder %s73, %s74
      %p83 = scmp.eq.s32.totalorder %s21, 0
      %p84 = por %p82, %p83
      %p85 = scmp.ne.s32.totalorder %s73, %s74
      %p86 = scmp.eq.s32.totalorder %s22, 1
      %p87 = por %p85, %p86
      %p89 = scmp.ne.s32.totalorder %s74, %s88
      %p90 = scmp.eq.s32.totalorder %s22, 0
      %p91 = por %p89, %p90
      %s93 = sadd.s32 %s92, 1
      %p96 = scmp.eq.s32.totalorder %s16, 1
      %p97 = scmp.ne.s32.totalorder %s92, %s94
      %p98 = scmp.eq.s32.totalorder %s16, 0
      %p99 = por %p97, %p98
      %p100 = scmp.ne.s32.totalorder %s92, %s94
      %p101 = scmp.eq.s32.totalorder %s21, 1
      %p102 = por %p100, %p101
      %p103 = scmp.ne.s32.totalorder %s94, %s95
      %p104 = scmp.eq.s32.totalorder %s21, 0
      %p105 = por %p103, %p104
      %p106 = scmp.ne.s32.totalorder %s94, %s95
      %p107 = scmp.eq.s32.totalorder %s22, 1
      %p108 = por %p106, %p107
      %p110 = scmp.ne.s32.totalorder %s95, %s109
      %p111 = scmp.eq.s32.totalorder %s22, 0
      %p112 = por %p110, %p111
      %s114 = sadd.s32 %s113, 1
      %p117 = scmp.eq.s32.totalorder %s16, 1
      %p118 = scmp.ne.s32.totalorder %s113, %s115
      %p119 = scmp.eq.s32.totalorder %s16, 0
      %p120 = por %p118, %p119
      %p121 = scmp.ne.s32.totalorder %s113, %s115
      %p122 = scmp.eq.s32.totalorder %s21, 1
      %p123 = por %p121, %p122
      %p124 = scmp.ne.s32.totalorder %s115, %s116
      %p125 = scmp.eq.s32.totalorder %s21, 0
      %p126 = por %p124, %p125
      %p127 = scmp.ne.s32.totalorder %s115, %s116
      %p128 = scmp.eq.s32.totalorder %s22, 1
      %p129 = por %p127, %p128
      %p131 = scmp.ne.s32.totalorder %s116, %s130
      %p132 = scmp.eq.s32.totalorder %s22, 0
      %p133 = por %p131, %p132
      %s135 = sadd.s32 %s134, 1
      %p138 = scmp.eq.s32.totalorder %s16, 1
      %p139 = scmp.ne.s32.totalorder %s134, %s136
      %p140 = scmp.eq.s32.totalorder %s16, 0
      %p141 = por %p139, %p140
      %p142 = scmp.ne.s32.totalorder %s134, %s136
      %p143 = scmp.eq.s32.totalorder %s21, 1
      %p144 = por %p142, %p143
      %p145 = scmp.ne.s32.totalorder %s136, %s137
      %p146 = scmp.eq.s32.totalorder %s21, 0
      %p147 = por %p145, %p146
      %p148 = scmp.ne.s32.totalorder %s136, %s137
      %p149 = scmp.eq.s32.totalorder %s22, 1
      %p150 = por %p148, %p149
      %p152 = scmp.ne.s32.totalorder %s137, %s151
      %p153 = scmp.eq.s32.totalorder %s22, 0
      %p154 = por %p152, %p153
      %s156 = sadd.s32 %s155, 1
      %p159 = scmp.eq.s32.totalorder %s16, 1
      %p160 = scmp.ne.s32.totalorder %s155, %s157
      %p161 = scmp.eq.s32.totalorder %s16, 0
      %p162 = por %p160, %p161
      %p163 = scmp.ne.s32.totalorder %s155, %s157
      %p164 = scmp.eq.s32.totalorder %s21, 1
      %p165 = por %p163, %p164
      %p166 = scmp.ne.s32.totalorder %s157, %s158
      %p167 = scmp.eq.s32.totalorder %s21, 0
      %p168 = por %p166, %p167
      %p169 = scmp.ne.s32.totalorder %s157, %s158
      %p170 = scmp.eq.s32.totalorder %s22, 1
      %p171 = por %p169, %p170
      %p173 = scmp.ne.s32.totalorder %s158, %s172
      %p174 = scmp.eq.s32.totalorder %s22, 0
      %p175 = por %p173, %p174
      %s177 = sadd.s32 %s176, 1
      %p180 = scmp.eq.s32.totalorder %s16, 1
      %p181 = scmp.ne.s32.totalorder %s176, %s178
      %p182 = scmp.eq.s32.totalorder %s16, 0
      %p183 = por %p181, %p182
      %p184 = scmp.ne.s32.totalorder %s176, %s178
      %p185 = scmp.eq.s32.totalorder %s21, 1
      %p186 = por %p184, %p185
      %p187 = scmp.ne.s32.totalorder %s178, %s179
      %p188 = scmp.eq.s32.totalorder %s21, 0
      %p189 = por %p187, %p188
      %p190 = scmp.ne.s32.totalorder %s178, %s179
      %p191 = scmp.eq.s32.totalorder %s22, 1
      %p192 = por %p190, %p191
      %p194 = scmp.ne.s32.totalorder %s179, %s193
      %p195 = scmp.eq.s32.totalorder %s22, 0
      %p196 = por %p194, %p195
      %s198 = sadd.s32 %s197, 1
      %p201 = scmp.eq.s32.totalorder %s16, 1
      %p202 = scmp.ne.s32.totalorder %s197, %s199
      %p203 = scmp.eq.s32.totalorder %s16, 0
      %p204 = por %p202, %p203
      %p205 = scmp.ne.s32.totalorder %s197, %s199
      %p206 = scmp.eq.s32.totalorder %s21, 1
      %p207 = por %p205, %p206
      %p208 = scmp.ne.s32.totalorder %s199, %s200
      %p209 = scmp.eq.s32.totalorder %s21, 0
      %p210 = por %p208, %p209
      %p211 = scmp.ne.s32.totalorder %s199, %s200
      %p212 = scmp.eq.s32.totalorder %s22, 1
      %p213 = por %p211, %p212
      %p215 = scmp.ne.s32.totalorder %s200, %s214
      %p216 = scmp.eq.s32.totalorder %s22, 0
      %p217 = por %p215, %p216
      %s218 = ssub.s32 %s16, %s23
      %p219 = scmp.eq.s32.totalorder %s218, 0
      %s221 = sadd.s32 %s220, 1
      %s222 = scalar_select %p219, %s220, %s221
      %p225 = pneg %p219
      %p226 = scmp.eq.s32.totalorder %s16, 1
      %p227 = por %p225, %p226
      %p228 = scmp.ne.s32.totalorder %s220, %s223
      %p229 = scmp.eq.s32.totalorder %s16, 0
      %p230 = por %p228, %p229
      %p231 = scmp.ne.s32.totalorder %s220, %s223
      %p232 = scmp.eq.s32.totalorder %s21, 1
      %p233 = por %p231, %p232
      %p234 = scmp.ne.s32.totalorder %s223, %s224
      %p235 = scmp.eq.s32.totalorder %s21, 0
      %p236 = por %p234, %p235
      %p237 = scmp.ne.s32.totalorder %s223, %s224
      %p238 = scmp.eq.s32.totalorder %s22, 1
      %p239 = por %p237, %p238
      %p241 = scmp.ne.s32.totalorder %s224, %s240
      %p242 = scmp.eq.s32.totalorder %s22, 0
      %p243 = por %p241, %p242
      %p244 = scmp.le.s32.totalorder 1, %s16
      %p245 = scmp.lt.s32.totalorder %s16, 3
      %p246 = pnand %p244, %p245
      %p247 = pneg %p246
      // Predicated region
      $region9: #{encoder_forward.1} parent=5 // pred_check
        _
      $region10: #{encoder_forward.1} parent=5 // pred_check_branch
        %249 = sbr.rel (%p246) target = $region12
      $region11: #{encoder_forward.1} parent=5 // pred_region
        %s250 = ssub.s32 %s16, 1
        // Predicated region
        $region13: #{encoder_forward.1} parent=11 // pred_check
          %p251 = pneg %p63
        $region14: #{encoder_forward.1} parent=11 // pred_check_branch
          %253 = sbr.rel (%p251) target = $region16
        $region15: #{encoder_forward.1} parent=11 // pred_region
          _
        $region16: #{encoder_forward.1} parent=11 // pred_fallthru
          _
        // Predicated region
        $region17: #{encoder_forward.1} parent=11 // pred_check
          %p254 = pneg %p84
        $region18: #{encoder_forward.1} parent=11 // pred_check_branch
          %256 = sbr.rel (%p254) target = $region20
        $region19: #{encoder_forward.1} parent=11 // pred_region
          %s258 = ssub.s32 18432, 18432
          %259 = vsyncadd [#allocation3], %s258
          %s260 = sshll.u32 [#allocation2], 4
          %s261 = int_to_ptr.vmem [resolvable:$true] %s260
          %266 = dma.hbm_to_vmem [thread:$0]  %s2, 18432, %s261, [#allocation3], 64, 64, 4
        $region20: #{encoder_forward.1} parent=11 // pred_fallthru
          _
        // Predicated region
        $region21: #{encoder_forward.1} parent=11 // pred_check
          %p267 = pneg %p105
        $region22: #{encoder_forward.1} parent=11 // pred_check_branch
          %269 = sbr.rel (%p267) target = $region24
        $region23: #{encoder_forward.1} parent=11 // pred_region
          _
        $region24: #{encoder_forward.1} parent=11 // pred_fallthru
          _
        // Predicated region
        $region25: #{encoder_forward.1} parent=11 // pred_check
          %p270 = pneg %p126
        $region26: #{encoder_forward.1} parent=11 // pred_check_branch
          %272 = sbr.rel (%p270) target = $region28
        $region27: #{encoder_forward.1} parent=11 // pred_region
          _
        $region28: #{encoder_forward.1} parent=11 // pred_fallthru
          _
        // Predicated region
        $region29: #{encoder_forward.1} parent=11 // pred_check
          %p273 = pneg %p147
        $region30: #{encoder_forward.1} parent=11 // pred_check_branch
          %275 = sbr.rel (%p273) target = $region32
        $region31: #{encoder_forward.1} parent=11 // pred_region
          _
        $region32: #{encoder_forward.1} parent=11 // pred_fallthru
          _
        // Predicated region
        $region33: #{encoder_forward.1} parent=11 // pred_check
          %p276 = pneg %p168
        $region34: #{encoder_forward.1} parent=11 // pred_check_branch
          %278 = sbr.rel (%p276) target = $region36
        $region35: #{encoder_forward.1} parent=11 // pred_region
          _
        $region36: #{encoder_forward.1} parent=11 // pred_fallthru
          _
        // Predicated region
        $region37: #{encoder_forward.1} parent=11 // pred_check
          %p279 = pneg %p189
        $region38: #{encoder_forward.1} parent=11 // pred_check_branch
          %281 = sbr.rel (%p279) target = $region40
        $region39: #{encoder_forward.1} parent=11 // pred_region
          _
        $region40: #{encoder_forward.1} parent=11 // pred_fallthru
          _
        // Predicated region
        $region41: #{encoder_forward.1} parent=11 // pred_check
          %p282 = pneg %p210
        $region42: #{encoder_forward.1} parent=11 // pred_check_branch
          %284 = sbr.rel (%p282) target = $region44
        $region43: #{encoder_forward.1} parent=11 // pred_region
          _
        $region44: #{encoder_forward.1} parent=11 // pred_fallthru
          _
      $region12: #{encoder_forward.1} parent=5 // pred_fallthru
        _
      %p285 = scmp.lt.s32.totalorder %s16, 2
      // Predicated region
      $region45: #{encoder_forward.1} parent=5 // pred_check
        %p286 = pneg %p285
      $region46: #{encoder_forward.1} parent=5 // pred_check_branch
        %288 = sbr.rel (%p286) target = $region48
      $region47: #{encoder_forward.1} parent=5 // pred_region
        // Predicated region
        $region49: #{encoder_forward.1} parent=47 // pred_check
          %p289 = pneg %p36
        $region50: #{encoder_forward.1} parent=47 // pred_check_branch
          %291 = sbr.rel (%p289) target = $region52
        $region51: #{encoder_forward.1} parent=47 // pred_region
          %p292 = scmp.lt.s32.totalorder %s16, 1
          %s293 = scalar_select %p292, %s16, 1
          %s294 = smul.addr %s293, 2
          %s295 = smul.addr %s294, 2
          %s296 = scalar_lea.vmem %s0, %s295
        $region52: #{encoder_forward.1} parent=47 // pred_fallthru
          _
      $region48: #{encoder_forward.1} parent=5 // pred_fallthru
        _
      %p297 = scmp.le.s32.totalorder 1, %s16
      %p298 = scmp.lt.s32.totalorder %s16, 3
      %p299 = pnand %p297, %p298
      %p300 = pneg %p299
      // Predicated region
      $region53: #{encoder_forward.1} parent=5 // pred_check
        _
      $region54: #{encoder_forward.1} parent=5 // pred_check_branch
        %302 = sbr.rel (%p299) target = $region56
      $region55: #{encoder_forward.1} parent=5 // pred_region
        %s303 = ssub.s32 %s16, 1
        // Predicated region
        $region57: #{encoder_forward.1} parent=55 // pred_check
          %p304 = pneg %p84
        $region58: #{encoder_forward.1} parent=55 // pred_check_branch
          %306 = sbr.rel (%p304) target = $region60
        $region59: #{encoder_forward.1} parent=55 // pred_region
          %307 = dma.done [#allocation3], 18432
        $region60: #{encoder_forward.1} parent=55 // pred_fallthru
          _
        %p308 = scmp.lt.s32.totalorder %s21, 1
        %s309 = scalar_select %p308, %s21, 1
        %s310 = smul.addr %s309, 2
        %s311 = smul.addr %s310, 2
        %s312 = scalar_lea.vmem %s0, %s311
        %p313 = pneg %p42
        %p314 = pneg %p39
        %p315 = pneg %p63
        %p316 = pneg %p60
        %p317 = pneg %p84
        %p318 = pneg %p81
        %p319 = pneg %p105
        %p320 = pneg %p102
        %p321 = pneg %p126
        %p322 = pneg %p123
        %p323 = pneg %p147
        %p324 = pneg %p144
        %p325 = pneg %p168
        %p326 = pneg %p165
        %p327 = pneg %p189
        %p328 = pneg %p186
        %p329 = pneg %p210
        %p330 = pneg %p207
        %p331 = pneg %p236
        %p332 = pneg %p233
        %p333 = scmp.lt.s32.totalorder %s21, 1
        %s334 = scalar_select %p333, %s21, 1
        %s335 = smul.addr %s334, 4
        %s336 = smul.addr %s335, 8
        %s337 = scalar_lea.vmem %s9, %s336
        %p338 = scmp.lt.s32.totalorder %s21, 1
        %s339 = scalar_select %p338, %s21, 1
        %s340 = smul.addr %s339, 2
        %s341 = smul.addr %s340, 2
        %s342 = scalar_lea.vmem %s0, %s341
        %p343 = scmp.lt.s32.totalorder %s21, 1
        %s344 = scalar_select %p343, %s21, 1
        %s345 = smul.addr %s344, 4
        %s346 = smul.addr %s345, 8
        %s347 = scalar_lea.vmem %s9, %s346
        %v349 = vld [vmem:[%s342] sm:$0xf]
        %v350 = vld [vmem:[#allocation2] sm:$0xf]
        %v351 = vld [vmem:[#allocation2 + $0x4] sm:$0xf]
        %v352 = vld [vmem:[#allocation2 + $0x8] sm:$0xf]
        %v353 = vld [vmem:[#allocation2 + $0xc] sm:$0xf]
        %v354 = vld [vmem:[#allocation2 + $0x10] sm:$0xf]
        %v355 = vld [vmem:[#allocation2 + $0x14] sm:$0xf]
        %v356 = vld [vmem:[#allocation2 + $0x18] sm:$0xf]
        %v357 = vld [vmem:[#allocation2 + $0x1c] sm:$0xf]
        %v358 = vld [vmem:[#allocation2 + $0x20] sm:$0xf]
        %v359 = vld [vmem:[#allocation2 + $0x24] sm:$0xf]
        %v360 = vld [vmem:[#allocation2 + $0x28] sm:$0xf]
        %v361 = vld [vmem:[#allocation2 + $0x2c] sm:$0xf]
        %v362 = vld [vmem:[#allocation2 + $0x30] sm:$0xf]
        %v363 = vld [vmem:[#allocation2 + $0x34] sm:$0xf]
        %v364 = vld [vmem:[#allocation2 + $0x38] sm:$0xf]
        %v365 = vld [vmem:[#allocation2 + $0x3c] sm:$0xf]
        %v366 = vld [vmem:[#allocation2 + $0x40] sm:$0xf]
        %v367 = vld [vmem:[#allocation2 + $0x44] sm:$0xf]
        %v368 = vld [vmem:[#allocation2 + $0x48] sm:$0xf]
        %v369 = vld [vmem:[#allocation2 + $0x4c] sm:$0xf]
        %v370 = vld [vmem:[#allocation2 + $0x50] sm:$0xf]
        %v371 = vld [vmem:[#allocation2 + $0x54] sm:$0xf]
        %v372 = vld [vmem:[#allocation2 + $0x58] sm:$0xf]
        %v373 = vld [vmem:[#allocation2 + $0x5c] sm:$0xf]
        %v374 = vld [vmem:[#allocation2 + $0x60] sm:$0xf]
        %v375 = vld [vmem:[#allocation2 + $0x64] sm:$0xf]
        %v376 = vld [vmem:[#allocation2 + $0x68] sm:$0xf]
        %v377 = vld [vmem:[#allocation2 + $0x6c] sm:$0xf]
        %v378 = vld [vmem:[#allocation2 + $0x70] sm:$0xf]
        %v379 = vld [vmem:[#allocation2 + $0x74] sm:$0xf]
        %v380 = vld [vmem:[#allocation2 + $0x78] sm:$0xf]
        %v381 = vld [vmem:[#allocation2 + $0x7c] sm:$0xf]
        %v384 = vunpack.c.l.s4 1983009808
        %v385 = vunpack.c.0.s8 %v384
        %v386 = vlaneseq
        %v387 = vshrl.u32 %v386, 7
        %v388 = vsub.s32 %v385, %v387
        %v389 = vrot.slane %v349, %v388
        %v390 = vcombine.high %v389, %v389
        %v425 = vunpack.c.l.b16 %v350
        %v426 = vunpack.c.l.b16 %v351
        %v427 = vunpack.c.l.b16 %v352
        %v428 = vunpack.c.l.b16 %v353
        %v429 = vunpack.c.l.b16 %v354
        %v430 = vunpack.c.l.b16 %v355
        %v431 = vunpack.c.l.b16 %v356
        %v432 = vunpack.c.l.b16 %v357
        %v433 = vunpack.c.l.b16 %v358
        %v434 = vunpack.c.l.b16 %v359
        %v435 = vunpack.c.l.b16 %v360
        %v436 = vunpack.c.l.b16 %v361
        %v437 = vunpack.c.l.b16 %v362
        %v438 = vunpack.c.l.b16 %v363
        %v439 = vunpack.c.l.b16 %v364
        %v440 = vunpack.c.l.b16 %v365
        %v441 = vunpack.c.l.b16 %v366
        %v442 = vunpack.c.l.b16 %v367
        %v443 = vunpack.c.l.b16 %v368
        %v444 = vunpack.c.l.b16 %v369
        %v445 = vunpack.c.l.b16 %v370
        %v446 = vunpack.c.l.b16 %v371
        %v447 = vunpack.c.l.b16 %v372
        %v448 = vunpack.c.l.b16 %v373
        %v449 = vunpack.c.l.b16 %v374
        %v450 = vunpack.c.l.b16 %v375
        %v451 = vunpack.c.l.b16 %v376
        %v452 = vunpack.c.l.b16 %v377
        %v453 = vunpack.c.l.b16 %v378
        %v454 = vunpack.c.l.b16 %v379
        %v455 = vunpack.c.l.b16 %v380
        %v456 = vunpack.c.l.b16 %v381
        %v457 = vpack.c.b16 %v426, %v425
        %v458 = vpack.c.b16 %v428, %v427
        %v459 = vpack.c.b16 %v430, %v429
        %v460 = vpack.c.b16 %v432, %v431
        %v461 = vpack.c.b16 %v434, %v433
        %v462 = vpack.c.b16 %v436, %v435
        %v463 = vpack.c.b16 %v438, %v437
        %v464 = vpack.c.b16 %v440, %v439
        %v465 = vpack.c.b16 %v442, %v441
        %v466 = vpack.c.b16 %v444, %v443
        %v467 = vpack.c.b16 %v446, %v445
        %v468 = vpack.c.b16 %v448, %v447
        %v469 = vpack.c.b16 %v450, %v449
        %v470 = vpack.c.b16 %v452, %v451
        %v471 = vpack.c.b16 %v454, %v453
        %v472 = vpack.c.b16 %v456, %v455
        %489 = vmatprep.subr.bf16.mxu0 0
        %490 = vmatpush1.bf16.msra.mxu0 %v464
        %491 = vmatprep.subr.bf16.mxu0 0
        %492 = vmatpush1.bf16.msra.mxu0 %v463
        %493 = vmatprep.subr.bf16.mxu0 0
        %494 = vmatpush1.bf16.msra.mxu0 %v462
        %495 = vmatprep.subr.bf16.mxu0 0
        %496 = vmatpush1.bf16.msra.mxu0 %v461
        %497 = vmatprep.subr.bf16.mxu0 0
        %498 = vmatpush1.bf16.msra.mxu0 %v460
        %499 = vmatprep.subr.bf16.mxu0 0
        %500 = vmatpush1.bf16.msra.mxu0 %v459
        %501 = vmatprep.subr.bf16.mxu0 0
        %502 = vmatpush1.bf16.msra.mxu0 %v458
        %503 = vmatprep.subr.bf16.mxu0 0
        %504 = vmatpush1.bf16.msra.mxu0 %v457
        %505 = vmatprep.subr.bf16.mxu0 0
        %506 = vmatpush2.bf16.msra.mxu0 %v472
        %507 = vmatprep.subr.bf16.mxu0 0
        %508 = vmatpush2.bf16.msra.mxu0 %v471
        %509 = vmatprep.subr.bf16.mxu0 0
        %510 = vmatpush2.bf16.msra.mxu0 %v470
        %511 = vmatprep.subr.bf16.mxu0 0
        %512 = vmatpush2.bf16.msra.mxu0 %v469
        %513 = vmatprep.subr.bf16.mxu0 0
        %514 = vmatpush2.bf16.msra.mxu0 %v468
        %515 = vmatprep.subr.bf16.mxu0 0
        %516 = vmatpush2.bf16.msra.mxu0 %v467
        %517 = vmatprep.subr.bf16.mxu0 0
        %518 = vmatpush2.bf16.msra.mxu0 %v466
        %519 = vmatprep.subr.bf16.mxu0 0
        %520 = vmatpush2.bf16.msra.mxu0 %v465
        %521 = vmatprep.mubr.bf16.mxu0 %v390
        %522 = vmatmul.mubr.bf16.gmra.mxu0 %v389
        %v523 = vpop.f32.mrf.mxu0
        %v524 = vadd.f32 0.0, %v523
        %v525 = vpop.f32.mrf.mxu0
        %v526 = vpop.f32.mrf.mxu0
        %v527 = vpop.f32.mrf.mxu0
        %528 = vdwg.mxu0
        %v529 = vpack.c.bf16 %v524, %v524
        %v530 = vld [vmem:[%s1] sm:$0xf]
        %v531 = vld [vmem:[%s1 + $0x4] sm:$0xf]
        %s532 = scalar_lea.vmem [#allocation2], 128
        %v533 = vld [vmem:[%s532] sm:$0xf]
        %v534 = vld [vmem:[%s532 + $0x4] sm:$0xf]
        %v535 = vld [vmem:[%s532 + $0x8] sm:$0xf]
        %v536 = vld [vmem:[%s532 + $0xc] sm:$0xf]
        %v537 = vld [vmem:[%s532 + $0x10] sm:$0xf]
        %v538 = vld [vmem:[%s532 + $0x14] sm:$0xf]
        %v539 = vld [vmem:[%s532 + $0x18] sm:$0xf]
        %v540 = vld [vmem:[%s532 + $0x1c] sm:$0xf]
        %v541 = vld [vmem:[%s532 + $0x20] sm:$0xf]
        %v542 = vld [vmem:[%s532 + $0x24] sm:$0xf]
        %v543 = vld [vmem:[%s532 + $0x28] sm:$0xf]
        %v544 = vld [vmem:[%s532 + $0x2c] sm:$0xf]
        %v545 = vld [vmem:[%s532 + $0x30] sm:$0xf]
        %v546 = vld [vmem:[%s532 + $0x34] sm:$0xf]
        %v547 = vld [vmem:[%s532 + $0x38] sm:$0xf]
        %v548 = vld [vmem:[%s532 + $0x3c] sm:$0xf]
        %v549 = vld [vmem:[%s532 + $0x40] sm:$0xf]
        %v550 = vld [vmem:[%s532 + $0x44] sm:$0xf]
        %v551 = vld [vmem:[%s532 + $0x48] sm:$0xf]
        %v552 = vld [vmem:[%s532 + $0x4c] sm:$0xf]
        %v553 = vld [vmem:[%s532 + $0x50] sm:$0xf]
        %v554 = vld [vmem:[%s532 + $0x54] sm:$0xf]
        %v555 = vld [vmem:[%s532 + $0x58] sm:$0xf]
        %v556 = vld [vmem:[%s532 + $0x5c] sm:$0xf]
        %v557 = vld [vmem:[%s532 + $0x60] sm:$0xf]
        %v558 = vld [vmem:[%s532 + $0x64] sm:$0xf]
        %v559 = vld [vmem:[%s532 + $0x68] sm:$0xf]
        %v560 = vld [vmem:[%s532 + $0x6c] sm:$0xf]
        %v561 = vld [vmem:[%s532 + $0x70] sm:$0xf]
        %v562 = vld [vmem:[%s532 + $0x74] sm:$0xf]
        %v563 = vld [vmem:[%s532 + $0x78] sm:$0xf]
        %v564 = vld [vmem:[%s532 + $0x7c] sm:$0xf]
        %v597 = vunpack.c.l.b16 %v533
        %v598 = vunpack.c.l.b16 %v534
        %v599 = vunpack.c.l.b16 %v535
        %v600 = vunpack.c.l.b16 %v536
        %v601 = vunpack.c.l.b16 %v537
        %v602 = vunpack.c.l.b16 %v538
        %v603 = vunpack.c.l.b16 %v539
        %v604 = vunpack.c.l.b16 %v540
        %v605 = vunpack.c.l.b16 %v541
        %v606 = vunpack.c.l.b16 %v542
        %v607 = vunpack.c.l.b16 %v543
        %v608 = vunpack.c.l.b16 %v544
        %v609 = vunpack.c.l.b16 %v545
        %v610 = vunpack.c.l.b16 %v546
        %v611 = vunpack.c.l.b16 %v547
        %v612 = vunpack.c.l.b16 %v548
        %v613 = vunpack.c.l.b16 %v549
        %v614 = vunpack.c.l.b16 %v550
        %v615 = vunpack.c.l.b16 %v551
        %v616 = vunpack.c.l.b16 %v552
        %v617 = vunpack.c.l.b16 %v553
        %v618 = vunpack.c.l.b16 %v554
        %v619 = vunpack.c.l.b16 %v555
        %v620 = vunpack.c.l.b16 %v556
        %v621 = vunpack.c.l.b16 %v557
        %v622 = vunpack.c.l.b16 %v558
        %v623 = vunpack.c.l.b16 %v559
        %v624 = vunpack.c.l.b16 %v560
        %v625 = vunpack.c.l.b16 %v561
        %v626 = vunpack.c.l.b16 %v562
        %v627 = vunpack.c.l.b16 %v563
        %v628 = vunpack.c.l.b16 %v564
        %v629 = vpack.c.b16 %v598, %v597
        %v630 = vpack.c.b16 %v600, %v599
        %v631 = vpack.c.b16 %v602, %v601
        %v632 = vpack.c.b16 %v604, %v603
        %v633 = vpack.c.b16 %v606, %v605
        %v634 = vpack.c.b16 %v608, %v607
        %v635 = vpack.c.b16 %v610, %v609
        %v636 = vpack.c.b16 %v612, %v611
        %v637 = vpack.c.b16 %v614, %v613
        %v638 = vpack.c.b16 %v616, %v615
        %v639 = vpack.c.b16 %v618, %v617
        %v640 = vpack.c.b16 %v620, %v619
        %v641 = vpack.c.b16 %v622, %v621
        %v642 = vpack.c.b16 %v624, %v623
        %v643 = vpack.c.b16 %v626, %v625
        %v644 = vpack.c.b16 %v628, %v627
        %661 = vmatprep.subr.bf16.mxu0 0
        %662 = vmatpush1.bf16.msra.mxu0 %v636
        %663 = vmatprep.subr.bf16.mxu0 0
        %664 = vmatpush1.bf16.msra.mxu0 %v635
        %665 = vmatprep.subr.bf16.mxu0 0
        %666 = vmatpush1.bf16.msra.mxu0 %v634
        %667 = vmatprep.subr.bf16.mxu0 0
        %668 = vmatpush1.bf16.msra.mxu0 %v633
        %669 = vmatprep.subr.bf16.mxu0 0
        %670 = vmatpush1.bf16.msra.mxu0 %v632
        %671 = vmatprep.subr.bf16.mxu0 0
        %672 = vmatpush1.bf16.msra.mxu0 %v631
        %673 = vmatprep.subr.bf16.mxu0 0
        %674 = vmatpush1.bf16.msra.mxu0 %v630
        %675 = vmatprep.subr.bf16.mxu0 0
        %676 = vmatpush1.bf16.msra.mxu0 %v629
        %677 = vmatprep.subr.bf16.mxu0 0
        %678 = vmatpush2.bf16.msra.mxu0 %v644
        %679 = vmatprep.subr.bf16.mxu0 0
        %680 = vmatpush2.bf16.msra.mxu0 %v643
        %681 = vmatprep.subr.bf16.mxu0 0
        %682 = vmatpush2.bf16.msra.mxu0 %v642
        %683 = vmatprep.subr.bf16.mxu0 0
        %684 = vmatpush2.bf16.msra.mxu0 %v641
        %685 = vmatprep.subr.bf16.mxu0 0
        %686 = vmatpush2.bf16.msra.mxu0 %v640
        %687 = vmatprep.subr.bf16.mxu0 0
        %688 = vmatpush2.bf16.msra.mxu0 %v639
        %689 = vmatprep.subr.bf16.mxu0 0
        %690 = vmatpush2.bf16.msra.mxu0 %v638
        %691 = vmatprep.subr.bf16.mxu0 0
        %692 = vmatpush2.bf16.msra.mxu0 %v637
        %693 = vmatprep.mubr.bf16.mxu0 %v390
        %694 = vmatmul.mubr.bf16.gmra.mxu0 %v389
        %v695 = vpop.f32.mrf.mxu0
        %v696 = vadd.f32 0.0, %v695
        %v697 = vpop.f32.mrf.mxu0
        %v698 = vpop.f32.mrf.mxu0
        %v699 = vpop.f32.mrf.mxu0
        %700 = vdwg.mxu0
        %v701 = vpack.c.bf16 %v696, %v696
        %s702 = scalar_lea.vmem %s1, 8
        %v703 = vld [vmem:[%s702] sm:$0xf]
        %v704 = vld [vmem:[%s702 + $0x4] sm:$0xf]
        %v707 = vunpack.c.l.b16 %v703
        %v708 = vunpack.c.l.b16 %v704
        %v709 = vpack.c.b16 %v708, %v707
        %vm710 = vcmask 31744
        %v712 = vsel %vm710, %v709, 0
        %vm714 = vcmask 1041408
        %v716 = vsel %vm714, %v701, 0
        %718 = vmatprep.subr.bf16.mxu0 0
        %719 = vmatpush1.bf16.msra.mxu0 0
        %720 = vmatprep.subr.bf16.mxu0 0
        %721 = vmatpush1.bf16.msra.mxu0 0
        %722 = vmatprep.subr.bf16.mxu0 0
        %723 = vmatpush1.bf16.msra.mxu0 0
        %724 = vmatprep.subr.bf16.mxu0 0
        %725 = vmatpush1.bf16.msra.mxu0 0
        %726 = vmatprep.subr.bf16.mxu0 0
        %727 = vmatpush1.bf16.msra.mxu0 0
        %728 = vmatprep.subr.bf16.mxu0 0
        %729 = vmatpush1.bf16.msra.mxu0 0
        %730 = vmatprep.subr.bf16.mxu0 0
        %731 = vmatpush1.bf16.msra.mxu0 0
        %732 = vmatprep.subr.bf16.mxu0 0
        %733 = vmatpush1.bf16.msra.mxu0 %v716
        %734 = vmatprep.subr.bf16.mxu0 0
        %735 = vmatpush2.bf16.msra.mxu0 0
        %736 = vmatprep.subr.bf16.mxu0 0
        %737 = vmatpush2.bf16.msra.mxu0 0
        %738 = vmatprep.subr.bf16.mxu0 0
        %739 = vmatpush2.bf16.msra.mxu0 0
        %740 = vmatprep.subr.bf16.mxu0 0
        %741 = vmatpush2.bf16.msra.mxu0 0
        %742 = vmatprep.subr.bf16.mxu0 0
        %743 = vmatpush2.bf16.msra.mxu0 0
        %744 = vmatprep.subr.bf16.mxu0 0
        %745 = vmatpush2.bf16.msra.mxu0 0
        %746 = vmatprep.subr.bf16.mxu0 0
        %747 = vmatpush2.bf16.msra.mxu0 0
        %748 = vmatprep.subr.bf16.mxu0 0
        %749 = vmatpush2.bf16.msra.mxu0 0
        %750 = vmatprep.mubr.bf16.mxu0 0
        %751 = vmatmul.mubr.bf16.gmra.mxu0 %v712
        %v752 = vpop.f32.mrf.mxu0
        %v753 = vadd.f32 0.0, %v752
        %v754 = vpop.f32.mrf.mxu0
        %v755 = vpop.f32.mrf.mxu0
        %v756 = vadd.f32 0.0, %v755
        %v757 = vpop.f32.mrf.mxu0
        %758 = vdwg.mxu0
        %v761 = vunpack.c.l.b16 %v530
        %v762 = vunpack.c.l.b16 %v531
        %v763 = vpack.c.b16 %v762, %v761
        %v765 = vsel %vm710, %v763, 0
        %v768 = vsel %vm714, %v529, 0
        %770 = vmatprep.subr.bf16.mxu0 0
        %771 = vmatpush1.bf16.msra.mxu0 0
        %772 = vmatprep.subr.bf16.mxu0 0
        %773 = vmatpush1.bf16.msra.mxu0 0
        %774 = vmatprep.subr.bf16.mxu0 0
        %775 = vmatpush1.bf16.msra.mxu0 0
        %776 = vmatprep.subr.bf16.mxu0 0
        %777 = vmatpush1.bf16.msra.mxu0 0
        %778 = vmatprep.subr.bf16.mxu0 0
        %779 = vmatpush1.bf16.msra.mxu0 0
        %780 = vmatprep.subr.bf16.mxu0 0
        %781 = vmatpush1.bf16.msra.mxu0 0
        %782 = vmatprep.subr.bf16.mxu0 0
        %783 = vmatpush1.bf16.msra.mxu0 0
        %784 = vmatprep.subr.bf16.mxu0 0
        %785 = vmatpush1.bf16.msra.mxu0 %v768
        %786 = vmatprep.subr.bf16.mxu0 0
        %787 = vmatpush2.bf16.msra.mxu0 0
        %788 = vmatprep.subr.bf16.mxu0 0
        %789 = vmatpush2.bf16.msra.mxu0 0
        %790 = vmatprep.subr.bf16.mxu0 0
        %791 = vmatpush2.bf16.msra.mxu0 0
        %792 = vmatprep.subr.bf16.mxu0 0
        %793 = vmatpush2.bf16.msra.mxu0 0
        %794 = vmatprep.subr.bf16.mxu0 0
        %795 = vmatpush2.bf16.msra.mxu0 0
        %796 = vmatprep.subr.bf16.mxu0 0
        %797 = vmatpush2.bf16.msra.mxu0 0
        %798 = vmatprep.subr.bf16.mxu0 0
        %799 = vmatpush2.bf16.msra.mxu0 0
        %800 = vmatprep.subr.bf16.mxu0 0
        %801 = vmatpush2.bf16.msra.mxu0 0
        %802 = vmatprep.mubr.bf16.mxu0 0
        %803 = vmatmul.mubr.bf16.gmra.mxu0 %v765
        %v804 = vpop.f32.mrf.mxu0
        %v805 = vadd.f32 %v753, %v804
        %v806 = vpop.f32.mrf.mxu0
        %v807 = vpop.f32.mrf.mxu0
        %v808 = vadd.f32 %v756, %v807
        %v809 = vpop.f32.mrf.mxu0
        %810 = vdwg.mxu0
        %s811 = scalar_lea.vmem [#allocation2], 256
        %v812 = vld [vmem:[%s811] sm:$0xf]
        %v813 = vld [vmem:[%s811 + $0x4] sm:$0xf]
        %v814 = vld [vmem:[%s811 + $0x8] sm:$0xf]
        %v815 = vld [vmem:[%s811 + $0xc] sm:$0xf]
        %v816 = vld [vmem:[%s811 + $0x10] sm:$0xf]
        %v817 = vld [vmem:[%s811 + $0x14] sm:$0xf]
        %v818 = vld [vmem:[%s811 + $0x18] sm:$0xf]
        %v819 = vld [vmem:[%s811 + $0x1c] sm:$0xf]
        %v820 = vld [vmem:[%s811 + $0x20] sm:$0xf]
        %v821 = vld [vmem:[%s811 + $0x24] sm:$0xf]
        %v822 = vld [vmem:[%s811 + $0x28] sm:$0xf]
        %v823 = vld [vmem:[%s811 + $0x2c] sm:$0xf]
        %v824 = vld [vmem:[%s811 + $0x30] sm:$0xf]
        %v825 = vld [vmem:[%s811 + $0x34] sm:$0xf]
        %v826 = vld [vmem:[%s811 + $0x38] sm:$0xf]
        %v827 = vld [vmem:[%s811 + $0x3c] sm:$0xf]
        %v828 = vld [vmem:[%s811 + $0x40] sm:$0xf]
        %v829 = vld [vmem:[%s811 + $0x44] sm:$0xf]
        %v830 = vld [vmem:[%s811 + $0x48] sm:$0xf]
        %v831 = vld [vmem:[%s811 + $0x4c] sm:$0xf]
        %v832 = vld [vmem:[%s811 + $0x50] sm:$0xf]
        %v833 = vld [vmem:[%s811 + $0x54] sm:$0xf]
        %v834 = vld [vmem:[%s811 + $0x58] sm:$0xf]
        %v835 = vld [vmem:[%s811 + $0x5c] sm:$0xf]
        %v836 = vld [vmem:[%s811 + $0x60] sm:$0xf]
        %v837 = vld [vmem:[%s811 + $0x64] sm:$0xf]
        %v838 = vld [vmem:[%s811 + $0x68] sm:$0xf]
        %v839 = vld [vmem:[%s811 + $0x6c] sm:$0xf]
        %v840 = vld [vmem:[%s811 + $0x70] sm:$0xf]
        %v841 = vld [vmem:[%s811 + $0x74] sm:$0xf]
        %v842 = vld [vmem:[%s811 + $0x78] sm:$0xf]
        %v843 = vld [vmem:[%s811 + $0x7c] sm:$0xf]
        %v876 = vunpack.c.l.b16 %v812
        %v877 = vunpack.c.l.b16 %v813
        %v878 = vunpack.c.l.b16 %v814
        %v879 = vunpack.c.l.b16 %v815
        %v880 = vunpack.c.l.b16 %v816
        %v881 = vunpack.c.l.b16 %v817
        %v882 = vunpack.c.l.b16 %v818
        %v883 = vunpack.c.l.b16 %v819
        %v884 = vunpack.c.l.b16 %v820
        %v885 = vunpack.c.l.b16 %v821
        %v886 = vunpack.c.l.b16 %v822
        %v887 = vunpack.c.l.b16 %v823
        %v888 = vunpack.c.l.b16 %v824
        %v889 = vunpack.c.l.b16 %v825
        %v890 = vunpack.c.l.b16 %v826
        %v891 = vunpack.c.l.b16 %v827
        %v892 = vunpack.c.l.b16 %v828
        %v893 = vunpack.c.l.b16 %v829
        %v894 = vunpack.c.l.b16 %v830
        %v895 = vunpack.c.l.b16 %v831
        %v896 = vunpack.c.l.b16 %v832
        %v897 = vunpack.c.l.b16 %v833
        %v898 = vunpack.c.l.b16 %v834
        %v899 = vunpack.c.l.b16 %v835
        %v900 = vunpack.c.l.b16 %v836
        %v901 = vunpack.c.l.b16 %v837
        %v902 = vunpack.c.l.b16 %v838
        %v903 = vunpack.c.l.b16 %v839
        %v904 = vunpack.c.l.b16 %v840
        %v905 = vunpack.c.l.b16 %v841
        %v906 = vunpack.c.l.b16 %v842
        %v907 = vunpack.c.l.b16 %v843
        %v908 = vpack.c.b16 %v877, %v876
        %v909 = vpack.c.b16 %v879, %v878
        %v910 = vpack.c.b16 %v881, %v880
        %v911 = vpack.c.b16 %v883, %v882
        %v912 = vpack.c.b16 %v885, %v884
        %v913 = vpack.c.b16 %v887, %v886
        %v914 = vpack.c.b16 %v889, %v888
        %v915 = vpack.c.b16 %v891, %v890
        %v916 = vpack.c.b16 %v893, %v892
        %v917 = vpack.c.b16 %v895, %v894
        %v918 = vpack.c.b16 %v897, %v896
        %v919 = vpack.c.b16 %v899, %v898
        %v920 = vpack.c.b16 %v901, %v900
        %v921 = vpack.c.b16 %v903, %v902
        %v922 = vpack.c.b16 %v905, %v904
        %v923 = vpack.c.b16 %v907, %v906
        %940 = vmatprep.subr.bf16.mxu0 0
        %941 = vmatpush1.bf16.msra.mxu0 %v915
        %942 = vmatprep.subr.bf16.mxu0 0
        %943 = vmatpush1.bf16.msra.mxu0 %v914
        %944 = vmatprep.subr.bf16.mxu0 0
        %945 = vmatpush1.bf16.msra.mxu0 %v913
        %946 = vmatprep.subr.bf16.mxu0 0
        %947 = vmatpush1.bf16.msra.mxu0 %v912
        %948 = vmatprep.subr.bf16.mxu0 0
        %949 = vmatpush1.bf16.msra.mxu0 %v911
        %950 = vmatprep.subr.bf16.mxu0 0
        %951 = vmatpush1.bf16.msra.mxu0 %v910
        %952 = vmatprep.subr.bf16.mxu0 0
        %953 = vmatpush1.bf16.msra.mxu0 %v909
        %954 = vmatprep.subr.bf16.mxu0 0
        %955 = vmatpush1.bf16.msra.mxu0 %v908
        %956 = vmatprep.subr.bf16.mxu0 0
        %957 = vmatpush2.bf16.msra.mxu0 %v923
        %958 = vmatprep.subr.bf16.mxu0 0
        %959 = vmatpush2.bf16.msra.mxu0 %v922
        %960 = vmatprep.subr.bf16.mxu0 0
        %961 = vmatpush2.bf16.msra.mxu0 %v921
        %962 = vmatprep.subr.bf16.mxu0 0
        %963 = vmatpush2.bf16.msra.mxu0 %v920
        %964 = vmatprep.subr.bf16.mxu0 0
        %965 = vmatpush2.bf16.msra.mxu0 %v919
        %966 = vmatprep.subr.bf16.mxu0 0
        %967 = vmatpush2.bf16.msra.mxu0 %v918
        %968 = vmatprep.subr.bf16.mxu0 0
        %969 = vmatpush2.bf16.msra.mxu0 %v917
        %970 = vmatprep.subr.bf16.mxu0 0
        %971 = vmatpush2.bf16.msra.mxu0 %v916
        %972 = vmatprep.mubr.bf16.mxu0 %v390
        %973 = vmatmul.mubr.bf16.gmra.mxu0 %v389
        %v974 = vpop.f32.mrf.mxu0
        %v975 = vadd.f32 0.0, %v974
        %v976 = vpop.f32.mrf.mxu0
        %v977 = vpop.f32.mrf.mxu0
        %v978 = vpop.f32.mrf.mxu0
        %979 = vdwg.mxu0
        %v980 = vpack.c.bf16 %v975, %v975
        %s981 = scalar_lea.vmem %s1, 16
        %v982 = vld [vmem:[%s981] sm:$0xf]
        %v983 = vld [vmem:[%s981 + $0x4] sm:$0xf]
        %v986 = vunpack.c.l.b16 %v982
        %v987 = vunpack.c.l.b16 %v983
        %v988 = vpack.c.b16 %v987, %v986
        %v990 = vsel %vm710, %v988, 0
        %v993 = vsel %vm714, %v980, 0
        %995 = vmatprep.subr.bf16.mxu0 0
        %996 = vmatpush1.bf16.msra.mxu0 0
        %997 = vmatprep.subr.bf16.mxu0 0
        %998 = vmatpush1.bf16.msra.mxu0 0
        %999 = vmatprep.subr.bf16.mxu0 0
        %1000 = vmatpush1.bf16.msra.mxu0 0
        %1001 = vmatprep.subr.bf16.mxu0 0
        %1002 = vmatpush1.bf16.msra.mxu0 0
        %1003 = vmatprep.subr.bf16.mxu0 0
        %1004 = vmatpush1.bf16.msra.mxu0 0
        %1005 = vmatprep.subr.bf16.mxu0 0
        %1006 = vmatpush1.bf16.msra.mxu0 0
        %1007 = vmatprep.subr.bf16.mxu0 0
        %1008 = vmatpush1.bf16.msra.mxu0 0
        %1009 = vmatprep.subr.bf16.mxu0 0
        %1010 = vmatpush1.bf16.msra.mxu0 %v993
        %1011 = vmatprep.subr.bf16.mxu0 0
        %1012 = vmatpush2.bf16.msra.mxu0 0
        %1013 = vmatprep.subr.bf16.mxu0 0
        %1014 = vmatpush2.bf16.msra.mxu0 0
        %1015 = vmatprep.subr.bf16.mxu0 0
        %1016 = vmatpush2.bf16.msra.mxu0 0
        %1017 = vmatprep.subr.bf16.mxu0 0
        %1018 = vmatpush2.bf16.msra.mxu0 0
        %1019 = vmatprep.subr.bf16.mxu0 0
        %1020 = vmatpush2.bf16.msra.mxu0 0
        %1021 = vmatprep.subr.bf16.mxu0 0
        %1022 = vmatpush2.bf16.msra.mxu0 0
        %1023 = vmatprep.subr.bf16.mxu0 0
        %1024 = vmatpush2.bf16.msra.mxu0 0
        %1025 = vmatprep.subr.bf16.mxu0 0
        %1026 = vmatpush2.bf16.msra.mxu0 0
        %1027 = vmatprep.mubr.bf16.mxu0 0
        %1028 = vmatmul.mubr.bf16.gmra.mxu0 %v990
        %v1029 = vpop.f32.mrf.mxu0
        %v1030 = vadd.f32 0.0, %v1029
        %v1031 = vpop.f32.mrf.mxu0
        %v1032 = vpop.f32.mrf.mxu0
        %v1033 = vadd.f32 0.0, %v1032
        %v1034 = vpop.f32.mrf.mxu0
        %1035 = vdwg.mxu0
        %v1036 = vadd.f32 %v805, %v1030
        %v1037 = vadd.f32 %v808, %v1033
        %s1038 = scalar_lea.vmem [#allocation2], 384
        %v1039 = vld [vmem:[%s1038] sm:$0xf]
        %v1040 = vld [vmem:[%s1038 + $0x4] sm:$0xf]
        %v1041 = vld [vmem:[%s1038 + $0x8] sm:$0xf]
        %v1042 = vld [vmem:[%s1038 + $0xc] sm:$0xf]
        %v1043 = vld [vmem:[%s1038 + $0x10] sm:$0xf]
        %v1044 = vld [vmem:[%s1038 + $0x14] sm:$0xf]
        %v1045 = vld [vmem:[%s1038 + $0x18] sm:$0xf]
        %v1046 = vld [vmem:[%s1038 + $0x1c] sm:$0xf]
        %v1047 = vld [vmem:[%s1038 + $0x20] sm:$0xf]
        %v1048 = vld [vmem:[%s1038 + $0x24] sm:$0xf]
        %v1049 = vld [vmem:[%s1038 + $0x28] sm:$0xf]
        %v1050 = vld [vmem:[%s1038 + $0x2c] sm:$0xf]
        %v1051 = vld [vmem:[%s1038 + $0x30] sm:$0xf]
        %v1052 = vld [vmem:[%s1038 + $0x34] sm:$0xf]
        %v1053 = vld [vmem:[%s1038 + $0x38] sm:$0xf]
        %v1054 = vld [vmem:[%s1038 + $0x3c] sm:$0xf]
        %v1055 = vld [vmem:[%s1038 + $0x40] sm:$0xf]
        %v1056 = vld [vmem:[%s1038 + $0x44] sm:$0xf]
        %v1057 = vld [vmem:[%s1038 + $0x48] sm:$0xf]
        %v1058 = vld [vmem:[%s1038 + $0x4c] sm:$0xf]
        %v1059 = vld [vmem:[%s1038 + $0x50] sm:$0xf]
        %v1060 = vld [vmem:[%s1038 + $0x54] sm:$0xf]
        %v1061 = vld [vmem:[%s1038 + $0x58] sm:$0xf]
        %v1062 = vld [vmem:[%s1038 + $0x5c] sm:$0xf]
        %v1063 = vld [vmem:[%s1038 + $0x60] sm:$0xf]
        %v1064 = vld [vmem:[%s1038 + $0x64] sm:$0xf]
        %v1065 = vld [vmem:[%s1038 + $0x68] sm:$0xf]
        %v1066 = vld [vmem:[%s1038 + $0x6c] sm:$0xf]
        %v1067 = vld [vmem:[%s1038 + $0x70] sm:$0xf]
        %v1068 = vld [vmem:[%s1038 + $0x74] sm:$0xf]
        %v1069 = vld [vmem:[%s1038 + $0x78] sm:$0xf]
        %v1070 = vld [vmem:[%s1038 + $0x7c] sm:$0xf]
        %v1103 = vunpack.c.l.b16 %v1039
        %v1104 = vunpack.c.l.b16 %v1040
        %v1105 = vunpack.c.l.b16 %v1041
        %v1106 = vunpack.c.l.b16 %v1042
        %v1107 = vunpack.c.l.b16 %v1043
        %v1108 = vunpack.c.l.b16 %v1044
        %v1109 = vunpack.c.l.b16 %v1045
        %v1110 = vunpack.c.l.b16 %v1046
        %v1111 = vunpack.c.l.b16 %v1047
        %v1112 = vunpack.c.l.b16 %v1048
        %v1113 = vunpack.c.l.b16 %v1049
        %v1114 = vunpack.c.l.b16 %v1050
        %v1115 = vunpack.c.l.b16 %v1051
        %v1116 = vunpack.c.l.b16 %v1052
        %v1117 = vunpack.c.l.b16 %v1053
        %v1118 = vunpack.c.l.b16 %v1054
        %v1119 = vunpack.c.l.b16 %v1055
        %v1120 = vunpack.c.l.b16 %v1056
        %v1121 = vunpack.c.l.b16 %v1057
        %v1122 = vunpack.c.l.b16 %v1058
        %v1123 = vunpack.c.l.b16 %v1059
        %v1124 = vunpack.c.l.b16 %v1060
        %v1125 = vunpack.c.l.b16 %v1061
        %v1126 = vunpack.c.l.b16 %v1062
        %v1127 = vunpack.c.l.b16 %v1063
        %v1128 = vunpack.c.l.b16 %v1064
        %v1129 = vunpack.c.l.b16 %v1065
        %v1130 = vunpack.c.l.b16 %v1066
        %v1131 = vunpack.c.l.b16 %v1067
        %v1132 = vunpack.c.l.b16 %v1068
        %v1133 = vunpack.c.l.b16 %v1069
        %v1134 = vunpack.c.l.b16 %v1070
        %v1135 = vpack.c.b16 %v1104, %v1103
        %v1136 = vpack.c.b16 %v1106, %v1105
        %v1137 = vpack.c.b16 %v1108, %v1107
        %v1138 = vpack.c.b16 %v1110, %v1109
        %v1139 = vpack.c.b16 %v1112, %v1111
        %v1140 = vpack.c.b16 %v1114, %v1113
        %v1141 = vpack.c.b16 %v1116, %v1115
        %v1142 = vpack.c.b16 %v1118, %v1117
        %v1143 = vpack.c.b16 %v1120, %v1119
        %v1144 = vpack.c.b16 %v1122, %v1121
        %v1145 = vpack.c.b16 %v1124, %v1123
        %v1146 = vpack.c.b16 %v1126, %v1125
        %v1147 = vpack.c.b16 %v1128, %v1127
        %v1148 = vpack.c.b16 %v1130, %v1129
        %v1149 = vpack.c.b16 %v1132, %v1131
        %v1150 = vpack.c.b16 %v1134, %v1133
        %1167 = vmatprep.subr.bf16.mxu0 0
        %1168 = vmatpush1.bf16.msra.mxu0 %v1142
        %1169 = vmatprep.subr.bf16.mxu0 0
        %1170 = vmatpush1.bf16.msra.mxu0 %v1141
        %1171 = vmatprep.subr.bf16.mxu0 0
        %1172 = vmatpush1.bf16.msra.mxu0 %v1140
        %1173 = vmatprep.subr.bf16.mxu0 0
        %1174 = vmatpush1.bf16.msra.mxu0 %v1139
        %1175 = vmatprep.subr.bf16.mxu0 0
        %1176 = vmatpush1.bf16.msra.mxu0 %v1138
        %1177 = vmatprep.subr.bf16.mxu0 0
        %1178 = vmatpush1.bf16.msra.mxu0 %v1137
        %1179 = vmatprep.subr.bf16.mxu0 0
        %1180 = vmatpush1.bf16.msra.mxu0 %v1136
        %1181 = vmatprep.subr.bf16.mxu0 0
        %1182 = vmatpush1.bf16.msra.mxu0 %v1135
        %1183 = vmatprep.subr.bf16.mxu0 0
        %1184 = vmatpush2.bf16.msra.mxu0 %v1150
        %1185 = vmatprep.subr.bf16.mxu0 0
        %1186 = vmatpush2.bf16.msra.mxu0 %v1149
        %1187 = vmatprep.subr.bf16.mxu0 0
        %1188 = vmatpush2.bf16.msra.mxu0 %v1148
        %1189 = vmatprep.subr.bf16.mxu0 0
        %1190 = vmatpush2.bf16.msra.mxu0 %v1147
        %1191 = vmatprep.subr.bf16.mxu0 0
        %1192 = vmatpush2.bf16.msra.mxu0 %v1146
        %1193 = vmatprep.subr.bf16.mxu0 0
        %1194 = vmatpush2.bf16.msra.mxu0 %v1145
        %1195 = vmatprep.subr.bf16.mxu0 0
        %1196 = vmatpush2.bf16.msra.mxu0 %v1144
        %1197 = vmatprep.subr.bf16.mxu0 0
        %1198 = vmatpush2.bf16.msra.mxu0 %v1143
        %1199 = vmatprep.mubr.bf16.mxu0 %v390
        %1200 = vmatmul.mubr.bf16.gmra.mxu0 %v389
        %v1201 = vpop.f32.mrf.mxu0
        %v1202 = vadd.f32 0.0, %v1201
        %v1203 = vpop.f32.mrf.mxu0
        %v1204 = vpop.f32.mrf.mxu0
        %v1205 = vpop.f32.mrf.mxu0
        %1206 = vdwg.mxu0
        %v1207 = vpack.c.bf16 %v1202, %v1202
        %s1208 = scalar_lea.vmem %s1, 24
        %v1209 = vld [vmem:[%s1208] sm:$0xf]
        %v1210 = vld [vmem:[%s1208 + $0x4] sm:$0xf]
        %v1213 = vunpack.c.l.b16 %v1209
        %v1214 = vunpack.c.l.b16 %v1210
        %v1215 = vpack.c.b16 %v1214, %v1213
        %v1217 = vsel %vm710, %v1215, 0
        %v1220 = vsel %vm714, %v1207, 0
        %1222 = vmatprep.subr.bf16.mxu0 0
        %1223 = vmatpush1.bf16.msra.mxu0 0
        %1224 = vmatprep.subr.bf16.mxu0 0
        %1225 = vmatpush1.bf16.msra.mxu0 0
        %1226 = vmatprep.subr.bf16.mxu0 0
        %1227 = vmatpush1.bf16.msra.mxu0 0
        %1228 = vmatprep.subr.bf16.mxu0 0
        %1229 = vmatpush1.bf16.msra.mxu0 0
        %1230 = vmatprep.subr.bf16.mxu0 0
        %1231 = vmatpush1.bf16.msra.mxu0 0
        %1232 = vmatprep.subr.bf16.mxu0 0
        %1233 = vmatpush1.bf16.msra.mxu0 0
        %1234 = vmatprep.subr.bf16.mxu0 0
        %1235 = vmatpush1.bf16.msra.mxu0 0
        %1236 = vmatprep.subr.bf16.mxu0 0
        %1237 = vmatpush1.bf16.msra.mxu0 %v1220
        %1238 = vmatprep.subr.bf16.mxu0 0
        %1239 = vmatpush2.bf16.msra.mxu0 0
        %1240 = vmatprep.subr.bf16.mxu0 0
        %1241 = vmatpush2.bf16.msra.mxu0 0
        %1242 = vmatprep.subr.bf16.mxu0 0
        %1243 = vmatpush2.bf16.msra.mxu0 0
        %1244 = vmatprep.subr.bf16.mxu0 0
        %1245 = vmatpush2.bf16.msra.mxu0 0
        %1246 = vmatprep.subr.bf16.mxu0 0
        %1247 = vmatpush2.bf16.msra.mxu0 0
        %1248 = vmatprep.subr.bf16.mxu0 0
        %1249 = vmatpush2.bf16.msra.mxu0 0
        %1250 = vmatprep.subr.bf16.mxu0 0
        %1251 = vmatpush2.bf16.msra.mxu0 0
        %1252 = vmatprep.subr.bf16.mxu0 0
        %1253 = vmatpush2.bf16.msra.mxu0 0
        %1254 = vmatprep.mubr.bf16.mxu0 0
        %1255 = vmatmul.mubr.bf16.gmra.mxu0 %v1217
        %v1256 = vpop.f32.mrf.mxu0
        %v1257 = vadd.f32 0.0, %v1256
        %v1258 = vpop.f32.mrf.mxu0
        %v1259 = vpop.f32.mrf.mxu0
        %v1260 = vadd.f32 0.0, %v1259
        %v1261 = vpop.f32.mrf.mxu0
        %1262 = vdwg.mxu0
        %v1263 = vadd.f32 %v1036, %v1257
        %v1264 = vadd.f32 %v1037, %v1260
        %s1265 = scalar_lea.vmem [#allocation2], 512
        %v1266 = vld [vmem:[%s1265] sm:$0xf]
        %v1267 = vld [vmem:[%s1265 + $0x4] sm:$0xf]
        %v1268 = vld [vmem:[%s1265 + $0x8] sm:$0xf]
        %v1269 = vld [vmem:[%s1265 + $0xc] sm:$0xf]
        %v1270 = vld [vmem:[%s1265 + $0x10] sm:$0xf]
        %v1271 = vld [vmem:[%s1265 + $0x14] sm:$0xf]
        %v1272 = vld [vmem:[%s1265 + $0x18] sm:$0xf]
        %v1273 = vld [vmem:[%s1265 + $0x1c] sm:$0xf]
        %v1274 = vld [vmem:[%s1265 + $0x20] sm:$0xf]
        %v1275 = vld [vmem:[%s1265 + $0x24] sm:$0xf]
        %v1276 = vld [vmem:[%s1265 + $0x28] sm:$0xf]
        %v1277 = vld [vmem:[%s1265 + $0x2c] sm:$0xf]
        %v1278 = vld [vmem:[%s1265 + $0x30] sm:$0xf]
        %v1279 = vld [vmem:[%s1265 + $0x34] sm:$0xf]
        %v1280 = vld [vmem:[%s1265 + $0x38] sm:$0xf]
        %v1281 = vld [vmem:[%s1265 + $0x3c] sm:$0xf]
        %v1282 = vld [vmem:[%s1265 + $0x40] sm:$0xf]
        %v1283 = vld [vmem:[%s1265 + $0x44] sm:$0xf]
        %v1284 = vld [vmem:[%s1265 + $0x48] sm:$0xf]
        %v1285 = vld [vmem:[%s1265 + $0x4c] sm:$0xf]
        %v1286 = vld [vmem:[%s1265 + $0x50] sm:$0xf]
        %v1287 = vld [vmem:[%s1265 + $0x54] sm:$0xf]
        %v1288 = vld [vmem:[%s1265 + $0x58] sm:$0xf]
        %v1289 = vld [vmem:[%s1265 + $0x5c] sm:$0xf]
        %v1290 = vld [vmem:[%s1265 + $0x60] sm:$0xf]
        %v1291 = vld [vmem:[%s1265 + $0x64] sm:$0xf]
        %v1292 = vld [vmem:[%s1265 + $0x68] sm:$0xf]
        %v1293 = vld [vmem:[%s1265 + $0x6c] sm:$0xf]
        %v1294 = vld [vmem:[%s1265 + $0x70] sm:$0xf]
        %v1295 = vld [vmem:[%s1265 + $0x74] sm:$0xf]
        %v1296 = vld [vmem:[%s1265 + $0x78] sm:$0xf]
        %v1297 = vld [vmem:[%s1265 + $0x7c] sm:$0xf]
        %v1330 = vunpack.c.l.b16 %v1266
        %v1331 = vunpack.c.l.b16 %v1267
        %v1332 = vunpack.c.l.b16 %v1268
        %v1333 = vunpack.c.l.b16 %v1269
        %v1334 = vunpack.c.l.b16 %v1270
        %v1335 = vunpack.c.l.b16 %v1271
        %v1336 = vunpack.c.l.b16 %v1272
        %v1337 = vunpack.c.l.b16 %v1273
        %v1338 = vunpack.c.l.b16 %v1274
        %v1339 = vunpack.c.l.b16 %v1275
        %v1340 = vunpack.c.l.b16 %v1276
        %v1341 = vunpack.c.l.b16 %v1277
        %v1342 = vunpack.c.l.b16 %v1278
        %v1343 = vunpack.c.l.b16 %v1279
        %v1344 = vunpack.c.l.b16 %v1280
        %v1345 = vunpack.c.l.b16 %v1281
        %v1346 = vunpack.c.l.b16 %v1282
        %v1347 = vunpack.c.l.b16 %v1283
        %v1348 = vunpack.c.l.b16 %v1284
        %v1349 = vunpack.c.l.b16 %v1285
        %v1350 = vunpack.c.l.b16 %v1286
        %v1351 = vunpack.c.l.b16 %v1287
        %v1352 = vunpack.c.l.b16 %v1288
        %v1353 = vunpack.c.l.b16 %v1289
        %v1354 = vunpack.c.l.b16 %v1290
        %v1355 = vunpack.c.l.b16 %v1291
        %v1356 = vunpack.c.l.b16 %v1292
        %v1357 = vunpack.c.l.b16 %v1293
        %v1358 = vunpack.c.l.b16 %v1294
        %v1359 = vunpack.c.l.b16 %v1295
        %v1360 = vunpack.c.l.b16 %v1296
        %v1361 = vunpack.c.l.b16 %v1297
        %v1362 = vpack.c.b16 %v1331, %v1330
        %v1363 = vpack.c.b16 %v1333, %v1332
        %v1364 = vpack.c.b16 %v1335, %v1334
        %v1365 = vpack.c.b16 %v1337, %v1336
        %v1366 = vpack.c.b16 %v1339, %v1338
        %v1367 = vpack.c.b16 %v1341, %v1340
        %v1368 = vpack.c.b16 %v1343, %v1342
        %v1369 = vpack.c.b16 %v1345, %v1344
        %v1370 = vpack.c.b16 %v1347, %v1346
        %v1371 = vpack.c.b16 %v1349, %v1348
        %v1372 = vpack.c.b16 %v1351, %v1350
        %v1373 = vpack.c.b16 %v1353, %v1352
        %v1374 = vpack.c.b16 %v1355, %v1354
        %v1375 = vpack.c.b16 %v1357, %v1356
        %v1376 = vpack.c.b16 %v1359, %v1358
        %v1377 = vpack.c.b16 %v1361, %v1360
        %1394 = vmatprep.subr.bf16.mxu0 0
        %1395 = vmatpush1.bf16.msra.mxu0 %v1369
        %1396 = vmatprep.subr.bf16.mxu0 0
        %1397 = vmatpush1.bf16.msra.mxu0 %v1368
        %1398 = vmatprep.subr.bf16.mxu0 0
        %1399 = vmatpush1.bf16.msra.mxu0 %v1367
        %1400 = vmatprep.subr.bf16.mxu0 0
        %1401 = vmatpush1.bf16.msra.mxu0 %v1366
        %1402 = vmatprep.subr.bf16.mxu0 0
        %1403 = vmatpush1.bf16.msra.mxu0 %v1365
        %1404 = vmatprep.subr.bf16.mxu0 0
        %1405 = vmatpush1.bf16.msra.mxu0 %v1364
        %1406 = vmatprep.subr.bf16.mxu0 0
        %1407 = vmatpush1.bf16.msra.mxu0 %v1363
        %1408 = vmatprep.subr.bf16.mxu0 0
        %1409 = vmatpush1.bf16.msra.mxu0 %v1362
        %1410 = vmatprep.subr.bf16.mxu0 0
        %1411 = vmatpush2.bf16.msra.mxu0 %v1377
        %1412 = vmatprep.subr.bf16.mxu0 0
        %1413 = vmatpush2.bf16.msra.mxu0 %v1376
        %1414 = vmatprep.subr.bf16.mxu0 0
        %1415 = vmatpush2.bf16.msra.mxu0 %v1375
        %1416 = vmatprep.subr.bf16.mxu0 0
        %1417 = vmatpush2.bf16.msra.mxu0 %v1374
        %1418 = vmatprep.subr.bf16.mxu0 0
        %1419 = vmatpush2.bf16.msra.mxu0 %v1373
        %1420 = vmatprep.subr.bf16.mxu0 0
        %1421 = vmatpush2.bf16.msra.mxu0 %v1372
        %1422 = vmatprep.subr.bf16.mxu0 0
        %1423 = vmatpush2.bf16.msra.mxu0 %v1371
        %1424 = vmatprep.subr.bf16.mxu0 0
        %1425 = vmatpush2.bf16.msra.mxu0 %v1370
        %1426 = vmatprep.mubr.bf16.mxu0 %v390
        %1427 = vmatmul.mubr.bf16.gmra.mxu0 %v389
        %v1428 = vpop.f32.mrf.mxu0
        %v1429 = vadd.f32 0.0, %v1428
        %v1430 = vpop.f32.mrf.mxu0
        %v1431 = vpop.f32.mrf.mxu0
        %v1432 = vpop.f32.mrf.mxu0
        %1433 = vdwg.mxu0
        %v1434 = vpack.c.bf16 %v1429, %v1429
        %s1435 = scalar_lea.vmem %s1, 32
        %v1436 = vld [vmem:[%s1435] sm:$0xf]
        %v1437 = vld [vmem:[%s1435 + $0x4] sm:$0xf]
        %v1440 = vunpack.c.l.b16 %v1436
        %v1441 = vunpack.c.l.b16 %v1437
        %v1442 = vpack.c.b16 %v1441, %v1440
        %v1444 = vsel %vm710, %v1442, 0
        %v1447 = vsel %vm714, %v1434, 0
        %1449 = vmatprep.subr.bf16.mxu0 0
        %1450 = vmatpush1.bf16.msra.mxu0 0
        %1451 = vmatprep.subr.bf16.mxu0 0
        %1452 = vmatpush1.bf16.msra.mxu0 0
        %1453 = vmatprep.subr.bf16.mxu0 0
        %1454 = vmatpush1.bf16.msra.mxu0 0
        %1455 = vmatprep.subr.bf16.mxu0 0
        %1456 = vmatpush1.bf16.msra.mxu0 0
        %1457 = vmatprep.subr.bf16.mxu0 0
        %1458 = vmatpush1.bf16.msra.mxu0 0
        %1459 = vmatprep.subr.bf16.mxu0 0
        %1460 = vmatpush1.bf16.msra.mxu0 0
        %1461 = vmatprep.subr.bf16.mxu0 0
        %1462 = vmatpush1.bf16.msra.mxu0 0
        %1463 = vmatprep.subr.bf16.mxu0 0
        %1464 = vmatpush1.bf16.msra.mxu0 %v1447
        %1465 = vmatprep.subr.bf16.mxu0 0
        %1466 = vmatpush2.bf16.msra.mxu0 0
        %1467 = vmatprep.subr.bf16.mxu0 0
        %1468 = vmatpush2.bf16.msra.mxu0 0
        %1469 = vmatprep.subr.bf16.mxu0 0
        %1470 = vmatpush2.bf16.msra.mxu0 0
        %1471 = vmatprep.subr.bf16.mxu0 0
        %1472 = vmatpush2.bf16.msra.mxu0 0
        %1473 = vmatprep.subr.bf16.mxu0 0
        %1474 = vmatpush2.bf16.msra.mxu0 0
        %1475 = vmatprep.subr.bf16.mxu0 0
        %1476 = vmatpush2.bf16.msra.mxu0 0
        %1477 = vmatprep.subr.bf16.mxu0 0
        %1478 = vmatpush2.bf16.msra.mxu0 0
        %1479 = vmatprep.subr.bf16.mxu0 0
        %1480 = vmatpush2.bf16.msra.mxu0 0
        %1481 = vmatprep.mubr.bf16.mxu0 0
        %1482 = vmatmul.mubr.bf16.gmra.mxu0 %v1444
        %v1483 = vpop.f32.mrf.mxu0
        %v1484 = vadd.f32 0.0, %v1483
        %v1485 = vpop.f32.mrf.mxu0
        %v1486 = vpop.f32.mrf.mxu0
        %v1487 = vadd.f32 0.0, %v1486
        %v1488 = vpop.f32.mrf.mxu0
        %1489 = vdwg.mxu0
        %v1490 = vadd.f32 %v1263, %v1484
        %v1491 = vadd.f32 %v1264, %v1487
        %s1492 = scalar_lea.vmem [#allocation2], 640
        %v1493 = vld [vmem:[%s1492] sm:$0xf]
        %v1494 = vld [vmem:[%s1492 + $0x4] sm:$0xf]
        %v1495 = vld [vmem:[%s1492 + $0x8] sm:$0xf]
        %v1496 = vld [vmem:[%s1492 + $0xc] sm:$0xf]
        %v1497 = vld [vmem:[%s1492 + $0x10] sm:$0xf]
        %v1498 = vld [vmem:[%s1492 + $0x14] sm:$0xf]
        %v1499 = vld [vmem:[%s1492 + $0x18] sm:$0xf]
        %v1500 = vld [vmem:[%s1492 + $0x1c] sm:$0xf]
        %v1501 = vld [vmem:[%s1492 + $0x20] sm:$0xf]
        %v1502 = vld [vmem:[%s1492 + $0x24] sm:$0xf]
        %v1503 = vld [vmem:[%s1492 + $0x28] sm:$0xf]
        %v1504 = vld [vmem:[%s1492 + $0x2c] sm:$0xf]
        %v1505 = vld [vmem:[%s1492 + $0x30] sm:$0xf]
        %v1506 = vld [vmem:[%s1492 + $0x34] sm:$0xf]
        %v1507 = vld [vmem:[%s1492 + $0x38] sm:$0xf]
        %v1508 = vld [vmem:[%s1492 + $0x3c] sm:$0xf]
        %v1509 = vld [vmem:[%s1492 + $0x40] sm:$0xf]
        %v1510 = vld [vmem:[%s1492 + $0x44] sm:$0xf]
        %v1511 = vld [vmem:[%s1492 + $0x48] sm:$0xf]
        %v1512 = vld [vmem:[%s1492 + $0x4c] sm:$0xf]
        %v1513 = vld [vmem:[%s1492 + $0x50] sm:$0xf]
        %v1514 = vld [vmem:[%s1492 + $0x54] sm:$0xf]
        %v1515 = vld [vmem:[%s1492 + $0x58] sm:$0xf]
        %v1516 = vld [vmem:[%s1492 + $0x5c] sm:$0xf]
        %v1517 = vld [vmem:[%s1492 + $0x60] sm:$0xf]
        %v1518 = vld [vmem:[%s1492 + $0x64] sm:$0xf]
        %v1519 = vld [vmem:[%s1492 + $0x68] sm:$0xf]
        %v1520 = vld [vmem:[%s1492 + $0x6c] sm:$0xf]
        %v1521 = vld [vmem:[%s1492 + $0x70] sm:$0xf]
        %v1522 = vld [vmem:[%s1492 + $0x74] sm:$0xf]
        %v1523 = vld [vmem:[%s1492 + $0x78] sm:$0xf]
        %v1524 = vld [vmem:[%s1492 + $0x7c] sm:$0xf]
        %v1557 = vunpack.c.l.b16 %v1493
        %v1558 = vunpack.c.l.b16 %v1494
        %v1559 = vunpack.c.l.b16 %v1495
        %v1560 = vunpack.c.l.b16 %v1496
        %v1561 = vunpack.c.l.b16 %v1497
        %v1562 = vunpack.c.l.b16 %v1498
        %v1563 = vunpack.c.l.b16 %v1499
        %v1564 = vunpack.c.l.b16 %v1500
        %v1565 = vunpack.c.l.b16 %v1501
        %v1566 = vunpack.c.l.b16 %v1502
        %v1567 = vunpack.c.l.b16 %v1503
        %v1568 = vunpack.c.l.b16 %v1504
        %v1569 = vunpack.c.l.b16 %v1505
        %v1570 = vunpack.c.l.b16 %v1506
        %v1571 = vunpack.c.l.b16 %v1507
        %v1572 = vunpack.c.l.b16 %v1508
        %v1573 = vunpack.c.l.b16 %v1509
        %v1574 = vunpack.c.l.b16 %v1510
        %v1575 = vunpack.c.l.b16 %v1511
        %v1576 = vunpack.c.l.b16 %v1512
        %v1577 = vunpack.c.l.b16 %v1513
        %v1578 = vunpack.c.l.b16 %v1514
        %v1579 = vunpack.c.l.b16 %v1515
        %v1580 = vunpack.c.l.b16 %v1516
        %v1581 = vunpack.c.l.b16 %v1517
        %v1582 = vunpack.c.l.b16 %v1518
        %v1583 = vunpack.c.l.b16 %v1519
        %v1584 = vunpack.c.l.b16 %v1520
        %v1585 = vunpack.c.l.b16 %v1521
        %v1586 = vunpack.c.l.b16 %v1522
        %v1587 = vunpack.c.l.b16 %v1523
        %v1588 = vunpack.c.l.b16 %v1524
        %v1589 = vpack.c.b16 %v1558, %v1557
        %v1590 = vpack.c.b16 %v1560, %v1559
        %v1591 = vpack.c.b16 %v1562, %v1561
        %v1592 = vpack.c.b16 %v1564, %v1563
        %v1593 = vpack.c.b16 %v1566, %v1565
        %v1594 = vpack.c.b16 %v1568, %v1567
        %v1595 = vpack.c.b16 %v1570, %v1569
        %v1596 = vpack.c.b16 %v1572, %v1571
        %v1597 = vpack.c.b16 %v1574, %v1573
        %v1598 = vpack.c.b16 %v1576, %v1575
        %v1599 = vpack.c.b16 %v1578, %v1577
        %v1600 = vpack.c.b16 %v1580, %v1579
        %v1601 = vpack.c.b16 %v1582, %v1581
        %v1602 = vpack.c.b16 %v1584, %v1583
        %v1603 = vpack.c.b16 %v1586, %v1585
        %v1604 = vpack.c.b16 %v1588, %v1587
        %1621 = vmatprep.subr.bf16.mxu0 0
        %1622 = vmatpush1.bf16.msra.mxu0 %v1596
        %1623 = vmatprep.subr.bf16.mxu0 0
        %1624 = vmatpush1.bf16.msra.mxu0 %v1595
        %1625 = vmatprep.subr.bf16.mxu0 0
        %1626 = vmatpush1.bf16.msra.mxu0 %v1594
        %1627 = vmatprep.subr.bf16.mxu0 0
        %1628 = vmatpush1.bf16.msra.mxu0 %v1593
        %1629 = vmatprep.subr.bf16.mxu0 0
        %1630 = vmatpush1.bf16.msra.mxu0 %v1592
        %1631 = vmatprep.subr.bf16.mxu0 0
        %1632 = vmatpush1.bf16.msra.mxu0 %v1591
        %1633 = vmatprep.subr.bf16.mxu0 0
        %1634 = vmatpush1.bf16.msra.mxu0 %v1590
        %1635 = vmatprep.subr.bf16.mxu0 0
        %1636 = vmatpush1.bf16.msra.mxu0 %v1589
        %1637 = vmatprep.subr.bf16.mxu0 0
        %1638 = vmatpush2.bf16.msra.mxu0 %v1604
        %1639 = vmatprep.subr.bf16.mxu0 0
        %1640 = vmatpush2.bf16.msra.mxu0 %v1603
        %1641 = vmatprep.subr.bf16.mxu0 0
        %1642 = vmatpush2.bf16.msra.mxu0 %v1602
        %1643 = vmatprep.subr.bf16.mxu0 0
        %1644 = vmatpush2.bf16.msra.mxu0 %v1601
        %1645 = vmatprep.subr.bf16.mxu0 0
        %1646 = vmatpush2.bf16.msra.mxu0 %v1600
        %1647 = vmatprep.subr.bf16.mxu0 0
        %1648 = vmatpush2.bf16.msra.mxu0 %v1599
        %1649 = vmatprep.subr.bf16.mxu0 0
        %1650 = vmatpush2.bf16.msra.mxu0 %v1598
        %1651 = vmatprep.subr.bf16.mxu0 0
        %1652 = vmatpush2.bf16.msra.mxu0 %v1597
        %1653 = vmatprep.mubr.bf16.mxu0 %v390
        %1654 = vmatmul.mubr.bf16.gmra.mxu0 %v389
        %v1655 = vpop.f32.mrf.mxu0
        %v1656 = vadd.f32 0.0, %v1655
        %v1657 = vpop.f32.mrf.mxu0
        %v1658 = vpop.f32.mrf.mxu0
        %v1659 = vpop.f32.mrf.mxu0
        %1660 = vdwg.mxu0
        %v1661 = vpack.c.bf16 %v1656, %v1656
        %s1662 = scalar_lea.vmem %s1, 40
        %v1663 = vld [vmem:[%s1662] sm:$0xf]
        %v1664 = vld [vmem:[%s1662 + $0x4] sm:$0xf]
        %v1667 = vunpack.c.l.b16 %v1663
        %v1668 = vunpack.c.l.b16 %v1664
        %v1669 = vpack.c.b16 %v1668, %v1667
        %v1671 = vsel %vm710, %v1669, 0
        %v1674 = vsel %vm714, %v1661, 0
        %1676 = vmatprep.subr.bf16.mxu0 0
        %1677 = vmatpush1.bf16.msra.mxu0 0
        %1678 = vmatprep.subr.bf16.mxu0 0
        %1679 = vmatpush1.bf16.msra.mxu0 0
        %1680 = vmatprep.subr.bf16.mxu0 0
        %1681 = vmatpush1.bf16.msra.mxu0 0
        %1682 = vmatprep.subr.bf16.mxu0 0
        %1683 = vmatpush1.bf16.msra.mxu0 0
        %1684 = vmatprep.subr.bf16.mxu0 0
        %1685 = vmatpush1.bf16.msra.mxu0 0
        %1686 = vmatprep.subr.bf16.mxu0 0
        %1687 = vmatpush1.bf16.msra.mxu0 0
        %1688 = vmatprep.subr.bf16.mxu0 0
        %1689 = vmatpush1.bf16.msra.mxu0 0
        %1690 = vmatprep.subr.bf16.mxu0 0
        %1691 = vmatpush1.bf16.msra.mxu0 %v1674
        %1692 = vmatprep.subr.bf16.mxu0 0
        %1693 = vmatpush2.bf16.msra.mxu0 0
        %1694 = vmatprep.subr.bf16.mxu0 0
        %1695 = vmatpush2.bf16.msra.mxu0 0
        %1696 = vmatprep.subr.bf16.mxu0 0
        %1697 = vmatpush2.bf16.msra.mxu0 0
        %1698 = vmatprep.subr.bf16.mxu0 0
        %1699 = vmatpush2.bf16.msra.mxu0 0
        %1700 = vmatprep.subr.bf16.mxu0 0
        %1701 = vmatpush2.bf16.msra.mxu0 0
        %1702 = vmatprep.subr.bf16.mxu0 0
        %1703 = vmatpush2.bf16.msra.mxu0 0
        %1704 = vmatprep.subr.bf16.mxu0 0
        %1705 = vmatpush2.bf16.msra.mxu0 0
        %1706 = vmatprep.subr.bf16.mxu0 0
        %1707 = vmatpush2.bf16.msra.mxu0 0
        %1708 = vmatprep.mubr.bf16.mxu0 0
        %1709 = vmatmul.mubr.bf16.gmra.mxu0 %v1671
        %v1710 = vpop.f32.mrf.mxu0
        %v1711 = vadd.f32 0.0, %v1710
        %v1712 = vpop.f32.mrf.mxu0
        %v1713 = vpop.f32.mrf.mxu0
        %v1714 = vadd.f32 0.0, %v1713
        %v1715 = vpop.f32.mrf.mxu0
        %1716 = vdwg.mxu0
        %v1717 = vadd.f32 %v1490, %v1711
        %v1718 = vadd.f32 %v1491, %v1714
        %s1719 = scalar_lea.vmem [#allocation2], 768
        %v1720 = vld [vmem:[%s1719] sm:$0xf]
        %v1721 = vld [vmem:[%s1719 + $0x4] sm:$0xf]
        %v1722 = vld [vmem:[%s1719 + $0x8] sm:$0xf]
        %v1723 = vld [vmem:[%s1719 + $0xc] sm:$0xf]
        %v1724 = vld [vmem:[%s1719 + $0x10] sm:$0xf]
        %v1725 = vld [vmem:[%s1719 + $0x14] sm:$0xf]
        %v1726 = vld [vmem:[%s1719 + $0x18] sm:$0xf]
        %v1727 = vld [vmem:[%s1719 + $0x1c] sm:$0xf]
        %v1728 = vld [vmem:[%s1719 + $0x20] sm:$0xf]
        %v1729 = vld [vmem:[%s1719 + $0x24] sm:$0xf]
        %v1730 = vld [vmem:[%s1719 + $0x28] sm:$0xf]
        %v1731 = vld [vmem:[%s1719 + $0x2c] sm:$0xf]
        %v1732 = vld [vmem:[%s1719 + $0x30] sm:$0xf]
        %v1733 = vld [vmem:[%s1719 + $0x34] sm:$0xf]
        %v1734 = vld [vmem:[%s1719 + $0x38] sm:$0xf]
        %v1735 = vld [vmem:[%s1719 + $0x3c] sm:$0xf]
        %v1736 = vld [vmem:[%s1719 + $0x40] sm:$0xf]
        %v1737 = vld [vmem:[%s1719 + $0x44] sm:$0xf]
        %v1738 = vld [vmem:[%s1719 + $0x48] sm:$0xf]
        %v1739 = vld [vmem:[%s1719 + $0x4c] sm:$0xf]
        %v1740 = vld [vmem:[%s1719 + $0x50] sm:$0xf]
        %v1741 = vld [vmem:[%s1719 + $0x54] sm:$0xf]
        %v1742 = vld [vmem:[%s1719 + $0x58] sm:$0xf]
        %v1743 = vld [vmem:[%s1719 + $0x5c] sm:$0xf]
        %v1744 = vld [vmem:[%s1719 + $0x60] sm:$0xf]
        %v1745 = vld [vmem:[%s1719 + $0x64] sm:$0xf]
        %v1746 = vld [vmem:[%s1719 + $0x68] sm:$0xf]
        %v1747 = vld [vmem:[%s1719 + $0x6c] sm:$0xf]
        %v1748 = vld [vmem:[%s1719 + $0x70] sm:$0xf]
        %v1749 = vld [vmem:[%s1719 + $0x74] sm:$0xf]
        %v1750 = vld [vmem:[%s1719 + $0x78] sm:$0xf]
        %v1751 = vld [vmem:[%s1719 + $0x7c] sm:$0xf]
        %v1784 = vunpack.c.l.b16 %v1720
        %v1785 = vunpack.c.l.b16 %v1721
        %v1786 = vunpack.c.l.b16 %v1722
        %v1787 = vunpack.c.l.b16 %v1723
        %v1788 = vunpack.c.l.b16 %v1724
        %v1789 = vunpack.c.l.b16 %v1725
        %v1790 = vunpack.c.l.b16 %v1726
        %v1791 = vunpack.c.l.b16 %v1727
        %v1792 = vunpack.c.l.b16 %v1728
        %v1793 = vunpack.c.l.b16 %v1729
        %v1794 = vunpack.c.l.b16 %v1730
        %v1795 = vunpack.c.l.b16 %v1731
        %v1796 = vunpack.c.l.b16 %v1732
        %v1797 = vunpack.c.l.b16 %v1733
        %v1798 = vunpack.c.l.b16 %v1734
        %v1799 = vunpack.c.l.b16 %v1735
        %v1800 = vunpack.c.l.b16 %v1736
        %v1801 = vunpack.c.l.b16 %v1737
        %v1802 = vunpack.c.l.b16 %v1738
        %v1803 = vunpack.c.l.b16 %v1739
        %v1804 = vunpack.c.l.b16 %v1740
        %v1805 = vunpack.c.l.b16 %v1741
        %v1806 = vunpack.c.l.b16 %v1742
        %v1807 = vunpack.c.l.b16 %v1743
        %v1808 = vunpack.c.l.b16 %v1744
        %v1809 = vunpack.c.l.b16 %v1745
        %v1810 = vunpack.c.l.b16 %v1746
        %v1811 = vunpack.c.l.b16 %v1747
        %v1812 = vunpack.c.l.b16 %v1748
        %v1813 = vunpack.c.l.b16 %v1749
        %v1814 = vunpack.c.l.b16 %v1750
        %v1815 = vunpack.c.l.b16 %v1751
        %v1816 = vpack.c.b16 %v1785, %v1784
        %v1817 = vpack.c.b16 %v1787, %v1786
        %v1818 = vpack.c.b16 %v1789, %v1788
        %v1819 = vpack.c.b16 %v1791, %v1790
        %v1820 = vpack.c.b16 %v1793, %v1792
        %v1821 = vpack.c.b16 %v1795, %v1794
        %v1822 = vpack.c.b16 %v1797, %v1796
        %v1823 = vpack.c.b16 %v1799, %v1798
        %v1824 = vpack.c.b16 %v1801, %v1800
        %v1825 = vpack.c.b16 %v1803, %v1802
        %v1826 = vpack.c.b16 %v1805, %v1804
        %v1827 = vpack.c.b16 %v1807, %v1806
        %v1828 = vpack.c.b16 %v1809, %v1808
        %v1829 = vpack.c.b16 %v1811, %v1810
        %v1830 = vpack.c.b16 %v1813, %v1812
        %v1831 = vpack.c.b16 %v1815, %v1814
        %1848 = vmatprep.subr.bf16.mxu0 0
        %1849 = vmatpush1.bf16.msra.mxu0 %v1823
        %1850 = vmatprep.subr.bf16.mxu0 0
        %1851 = vmatpush1.bf16.msra.mxu0 %v1822
        %1852 = vmatprep.subr.bf16.mxu0 0
        %1853 = vmatpush1.bf16.msra.mxu0 %v1821
        %1854 = vmatprep.subr.bf16.mxu0 0
        %1855 = vmatpush1.bf16.msra.mxu0 %v1820
        %1856 = vmatprep.subr.bf16.mxu0 0
        %1857 = vmatpush1.bf16.msra.mxu0 %v1819
        %1858 = vmatprep.subr.bf16.mxu0 0
        %1859 = vmatpush1.bf16.msra.mxu0 %v1818
        %1860 = vmatprep.subr.bf16.mxu0 0
        %1861 = vmatpush1.bf16.msra.mxu0 %v1817
        %1862 = vmatprep.subr.bf16.mxu0 0
        %1863 = vmatpush1.bf16.msra.mxu0 %v1816
        %1864 = vmatprep.subr.bf16.mxu0 0
        %1865 = vmatpush2.bf16.msra.mxu0 %v1831
        %1866 = vmatprep.subr.bf16.mxu0 0
        %1867 = vmatpush2.bf16.msra.mxu0 %v1830
        %1868 = vmatprep.subr.bf16.mxu0 0
        %1869 = vmatpush2.bf16.msra.mxu0 %v1829
        %1870 = vmatprep.subr.bf16.mxu0 0
        %1871 = vmatpush2.bf16.msra.mxu0 %v1828
        %1872 = vmatprep.subr.bf16.mxu0 0
        %1873 = vmatpush2.bf16.msra.mxu0 %v1827
        %1874 = vmatprep.subr.bf16.mxu0 0
        %1875 = vmatpush2.bf16.msra.mxu0 %v1826
        %1876 = vmatprep.subr.bf16.mxu0 0
        %1877 = vmatpush2.bf16.msra.mxu0 %v1825
        %1878 = vmatprep.subr.bf16.mxu0 0
        %1879 = vmatpush2.bf16.msra.mxu0 %v1824
        %1880 = vmatprep.mubr.bf16.mxu0 %v390
        %1881 = vmatmul.mubr.bf16.gmra.mxu0 %v389
        %v1882 = vpop.f32.mrf.mxu0
        %v1883 = vadd.f32 0.0, %v1882
        %v1884 = vpop.f32.mrf.mxu0
        %v1885 = vpop.f32.mrf.mxu0
        %v1886 = vpop.f32.mrf.mxu0
        %1887 = vdwg.mxu0
        %v1888 = vpack.c.bf16 %v1883, %v1883
        %s1889 = scalar_lea.vmem %s1, 48
        %v1890 = vld [vmem:[%s1889] sm:$0xf]
        %v1891 = vld [vmem:[%s1889 + $0x4] sm:$0xf]
        %v1894 = vunpack.c.l.b16 %v1890
        %v1895 = vunpack.c.l.b16 %v1891
        %v1896 = vpack.c.b16 %v1895, %v1894
        %v1898 = vsel %vm710, %v1896, 0
        %v1901 = vsel %vm714, %v1888, 0
        %1903 = vmatprep.subr.bf16.mxu0 0
        %1904 = vmatpush1.bf16.msra.mxu0 0
        %1905 = vmatprep.subr.bf16.mxu0 0
        %1906 = vmatpush1.bf16.msra.mxu0 0
        %1907 = vmatprep.subr.bf16.mxu0 0
        %1908 = vmatpush1.bf16.msra.mxu0 0
        %1909 = vmatprep.subr.bf16.mxu0 0
        %1910 = vmatpush1.bf16.msra.mxu0 0
        %1911 = vmatprep.subr.bf16.mxu0 0
        %1912 = vmatpush1.bf16.msra.mxu0 0
        %1913 = vmatprep.subr.bf16.mxu0 0
        %1914 = vmatpush1.bf16.msra.mxu0 0
        %1915 = vmatprep.subr.bf16.mxu0 0
        %1916 = vmatpush1.bf16.msra.mxu0 0
        %1917 = vmatprep.subr.bf16.mxu0 0
        %1918 = vmatpush1.bf16.msra.mxu0 %v1901
        %1919 = vmatprep.subr.bf16.mxu0 0
        %1920 = vmatpush2.bf16.msra.mxu0 0
        %1921 = vmatprep.subr.bf16.mxu0 0
        %1922 = vmatpush2.bf16.msra.mxu0 0
        %1923 = vmatprep.subr.bf16.mxu0 0
        %1924 = vmatpush2.bf16.msra.mxu0 0
        %1925 = vmatprep.subr.bf16.mxu0 0
        %1926 = vmatpush2.bf16.msra.mxu0 0
        %1927 = vmatprep.subr.bf16.mxu0 0
        %1928 = vmatpush2.bf16.msra.mxu0 0
        %1929 = vmatprep.subr.bf16.mxu0 0
        %1930 = vmatpush2.bf16.msra.mxu0 0
        %1931 = vmatprep.subr.bf16.mxu0 0
        %1932 = vmatpush2.bf16.msra.mxu0 0
        %1933 = vmatprep.subr.bf16.mxu0 0
        %1934 = vmatpush2.bf16.msra.mxu0 0
        %1935 = vmatprep.mubr.bf16.mxu0 0
        %1936 = vmatmul.mubr.bf16.gmra.mxu0 %v1898
        %v1937 = vpop.f32.mrf.mxu0
        %v1938 = vadd.f32 0.0, %v1937
        %v1939 = vpop.f32.mrf.mxu0
        %v1940 = vpop.f32.mrf.mxu0
        %v1941 = vadd.f32 0.0, %v1940
        %v1942 = vpop.f32.mrf.mxu0
        %1943 = vdwg.mxu0
        %v1944 = vadd.f32 %v1717, %v1938
        %v1945 = vadd.f32 %v1718, %v1941
        %s1946 = scalar_lea.vmem [#allocation2], 896
        %v1947 = vld [vmem:[%s1946] sm:$0xf]
        %v1948 = vld [vmem:[%s1946 + $0x4] sm:$0xf]
        %v1949 = vld [vmem:[%s1946 + $0x8] sm:$0xf]
        %v1950 = vld [vmem:[%s1946 + $0xc] sm:$0xf]
        %v1951 = vld [vmem:[%s1946 + $0x10] sm:$0xf]
        %v1952 = vld [vmem:[%s1946 + $0x14] sm:$0xf]
        %v1953 = vld [vmem:[%s1946 + $0x18] sm:$0xf]
        %v1954 = vld [vmem:[%s1946 + $0x1c] sm:$0xf]
        %v1955 = vld [vmem:[%s1946 + $0x20] sm:$0xf]
        %v1956 = vld [vmem:[%s1946 + $0x24] sm:$0xf]
        %v1957 = vld [vmem:[%s1946 + $0x28] sm:$0xf]
        %v1958 = vld [vmem:[%s1946 + $0x2c] sm:$0xf]
        %v1959 = vld [vmem:[%s1946 + $0x30] sm:$0xf]
        %v1960 = vld [vmem:[%s1946 + $0x34] sm:$0xf]
        %v1961 = vld [vmem:[%s1946 + $0x38] sm:$0xf]
        %v1962 = vld [vmem:[%s1946 + $0x3c] sm:$0xf]
        %v1963 = vld [vmem:[%s1946 + $0x40] sm:$0xf]
        %v1964 = vld [vmem:[%s1946 + $0x44] sm:$0xf]
        %v1965 = vld [vmem:[%s1946 + $0x48] sm:$0xf]
        %v1966 = vld [vmem:[%s1946 + $0x4c] sm:$0xf]
        %v1967 = vld [vmem:[%s1946 + $0x50] sm:$0xf]
        %v1968 = vld [vmem:[%s1946 + $0x54] sm:$0xf]
        %v1969 = vld [vmem:[%s1946 + $0x58] sm:$0xf]
        %v1970 = vld [vmem:[%s1946 + $0x5c] sm:$0xf]
        %v1971 = vld [vmem:[%s1946 + $0x60] sm:$0xf]
        %v1972 = vld [vmem:[%s1946 + $0x64] sm:$0xf]
        %v1973 = vld [vmem:[%s1946 + $0x68] sm:$0xf]
        %v1974 = vld [vmem:[%s1946 + $0x6c] sm:$0xf]
        %v1975 = vld [vmem:[%s1946 + $0x70] sm:$0xf]
        %v1976 = vld [vmem:[%s1946 + $0x74] sm:$0xf]
        %v1977 = vld [vmem:[%s1946 + $0x78] sm:$0xf]
        %v1978 = vld [vmem:[%s1946 + $0x7c] sm:$0xf]
        %v2011 = vunpack.c.l.b16 %v1947
        %v2012 = vunpack.c.l.b16 %v1948
        %v2013 = vunpack.c.l.b16 %v1949
        %v2014 = vunpack.c.l.b16 %v1950
        %v2015 = vunpack.c.l.b16 %v1951
        %v2016 = vunpack.c.l.b16 %v1952
        %v2017 = vunpack.c.l.b16 %v1953
        %v2018 = vunpack.c.l.b16 %v1954
        %v2019 = vunpack.c.l.b16 %v1955
        %v2020 = vunpack.c.l.b16 %v1956
        %v2021 = vunpack.c.l.b16 %v1957
        %v2022 = vunpack.c.l.b16 %v1958
        %v2023 = vunpack.c.l.b16 %v1959
        %v2024 = vunpack.c.l.b16 %v1960
        %v2025 = vunpack.c.l.b16 %v1961
        %v2026 = vunpack.c.l.b16 %v1962
        %v2027 = vunpack.c.l.b16 %v1963
        %v2028 = vunpack.c.l.b16 %v1964
        %v2029 = vunpack.c.l.b16 %v1965
        %v2030 = vunpack.c.l.b16 %v1966
        %v2031 = vunpack.c.l.b16 %v1967
        %v2032 = vunpack.c.l.b16 %v1968
        %v2033 = vunpack.c.l.b16 %v1969
        %v2034 = vunpack.c.l.b16 %v1970
        %v2035 = vunpack.c.l.b16 %v1971
        %v2036 = vunpack.c.l.b16 %v1972
        %v2037 = vunpack.c.l.b16 %v1973
        %v2038 = vunpack.c.l.b16 %v1974
        %v2039 = vunpack.c.l.b16 %v1975
        %v2040 = vunpack.c.l.b16 %v1976
        %v2041 = vunpack.c.l.b16 %v1977
        %v2042 = vunpack.c.l.b16 %v1978
        %v2043 = vpack.c.b16 %v2012, %v2011
        %v2044 = vpack.c.b16 %v2014, %v2013
        %v2045 = vpack.c.b16 %v2016, %v2015
        %v2046 = vpack.c.b16 %v2018, %v2017
        %v2047 = vpack.c.b16 %v2020, %v2019
        %v2048 = vpack.c.b16 %v2022, %v2021
        %v2049 = vpack.c.b16 %v2024, %v2023
        %v2050 = vpack.c.b16 %v2026, %v2025
        %v2051 = vpack.c.b16 %v2028, %v2027
        %v2052 = vpack.c.b16 %v2030, %v2029
        %v2053 = vpack.c.b16 %v2032, %v2031
        %v2054 = vpack.c.b16 %v2034, %v2033
        %v2055 = vpack.c.b16 %v2036, %v2035
        %v2056 = vpack.c.b16 %v2038, %v2037
        %v2057 = vpack.c.b16 %v2040, %v2039
        %v2058 = vpack.c.b16 %v2042, %v2041
        %2075 = vmatprep.subr.bf16.mxu0 0
        %2076 = vmatpush1.bf16.msra.mxu0 %v2050
        %2077 = vmatprep.subr.bf16.mxu0 0
        %2078 = vmatpush1.bf16.msra.mxu0 %v2049
        %2079 = vmatprep.subr.bf16.mxu0 0
        %2080 = vmatpush1.bf16.msra.mxu0 %v2048
        %2081 = vmatprep.subr.bf16.mxu0 0
        %2082 = vmatpush1.bf16.msra.mxu0 %v2047
        %2083 = vmatprep.subr.bf16.mxu0 0
        %2084 = vmatpush1.bf16.msra.mxu0 %v2046
        %2085 = vmatprep.subr.bf16.mxu0 0
        %2086 = vmatpush1.bf16.msra.mxu0 %v2045
        %2087 = vmatprep.subr.bf16.mxu0 0
        %2088 = vmatpush1.bf16.msra.mxu0 %v2044
        %2089 = vmatprep.subr.bf16.mxu0 0
        %2090 = vmatpush1.bf16.msra.mxu0 %v2043
        %2091 = vmatprep.subr.bf16.mxu0 0
        %2092 = vmatpush2.bf16.msra.mxu0 %v2058
        %2093 = vmatprep.subr.bf16.mxu0 0
        %2094 = vmatpush2.bf16.msra.mxu0 %v2057
        %2095 = vmatprep.subr.bf16.mxu0 0
        %2096 = vmatpush2.bf16.msra.mxu0 %v2056
        %2097 = vmatprep.subr.bf16.mxu0 0
        %2098 = vmatpush2.bf16.msra.mxu0 %v2055
        %2099 = vmatprep.subr.bf16.mxu0 0
        %2100 = vmatpush2.bf16.msra.mxu0 %v2054
        %2101 = vmatprep.subr.bf16.mxu0 0
        %2102 = vmatpush2.bf16.msra.mxu0 %v2053
        %2103 = vmatprep.subr.bf16.mxu0 0
        %2104 = vmatpush2.bf16.msra.mxu0 %v2052
        %2105 = vmatprep.subr.bf16.mxu0 0
        %2106 = vmatpush2.bf16.msra.mxu0 %v2051
        %2107 = vmatprep.mubr.bf16.mxu0 %v390
        %2108 = vmatmul.mubr.bf16.gmra.mxu0 %v389
        %v2109 = vpop.f32.mrf.mxu0
        %v2110 = vadd.f32 0.0, %v2109
        %v2111 = vpop.f32.mrf.mxu0
        %v2112 = vpop.f32.mrf.mxu0
        %v2113 = vpop.f32.mrf.mxu0
        %2114 = vdwg.mxu0
        %v2115 = vpack.c.bf16 %v2110, %v2110
        %s2116 = scalar_lea.vmem %s1, 56
        %v2117 = vld [vmem:[%s2116] sm:$0xf]
        %v2118 = vld [vmem:[%s2116 + $0x4] sm:$0xf]
        %v2121 = vunpack.c.l.b16 %v2117
        %v2122 = vunpack.c.l.b16 %v2118
        %v2123 = vpack.c.b16 %v2122, %v2121
        %v2125 = vsel %vm710, %v2123, 0
        %v2128 = vsel %vm714, %v2115, 0
        %2130 = vmatprep.subr.bf16.mxu0 0
        %2131 = vmatpush1.bf16.msra.mxu0 0
        %2132 = vmatprep.subr.bf16.mxu0 0
        %2133 = vmatpush1.bf16.msra.mxu0 0
        %2134 = vmatprep.subr.bf16.mxu0 0
        %2135 = vmatpush1.bf16.msra.mxu0 0
        %2136 = vmatprep.subr.bf16.mxu0 0
        %2137 = vmatpush1.bf16.msra.mxu0 0
        %2138 = vmatprep.subr.bf16.mxu0 0
        %2139 = vmatpush1.bf16.msra.mxu0 0
        %2140 = vmatprep.subr.bf16.mxu0 0
        %2141 = vmatpush1.bf16.msra.mxu0 0
        %2142 = vmatprep.subr.bf16.mxu0 0
        %2143 = vmatpush1.bf16.msra.mxu0 0
        %2144 = vmatprep.subr.bf16.mxu0 0
        %2145 = vmatpush1.bf16.msra.mxu0 %v2128
        %2146 = vmatprep.subr.bf16.mxu0 0
        %2147 = vmatpush2.bf16.msra.mxu0 0
        %2148 = vmatprep.subr.bf16.mxu0 0
        %2149 = vmatpush2.bf16.msra.mxu0 0
        %2150 = vmatprep.subr.bf16.mxu0 0
        %2151 = vmatpush2.bf16.msra.mxu0 0
        %2152 = vmatprep.subr.bf16.mxu0 0
        %2153 = vmatpush2.bf16.msra.mxu0 0
        %2154 = vmatprep.subr.bf16.mxu0 0
        %2155 = vmatpush2.bf16.msra.mxu0 0
        %2156 = vmatprep.subr.bf16.mxu0 0
        %2157 = vmatpush2.bf16.msra.mxu0 0
        %2158 = vmatprep.subr.bf16.mxu0 0
        %2159 = vmatpush2.bf16.msra.mxu0 0
        %2160 = vmatprep.subr.bf16.mxu0 0
        %2161 = vmatpush2.bf16.msra.mxu0 0
        %2162 = vmatprep.mubr.bf16.mxu0 0
        %2163 = vmatmul.mubr.bf16.gmra.mxu0 %v2125
        %v2164 = vpop.f32.mrf.mxu0
        %v2165 = vadd.f32 0.0, %v2164
        %v2166 = vpop.f32.mrf.mxu0
        %v2167 = vpop.f32.mrf.mxu0
        %v2168 = vadd.f32 0.0, %v2167
        %v2169 = vpop.f32.mrf.mxu0
        %2170 = vdwg.mxu0
        %v2171 = vadd.f32 %v1944, %v2165
        %v2172 = vadd.f32 %v1945, %v2168
        %s2173 = scalar_lea.vmem [#allocation2], 1024
        %v2174 = vld [vmem:[%s2173] sm:$0xf]
        %v2175 = vld [vmem:[%s2173 + $0x4] sm:$0xf]
        %v2176 = vld [vmem:[%s2173 + $0x8] sm:$0xf]
        %v2177 = vld [vmem:[%s2173 + $0xc] sm:$0xf]
        %v2178 = vld [vmem:[%s2173 + $0x10] sm:$0xf]
        %v2179 = vld [vmem:[%s2173 + $0x14] sm:$0xf]
        %v2180 = vld [vmem:[%s2173 + $0x18] sm:$0xf]
        %v2181 = vld [vmem:[%s2173 + $0x1c] sm:$0xf]
        %v2182 = vld [vmem:[%s2173 + $0x20] sm:$0xf]
        %v2183 = vld [vmem:[%s2173 + $0x24] sm:$0xf]
        %v2184 = vld [vmem:[%s2173 + $0x28] sm:$0xf]
        %v2185 = vld [vmem:[%s2173 + $0x2c] sm:$0xf]
        %v2186 = vld [vmem:[%s2173 + $0x30] sm:$0xf]
        %v2187 = vld [vmem:[%s2173 + $0x34] sm:$0xf]
        %v2188 = vld [vmem:[%s2173 + $0x38] sm:$0xf]
        %v2189 = vld [vmem:[%s2173 + $0x3c] sm:$0xf]
        %v2190 = vld [vmem:[%s2173 + $0x40] sm:$0xf]
        %v2191 = vld [vmem:[%s2173 + $0x44] sm:$0xf]
        %v2192 = vld [vmem:[%s2173 + $0x48] sm:$0xf]
        %v2193 = vld [vmem:[%s2173 + $0x4c] sm:$0xf]
        %v2194 = vld [vmem:[%s2173 + $0x50] sm:$0xf]
        %v2195 = vld [vmem:[%s2173 + $0x54] sm:$0xf]
        %v2196 = vld [vmem:[%s2173 + $0x58] sm:$0xf]
        %v2197 = vld [vmem:[%s2173 + $0x5c] sm:$0xf]
        %v2198 = vld [vmem:[%s2173 + $0x60] sm:$0xf]
        %v2199 = vld [vmem:[%s2173 + $0x64] sm:$0xf]
        %v2200 = vld [vmem:[%s2173 + $0x68] sm:$0xf]
        %v2201 = vld [vmem:[%s2173 + $0x6c] sm:$0xf]
        %v2202 = vld [vmem:[%s2173 + $0x70] sm:$0xf]
        %v2203 = vld [vmem:[%s2173 + $0x74] sm:$0xf]
        %v2204 = vld [vmem:[%s2173 + $0x78] sm:$0xf]
        %v2205 = vld [vmem:[%s2173 + $0x7c] sm:$0xf]
        %v2238 = vunpack.c.l.b16 %v2174
        %v2239 = vunpack.c.l.b16 %v2175
        %v2240 = vunpack.c.l.b16 %v2176
        %v2241 = vunpack.c.l.b16 %v2177
        %v2242 = vunpack.c.l.b16 %v2178
        %v2243 = vunpack.c.l.b16 %v2179
        %v2244 = vunpack.c.l.b16 %v2180
        %v2245 = vunpack.c.l.b16 %v2181
        %v2246 = vunpack.c.l.b16 %v2182
        %v2247 = vunpack.c.l.b16 %v2183
        %v2248 = vunpack.c.l.b16 %v2184
        %v2249 = vunpack.c.l.b16 %v2185
        %v2250 = vunpack.c.l.b16 %v2186
        %v2251 = vunpack.c.l.b16 %v2187
        %v2252 = vunpack.c.l.b16 %v2188
        %v2253 = vunpack.c.l.b16 %v2189
        %v2254 = vunpack.c.l.b16 %v2190
        %v2255 = vunpack.c.l.b16 %v2191
        %v2256 = vunpack.c.l.b16 %v2192
        %v2257 = vunpack.c.l.b16 %v2193
        %v2258 = vunpack.c.l.b16 %v2194
        %v2259 = vunpack.c.l.b16 %v2195
        %v2260 = vunpack.c.l.b16 %v2196
        %v2261 = vunpack.c.l.b16 %v2197
        %v2262 = vunpack.c.l.b16 %v2198
        %v2263 = vunpack.c.l.b16 %v2199
        %v2264 = vunpack.c.l.b16 %v2200
        %v2265 = vunpack.c.l.b16 %v2201
        %v2266 = vunpack.c.l.b16 %v2202
        %v2267 = vunpack.c.l.b16 %v2203
        %v2268 = vunpack.c.l.b16 %v2204
        %v2269 = vunpack.c.l.b16 %v2205
        %v2270 = vpack.c.b16 %v2239, %v2238
        %v2271 = vpack.c.b16 %v2241, %v2240
        %v2272 = vpack.c.b16 %v2243, %v2242
        %v2273 = vpack.c.b16 %v2245, %v2244
        %v2274 = vpack.c.b16 %v2247, %v2246
        %v2275 = vpack.c.b16 %v2249, %v2248
        %v2276 = vpack.c.b16 %v2251, %v2250
        %v2277 = vpack.c.b16 %v2253, %v2252
        %v2278 = vpack.c.b16 %v2255, %v2254
        %v2279 = vpack.c.b16 %v2257, %v2256
        %v2280 = vpack.c.b16 %v2259, %v2258
        %v2281 = vpack.c.b16 %v2261, %v2260
        %v2282 = vpack.c.b16 %v2263, %v2262
        %v2283 = vpack.c.b16 %v2265, %v2264
        %v2284 = vpack.c.b16 %v2267, %v2266
        %v2285 = vpack.c.b16 %v2269, %v2268
        %2302 = vmatprep.subr.bf16.mxu0 0
        %2303 = vmatpush1.bf16.msra.mxu0 %v2277
        %2304 = vmatprep.subr.bf16.mxu0 0
        %2305 = vmatpush1.bf16.msra.mxu0 %v2276
        %2306 = vmatprep.subr.bf16.mxu0 0
        %2307 = vmatpush1.bf16.msra.mxu0 %v2275
        %2308 = vmatprep.subr.bf16.mxu0 0
        %2309 = vmatpush1.bf16.msra.mxu0 %v2274
        %2310 = vmatprep.subr.bf16.mxu0 0
        %2311 = vmatpush1.bf16.msra.mxu0 %v2273
        %2312 = vmatprep.subr.bf16.mxu0 0
        %2313 = vmatpush1.bf16.msra.mxu0 %v2272
        %2314 = vmatprep.subr.bf16.mxu0 0
        %2315 = vmatpush1.bf16.msra.mxu0 %v2271
        %2316 = vmatprep.subr.bf16.mxu0 0
        %2317 = vmatpush1.bf16.msra.mxu0 %v2270
        %2318 = vmatprep.subr.bf16.mxu0 0
        %2319 = vmatpush2.bf16.msra.mxu0 %v2285
        %2320 = vmatprep.subr.bf16.mxu0 0
        %2321 = vmatpush2.bf16.msra.mxu0 %v2284
        %2322 = vmatprep.subr.bf16.mxu0 0
        %2323 = vmatpush2.bf16.msra.mxu0 %v2283
        %2324 = vmatprep.subr.bf16.mxu0 0
        %2325 = vmatpush2.bf16.msra.mxu0 %v2282
        %2326 = vmatprep.subr.bf16.mxu0 0
        %2327 = vmatpush2.bf16.msra.mxu0 %v2281
        %2328 = vmatprep.subr.bf16.mxu0 0
        %2329 = vmatpush2.bf16.msra.mxu0 %v2280
        %2330 = vmatprep.subr.bf16.mxu0 0
        %2331 = vmatpush2.bf16.msra.mxu0 %v2279
        %2332 = vmatprep.subr.bf16.mxu0 0
        %2333 = vmatpush2.bf16.msra.mxu0 %v2278
        %2334 = vmatprep.mubr.bf16.mxu0 %v390
        %2335 = vmatmul.mubr.bf16.gmra.mxu0 %v389
        %v2336 = vpop.f32.mrf.mxu0
        %v2337 = vadd.f32 0.0, %v2336
        %v2338 = vpop.f32.mrf.mxu0
        %v2339 = vpop.f32.mrf.mxu0
        %v2340 = vpop.f32.mrf.mxu0
        %2341 = vdwg.mxu0
        %v2342 = vpack.c.bf16 %v2337, %v2337
        %s2343 = scalar_lea.vmem %s1, 64
        %v2344 = vld [vmem:[%s2343] sm:$0xf]
        %v2345 = vld [vmem:[%s2343 + $0x4] sm:$0xf]
        %v2348 = vunpack.c.l.b16 %v2344
        %v2349 = vunpack.c.l.b16 %v2345
        %v2350 = vpack.c.b16 %v2349, %v2348
        %v2352 = vsel %vm710, %v2350, 0
        %v2355 = vsel %vm714, %v2342, 0
        %2357 = vmatprep.subr.bf16.mxu0 0
        %2358 = vmatpush1.bf16.msra.mxu0 0
        %2359 = vmatprep.subr.bf16.mxu0 0
        %2360 = vmatpush1.bf16.msra.mxu0 0
        %2361 = vmatprep.subr.bf16.mxu0 0
        %2362 = vmatpush1.bf16.msra.mxu0 0
        %2363 = vmatprep.subr.bf16.mxu0 0
        %2364 = vmatpush1.bf16.msra.mxu0 0
        %2365 = vmatprep.subr.bf16.mxu0 0
        %2366 = vmatpush1.bf16.msra.mxu0 0
        %2367 = vmatprep.subr.bf16.mxu0 0
        %2368 = vmatpush1.bf16.msra.mxu0 0
        %2369 = vmatprep.subr.bf16.mxu0 0
        %2370 = vmatpush1.bf16.msra.mxu0 0
        %2371 = vmatprep.subr.bf16.mxu0 0
        %2372 = vmatpush1.bf16.msra.mxu0 %v2355
        %2373 = vmatprep.subr.bf16.mxu0 0
        %2374 = vmatpush2.bf16.msra.mxu0 0
        %2375 = vmatprep.subr.bf16.mxu0 0
        %2376 = vmatpush2.bf16.msra.mxu0 0
        %2377 = vmatprep.subr.bf16.mxu0 0
        %2378 = vmatpush2.bf16.msra.mxu0 0
        %2379 = vmatprep.subr.bf16.mxu0 0
        %2380 = vmatpush2.bf16.msra.mxu0 0
        %2381 = vmatprep.subr.bf16.mxu0 0
        %2382 = vmatpush2.bf16.msra.mxu0 0
        %2383 = vmatprep.subr.bf16.mxu0 0
        %2384 = vmatpush2.bf16.msra.mxu0 0
        %2385 = vmatprep.subr.bf16.mxu0 0
        %2386 = vmatpush2.bf16.msra.mxu0 0
        %2387 = vmatprep.subr.bf16.mxu0 0
        %2388 = vmatpush2.bf16.msra.mxu0 0
        %2389 = vmatprep.mubr.bf16.mxu0 0
        %2390 = vmatmul.mubr.bf16.gmra.mxu0 %v2352
        %v2391 = vpop.f32.mrf.mxu0
        %v2392 = vadd.f32 0.0, %v2391
        %v2393 = vpop.f32.mrf.mxu0
        %v2394 = vpop.f32.mrf.mxu0
        %v2395 = vadd.f32 0.0, %v2394
        %v2396 = vpop.f32.mrf.mxu0
        %2397 = vdwg.mxu0
        %v2398 = vadd.f32 %v2171, %v2392
        %v2399 = vadd.f32 %v2172, %v2395
        %v2400 = vld [vmem:[%s3] sm:$0xff]
        %v2401 = vld [vmem:[%s3 + $0x8] sm:$0xff]
        %2403 = vset.pattern.permute.xlu0 0
        %2404 = vperm.xlu0 %2403, %v2400
        %v2405 = vpop.permute.xlu0 %2404
        %2408 = vset.pattern.permute.xlu0 0
        %2409 = vperm.xlu0 %2408, %v2401
        %v2410 = vpop.permute.xlu0 %2409
        %v2412 = vadd.f32 %v2398, %v2405
        %v2413 = vadd.f32 %v2399, %v2410
        %v2414 = vmax.f32 %v2412, 0.0
        %v2415 = vmax.f32 %v2413, 0.0
        %v2416 = vpack.c.bf16 %v2415, %v2414
        %v2417 = vld [vmem:[%s5] sm:$0xf]
        %v2418 = vld [vmem:[%s5 + $0x4] sm:$0xf]
        %v2419 = vld [vmem:[%s5 + $0x8] sm:$0xf]
        %v2420 = vld [vmem:[%s5 + $0xc] sm:$0xf]
        %v2421 = vld [vmem:[%s5 + $0x10] sm:$0xf]
        %v2422 = vld [vmem:[%s5 + $0x14] sm:$0xf]
        %v2423 = vld [vmem:[%s5 + $0x18] sm:$0xf]
        %v2424 = vld [vmem:[%s5 + $0x1c] sm:$0xf]
        %v2433 = vunpack.c.l.b16 %v2417
        %v2434 = vunpack.c.l.b16 %v2418
        %v2435 = vunpack.c.l.b16 %v2419
        %v2436 = vunpack.c.l.b16 %v2420
        %v2437 = vunpack.c.l.b16 %v2421
        %v2438 = vunpack.c.l.b16 %v2422
        %v2439 = vunpack.c.l.b16 %v2423
        %v2440 = vunpack.c.l.b16 %v2424
        %v2441 = vpack.c.b16 %v2434, %v2433
        %v2442 = vpack.c.b16 %v2436, %v2435
        %v2443 = vpack.c.b16 %v2438, %v2437
        %v2444 = vpack.c.b16 %v2440, %v2439
        %vm2449 = vcmask 523264
        %v2451 = vsel %vm2449, %v2416, 0
        %2453 = vmatprep.subr.bf16.mxu0 0
        %2454 = vmatpush1.bf16.msra.mxu0 0
        %2455 = vmatprep.subr.bf16.mxu0 0
        %2456 = vmatpush1.bf16.msra.mxu0 0
        %2457 = vmatprep.subr.bf16.mxu0 0
        %2458 = vmatpush1.bf16.msra.mxu0 0
        %2459 = vmatprep.subr.bf16.mxu0 0
        %2460 = vmatpush1.bf16.msra.mxu0 0
        %2461 = vmatprep.subr.bf16.mxu0 0
        %2462 = vmatpush1.bf16.msra.mxu0 %v2444
        %2463 = vmatprep.subr.bf16.mxu0 0
        %2464 = vmatpush1.bf16.msra.mxu0 %v2443
        %2465 = vmatprep.subr.bf16.mxu0 0
        %2466 = vmatpush1.bf16.msra.mxu0 %v2442
        %2467 = vmatprep.subr.bf16.mxu0 0
        %2468 = vmatpush1.bf16.msra.mxu0 %v2441
        %2469 = vmatprep.subr.bf16.mxu0 0
        %2470 = vmatpush2.bf16.msra.mxu0 0
        %2471 = vmatprep.subr.bf16.mxu0 0
        %2472 = vmatpush2.bf16.msra.mxu0 0
        %2473 = vmatprep.subr.bf16.mxu0 0
        %2474 = vmatpush2.bf16.msra.mxu0 0
        %2475 = vmatprep.subr.bf16.mxu0 0
        %2476 = vmatpush2.bf16.msra.mxu0 0
        %2477 = vmatprep.subr.bf16.mxu0 0
        %2478 = vmatpush2.bf16.msra.mxu0 0
        %2479 = vmatprep.subr.bf16.mxu0 0
        %2480 = vmatpush2.bf16.msra.mxu0 0
        %2481 = vmatprep.subr.bf16.mxu0 0
        %2482 = vmatpush2.bf16.msra.mxu0 0
        %2483 = vmatprep.subr.bf16.mxu0 0
        %2484 = vmatpush2.bf16.msra.mxu0 0
        %2485 = vmatprep.mubr.bf16.mxu0 0
        %2486 = vmatmul.mubr.bf16.gmra.mxu0 %v2451
        %v2487 = vpop.f32.mrf.mxu0
        %v2488 = vadd.f32 0.0, %v2487
        %v2489 = vpop.f32.mrf.mxu0
        %v2490 = vpop.f32.mrf.mxu0
        %v2491 = vadd.f32 0.0, %v2490
        %v2492 = vpop.f32.mrf.mxu0
        %2493 = vdwg.mxu0
        %v2494 = vpack.c.bf16 %v2491, %v2488
        %v2495 = vld [vmem:[%s4] sm:$0xf]
        %v2496 = vld [vmem:[%s4 + $0x4] sm:$0xf]
        %v2497 = vld [vmem:[%s4 + $0x8] sm:$0xf]
        %v2498 = vld [vmem:[%s4 + $0xc] sm:$0xf]
        %s2499 = scalar_lea.vmem %s5, 32
        %v2500 = vld [vmem:[%s2499] sm:$0xf]
        %v2501 = vld [vmem:[%s2499 + $0x4] sm:$0xf]
        %v2502 = vld [vmem:[%s2499 + $0x8] sm:$0xf]
        %v2503 = vld [vmem:[%s2499 + $0xc] sm:$0xf]
        %v2504 = vld [vmem:[%s2499 + $0x10] sm:$0xf]
        %v2505 = vld [vmem:[%s2499 + $0x14] sm:$0xf]
        %v2506 = vld [vmem:[%s2499 + $0x18] sm:$0xf]
        %v2507 = vld [vmem:[%s2499 + $0x1c] sm:$0xf]
        %v2516 = vunpack.c.l.b16 %v2500
        %v2517 = vunpack.c.l.b16 %v2501
        %v2518 = vunpack.c.l.b16 %v2502
        %v2519 = vunpack.c.l.b16 %v2503
        %v2520 = vunpack.c.l.b16 %v2504
        %v2521 = vunpack.c.l.b16 %v2505
        %v2522 = vunpack.c.l.b16 %v2506
        %v2523 = vunpack.c.l.b16 %v2507
        %v2524 = vpack.c.b16 %v2517, %v2516
        %v2525 = vpack.c.b16 %v2519, %v2518
        %v2526 = vpack.c.b16 %v2521, %v2520
        %v2527 = vpack.c.b16 %v2523, %v2522
        %2532 = vmatprep.subr.bf16.mxu0 0
        %2533 = vmatpush1.bf16.msra.mxu0 0
        %2534 = vmatprep.subr.bf16.mxu0 0
        %2535 = vmatpush1.bf16.msra.mxu0 0
        %2536 = vmatprep.subr.bf16.mxu0 0
        %2537 = vmatpush1.bf16.msra.mxu0 0
        %2538 = vmatprep.subr.bf16.mxu0 0
        %2539 = vmatpush1.bf16.msra.mxu0 0
        %2540 = vmatprep.subr.bf16.mxu0 0
        %2541 = vmatpush1.bf16.msra.mxu0 %v2527
        %2542 = vmatprep.subr.bf16.mxu0 0
        %2543 = vmatpush1.bf16.msra.mxu0 %v2526
        %2544 = vmatprep.subr.bf16.mxu0 0
        %2545 = vmatpush1.bf16.msra.mxu0 %v2525
        %2546 = vmatprep.subr.bf16.mxu0 0
        %2547 = vmatpush1.bf16.msra.mxu0 %v2524
        %2548 = vmatprep.subr.bf16.mxu0 0
        %2549 = vmatpush2.bf16.msra.mxu0 0
        %2550 = vmatprep.subr.bf16.mxu0 0
        %2551 = vmatpush2.bf16.msra.mxu0 0
        %2552 = vmatprep.subr.bf16.mxu0 0
        %2553 = vmatpush2.bf16.msra.mxu0 0
        %2554 = vmatprep.subr.bf16.mxu0 0
        %2555 = vmatpush2.bf16.msra.mxu0 0
        %2556 = vmatprep.subr.bf16.mxu0 0
        %2557 = vmatpush2.bf16.msra.mxu0 0
        %2558 = vmatprep.subr.bf16.mxu0 0
        %2559 = vmatpush2.bf16.msra.mxu0 0
        %2560 = vmatprep.subr.bf16.mxu0 0
        %2561 = vmatpush2.bf16.msra.mxu0 0
        %2562 = vmatprep.subr.bf16.mxu0 0
        %2563 = vmatpush2.bf16.msra.mxu0 0
        %2564 = vmatprep.mubr.bf16.mxu0 0
        %2565 = vmatmul.mubr.bf16.gmra.mxu0 %v2451
        %v2566 = vpop.f32.mrf.mxu0
        %v2567 = vadd.f32 0.0, %v2566
        %v2568 = vpop.f32.mrf.mxu0
        %v2569 = vpop.f32.mrf.mxu0
        %v2570 = vadd.f32 0.0, %v2569
        %v2571 = vpop.f32.mrf.mxu0
        %2572 = vdwg.mxu0
        %v2573 = vpack.c.bf16 %v2570, %v2567
        %s2574 = scalar_lea.vmem %s4, 16
        %v2575 = vld [vmem:[%s2574] sm:$0xf]
        %v2576 = vld [vmem:[%s2574 + $0x4] sm:$0xf]
        %v2577 = vld [vmem:[%s2574 + $0x8] sm:$0xf]
        %v2578 = vld [vmem:[%s2574 + $0xc] sm:$0xf]
        %v2583 = vunpack.c.l.b16 %v2575
        %v2584 = vunpack.c.l.b16 %v2576
        %v2585 = vunpack.c.l.b16 %v2577
        %v2586 = vunpack.c.l.b16 %v2578
        %v2587 = vpack.c.b16 %v2584, %v2583
        %v2588 = vpack.c.b16 %v2586, %v2585
        %vm2589 = vcmask 130048
        %v2591 = vsel %vm2589, %v2587, 0
        %v2594 = vsel %vm2589, %v2588, 0
        %2596 = vmatprep.subr.bf16.mxu0 0
        %2597 = vmatpush1.bf16.msra.mxu0 0
        %2598 = vmatprep.subr.bf16.mxu0 0
        %2599 = vmatpush1.bf16.msra.mxu0 0
        %2600 = vmatprep.subr.bf16.mxu0 0
        %2601 = vmatpush1.bf16.msra.mxu0 0
        %2602 = vmatprep.subr.bf16.mxu0 0
        %2603 = vmatpush1.bf16.msra.mxu0 0
        %2604 = vmatprep.subr.bf16.mxu0 0
        %2605 = vmatpush1.bf16.msra.mxu0 0
        %2606 = vmatprep.subr.bf16.mxu0 0
        %2607 = vmatpush1.bf16.msra.mxu0 0
        %2608 = vmatprep.subr.bf16.mxu0 0
        %2609 = vmatpush1.bf16.msra.mxu0 0
        %2610 = vmatprep.subr.bf16.mxu0 0
        %2611 = vmatpush1.bf16.msra.mxu0 %v2573
        %2612 = vmatprep.subr.bf16.mxu0 0
        %2613 = vmatpush2.bf16.msra.mxu0 0
        %2614 = vmatprep.subr.bf16.mxu0 0
        %2615 = vmatpush2.bf16.msra.mxu0 0
        %2616 = vmatprep.subr.bf16.mxu0 0
        %2617 = vmatpush2.bf16.msra.mxu0 0
        %2618 = vmatprep.subr.bf16.mxu0 0
        %2619 = vmatpush2.bf16.msra.mxu0 0
        %2620 = vmatprep.subr.bf16.mxu0 0
        %2621 = vmatpush2.bf16.msra.mxu0 0
        %2622 = vmatprep.subr.bf16.mxu0 0
        %2623 = vmatpush2.bf16.msra.mxu0 0
        %2624 = vmatprep.subr.bf16.mxu0 0
        %2625 = vmatpush2.bf16.msra.mxu0 0
        %2626 = vmatprep.subr.bf16.mxu0 0
        %2627 = vmatpush2.bf16.msra.mxu0 0
        %2628 = vmatprep.mubr.bf16.mxu0 0
        %2629 = vmatmul.mubr.bf16.gmra.mxu0 %v2591
        %v2630 = vpop.f32.mrf.mxu0
        %v2631 = vadd.f32 0.0, %v2630
        %v2632 = vpop.f32.mrf.mxu0
        %v2633 = vpop.f32.mrf.mxu0
        %v2634 = vadd.f32 0.0, %v2633
        %v2635 = vpop.f32.mrf.mxu0
        %2636 = vmatprep.mubr.bf16.mxu0 0
        %2637 = vmatmul.mubr.bf16.gmra.mxu0 %v2594
        %v2638 = vpop.f32.mrf.mxu0
        %v2639 = vadd.f32 0.0, %v2638
        %v2640 = vpop.f32.mrf.mxu0
        %v2641 = vpop.f32.mrf.mxu0
        %v2642 = vadd.f32 0.0, %v2641
        %v2643 = vpop.f32.mrf.mxu0
        %2644 = vdwg.mxu0
        %v2649 = vunpack.c.l.b16 %v2495
        %v2650 = vunpack.c.l.b16 %v2496
        %v2651 = vunpack.c.l.b16 %v2497
        %v2652 = vunpack.c.l.b16 %v2498
        %v2653 = vpack.c.b16 %v2650, %v2649
        %v2654 = vpack.c.b16 %v2652, %v2651
        %v2656 = vsel %vm2589, %v2653, 0
        %v2659 = vsel %vm2589, %v2654, 0
        %2661 = vmatprep.subr.bf16.mxu0 0
        %2662 = vmatpush1.bf16.msra.mxu0 0
        %2663 = vmatprep.subr.bf16.mxu0 0
        %2664 = vmatpush1.bf16.msra.mxu0 0
        %2665 = vmatprep.subr.bf16.mxu0 0
        %2666 = vmatpush1.bf16.msra.mxu0 0
        %2667 = vmatprep.subr.bf16.mxu0 0
        %2668 = vmatpush1.bf16.msra.mxu0 0
        %2669 = vmatprep.subr.bf16.mxu0 0
        %2670 = vmatpush1.bf16.msra.mxu0 0
        %2671 = vmatprep.subr.bf16.mxu0 0
        %2672 = vmatpush1.bf16.msra.mxu0 0
        %2673 = vmatprep.subr.bf16.mxu0 0
        %2674 = vmatpush1.bf16.msra.mxu0 0
        %2675 = vmatprep.subr.bf16.mxu0 0
        %2676 = vmatpush1.bf16.msra.mxu0 %v2494
        %2677 = vmatprep.subr.bf16.mxu0 0
        %2678 = vmatpush2.bf16.msra.mxu0 0
        %2679 = vmatprep.subr.bf16.mxu0 0
        %2680 = vmatpush2.bf16.msra.mxu0 0
        %2681 = vmatprep.subr.bf16.mxu0 0
        %2682 = vmatpush2.bf16.msra.mxu0 0
        %2683 = vmatprep.subr.bf16.mxu0 0
        %2684 = vmatpush2.bf16.msra.mxu0 0
        %2685 = vmatprep.subr.bf16.mxu0 0
        %2686 = vmatpush2.bf16.msra.mxu0 0
        %2687 = vmatprep.subr.bf16.mxu0 0
        %2688 = vmatpush2.bf16.msra.mxu0 0
        %2689 = vmatprep.subr.bf16.mxu0 0
        %2690 = vmatpush2.bf16.msra.mxu0 0
        %2691 = vmatprep.subr.bf16.mxu0 0
        %2692 = vmatpush2.bf16.msra.mxu0 0
        %2693 = vmatprep.mubr.bf16.mxu0 0
        %2694 = vmatmul.mubr.bf16.gmra.mxu0 %v2656
        %v2695 = vpop.f32.mrf.mxu0
        %v2696 = vadd.f32 %v2631, %v2695
        %v2697 = vpop.f32.mrf.mxu0
        %v2698 = vpop.f32.mrf.mxu0
        %v2699 = vadd.f32 %v2634, %v2698
        %v2700 = vpop.f32.mrf.mxu0
        %2701 = vmatprep.mubr.bf16.mxu0 0
        %2702 = vmatmul.mubr.bf16.gmra.mxu0 %v2659
        %v2703 = vpop.f32.mrf.mxu0
        %v2704 = vadd.f32 %v2639, %v2703
        %v2705 = vpop.f32.mrf.mxu0
        %v2706 = vpop.f32.mrf.mxu0
        %v2707 = vadd.f32 %v2642, %v2706
        %v2708 = vpop.f32.mrf.mxu0
        %2709 = vdwg.mxu0
        %s2710 = scalar_lea.vmem %s5, 64
        %v2711 = vld [vmem:[%s2710] sm:$0xf]
        %v2712 = vld [vmem:[%s2710 + $0x4] sm:$0xf]
        %v2713 = vld [vmem:[%s2710 + $0x8] sm:$0xf]
        %v2714 = vld [vmem:[%s2710 + $0xc] sm:$0xf]
        %v2715 = vld [vmem:[%s2710 + $0x10] sm:$0xf]
        %v2716 = vld [vmem:[%s2710 + $0x14] sm:$0xf]
        %v2717 = vld [vmem:[%s2710 + $0x18] sm:$0xf]
        %v2718 = vld [vmem:[%s2710 + $0x1c] sm:$0xf]
        %v2727 = vunpack.c.l.b16 %v2711
        %v2728 = vunpack.c.l.b16 %v2712
        %v2729 = vunpack.c.l.b16 %v2713
        %v2730 = vunpack.c.l.b16 %v2714
        %v2731 = vunpack.c.l.b16 %v2715
        %v2732 = vunpack.c.l.b16 %v2716
        %v2733 = vunpack.c.l.b16 %v2717
        %v2734 = vunpack.c.l.b16 %v2718
        %v2735 = vpack.c.b16 %v2728, %v2727
        %v2736 = vpack.c.b16 %v2730, %v2729
        %v2737 = vpack.c.b16 %v2732, %v2731
        %v2738 = vpack.c.b16 %v2734, %v2733
        %2743 = vmatprep.subr.bf16.mxu0 0
        %2744 = vmatpush1.bf16.msra.mxu0 0
        %2745 = vmatprep.subr.bf16.mxu0 0
        %2746 = vmatpush1.bf16.msra.mxu0 0
        %2747 = vmatprep.subr.bf16.mxu0 0
        %2748 = vmatpush1.bf16.msra.mxu0 0
        %2749 = vmatprep.subr.bf16.mxu0 0
        %2750 = vmatpush1.bf16.msra.mxu0 0
        %2751 = vmatprep.subr.bf16.mxu0 0
        %2752 = vmatpush1.bf16.msra.mxu0 %v2738
        %2753 = vmatprep.subr.bf16.mxu0 0
        %2754 = vmatpush1.bf16.msra.mxu0 %v2737
        %2755 = vmatprep.subr.bf16.mxu0 0
        %2756 = vmatpush1.bf16.msra.mxu0 %v2736
        %2757 = vmatprep.subr.bf16.mxu0 0
        %2758 = vmatpush1.bf16.msra.mxu0 %v2735
        %2759 = vmatprep.subr.bf16.mxu0 0
        %2760 = vmatpush2.bf16.msra.mxu0 0
        %2761 = vmatprep.subr.bf16.mxu0 0
        %2762 = vmatpush2.bf16.msra.mxu0 0
        %2763 = vmatprep.subr.bf16.mxu0 0
        %2764 = vmatpush2.bf16.msra.mxu0 0
        %2765 = vmatprep.subr.bf16.mxu0 0
        %2766 = vmatpush2.bf16.msra.mxu0 0
        %2767 = vmatprep.subr.bf16.mxu0 0
        %2768 = vmatpush2.bf16.msra.mxu0 0
        %2769 = vmatprep.subr.bf16.mxu0 0
        %2770 = vmatpush2.bf16.msra.mxu0 0
        %2771 = vmatprep.subr.bf16.mxu0 0
        %2772 = vmatpush2.bf16.msra.mxu0 0
        %2773 = vmatprep.subr.bf16.mxu0 0
        %2774 = vmatpush2.bf16.msra.mxu0 0
        %2775 = vmatprep.mubr.bf16.mxu0 0
        %2776 = vmatmul.mubr.bf16.gmra.mxu0 %v2451
        %v2777 = vpop.f32.mrf.mxu0
        %v2778 = vadd.f32 0.0, %v2777
        %v2779 = vpop.f32.mrf.mxu0
        %v2780 = vpop.f32.mrf.mxu0
        %v2781 = vadd.f32 0.0, %v2780
        %v2782 = vpop.f32.mrf.mxu0
        %2783 = vdwg.mxu0
        %v2784 = vpack.c.bf16 %v2781, %v2778
        %s2785 = scalar_lea.vmem %s4, 32
        %v2786 = vld [vmem:[%s2785] sm:$0xf]
        %v2787 = vld [vmem:[%s2785 + $0x4] sm:$0xf]
        %v2788 = vld [vmem:[%s2785 + $0x8] sm:$0xf]
        %v2789 = vld [vmem:[%s2785 + $0xc] sm:$0xf]
        %v2794 = vunpack.c.l.b16 %v2786
        %v2795 = vunpack.c.l.b16 %v2787
        %v2796 = vunpack.c.l.b16 %v2788
        %v2797 = vunpack.c.l.b16 %v2789
        %v2798 = vpack.c.b16 %v2795, %v2794
        %v2799 = vpack.c.b16 %v2797, %v2796
        %v2801 = vsel %vm2589, %v2798, 0
        %v2804 = vsel %vm2589, %v2799, 0
        %2806 = vmatprep.subr.bf16.mxu0 0
        %2807 = vmatpush1.bf16.msra.mxu0 0
        %2808 = vmatprep.subr.bf16.mxu0 0
        %2809 = vmatpush1.bf16.msra.mxu0 0
        %2810 = vmatprep.subr.bf16.mxu0 0
        %2811 = vmatpush1.bf16.msra.mxu0 0
        %2812 = vmatprep.subr.bf16.mxu0 0
        %2813 = vmatpush1.bf16.msra.mxu0 0
        %2814 = vmatprep.subr.bf16.mxu0 0
        %2815 = vmatpush1.bf16.msra.mxu0 0
        %2816 = vmatprep.subr.bf16.mxu0 0
        %2817 = vmatpush1.bf16.msra.mxu0 0
        %2818 = vmatprep.subr.bf16.mxu0 0
        %2819 = vmatpush1.bf16.msra.mxu0 0
        %2820 = vmatprep.subr.bf16.mxu0 0
        %2821 = vmatpush1.bf16.msra.mxu0 %v2784
        %2822 = vmatprep.subr.bf16.mxu0 0
        %2823 = vmatpush2.bf16.msra.mxu0 0
        %2824 = vmatprep.subr.bf16.mxu0 0
        %2825 = vmatpush2.bf16.msra.mxu0 0
        %2826 = vmatprep.subr.bf16.mxu0 0
        %2827 = vmatpush2.bf16.msra.mxu0 0
        %2828 = vmatprep.subr.bf16.mxu0 0
        %2829 = vmatpush2.bf16.msra.mxu0 0
        %2830 = vmatprep.subr.bf16.mxu0 0
        %2831 = vmatpush2.bf16.msra.mxu0 0
        %2832 = vmatprep.subr.bf16.mxu0 0
        %2833 = vmatpush2.bf16.msra.mxu0 0
        %2834 = vmatprep.subr.bf16.mxu0 0
        %2835 = vmatpush2.bf16.msra.mxu0 0
        %2836 = vmatprep.subr.bf16.mxu0 0
        %2837 = vmatpush2.bf16.msra.mxu0 0
        %2838 = vmatprep.mubr.bf16.mxu0 0
        %2839 = vmatmul.mubr.bf16.gmra.mxu0 %v2801
        %v2840 = vpop.f32.mrf.mxu0
        %v2841 = vadd.f32 0.0, %v2840
        %v2842 = vpop.f32.mrf.mxu0
        %v2843 = vpop.f32.mrf.mxu0
        %v2844 = vadd.f32 0.0, %v2843
        %v2845 = vpop.f32.mrf.mxu0
        %2846 = vmatprep.mubr.bf16.mxu0 0
        %2847 = vmatmul.mubr.bf16.gmra.mxu0 %v2804
        %v2848 = vpop.f32.mrf.mxu0
        %v2849 = vadd.f32 0.0, %v2848
        %v2850 = vpop.f32.mrf.mxu0
        %v2851 = vpop.f32.mrf.mxu0
        %v2852 = vadd.f32 0.0, %v2851
        %v2853 = vpop.f32.mrf.mxu0
        %2854 = vdwg.mxu0
        %v2855 = vadd.f32 %v2696, %v2841
        %v2856 = vadd.f32 %v2699, %v2844
        %v2857 = vadd.f32 %v2704, %v2849
        %v2858 = vadd.f32 %v2707, %v2852
        %s2859 = scalar_lea.vmem %s5, 96
        %v2860 = vld [vmem:[%s2859] sm:$0xf]
        %v2861 = vld [vmem:[%s2859 + $0x4] sm:$0xf]
        %v2862 = vld [vmem:[%s2859 + $0x8] sm:$0xf]
        %v2863 = vld [vmem:[%s2859 + $0xc] sm:$0xf]
        %v2864 = vld [vmem:[%s2859 + $0x10] sm:$0xf]
        %v2865 = vld [vmem:[%s2859 + $0x14] sm:$0xf]
        %v2866 = vld [vmem:[%s2859 + $0x18] sm:$0xf]
        %v2867 = vld [vmem:[%s2859 + $0x1c] sm:$0xf]
        %v2876 = vunpack.c.l.b16 %v2860
        %v2877 = vunpack.c.l.b16 %v2861
        %v2878 = vunpack.c.l.b16 %v2862
        %v2879 = vunpack.c.l.b16 %v2863
        %v2880 = vunpack.c.l.b16 %v2864
        %v2881 = vunpack.c.l.b16 %v2865
        %v2882 = vunpack.c.l.b16 %v2866
        %v2883 = vunpack.c.l.b16 %v2867
        %v2884 = vpack.c.b16 %v2877, %v2876
        %v2885 = vpack.c.b16 %v2879, %v2878
        %v2886 = vpack.c.b16 %v2881, %v2880
        %v2887 = vpack.c.b16 %v2883, %v2882
        %2892 = vmatprep.subr.bf16.mxu0 0
        %2893 = vmatpush1.bf16.msra.mxu0 0
        %2894 = vmatprep.subr.bf16.mxu0 0
        %2895 = vmatpush1.bf16.msra.mxu0 0
        %2896 = vmatprep.subr.bf16.mxu0 0
        %2897 = vmatpush1.bf16.msra.mxu0 0
        %2898 = vmatprep.subr.bf16.mxu0 0
        %2899 = vmatpush1.bf16.msra.mxu0 0
        %2900 = vmatprep.subr.bf16.mxu0 0
        %2901 = vmatpush1.bf16.msra.mxu0 %v2887
        %2902 = vmatprep.subr.bf16.mxu0 0
        %2903 = vmatpush1.bf16.msra.mxu0 %v2886
        %2904 = vmatprep.subr.bf16.mxu0 0
        %2905 = vmatpush1.bf16.msra.mxu0 %v2885
        %2906 = vmatprep.subr.bf16.mxu0 0
        %2907 = vmatpush1.bf16.msra.mxu0 %v2884
        %2908 = vmatprep.subr.bf16.mxu0 0
        %2909 = vmatpush2.bf16.msra.mxu0 0
        %2910 = vmatprep.subr.bf16.mxu0 0
        %2911 = vmatpush2.bf16.msra.mxu0 0
        %2912 = vmatprep.subr.bf16.mxu0 0
        %2913 = vmatpush2.bf16.msra.mxu0 0
        %2914 = vmatprep.subr.bf16.mxu0 0
        %2915 = vmatpush2.bf16.msra.mxu0 0
        %2916 = vmatprep.subr.bf16.mxu0 0
        %2917 = vmatpush2.bf16.msra.mxu0 0
        %2918 = vmatprep.subr.bf16.mxu0 0
        %2919 = vmatpush2.bf16.msra.mxu0 0
        %2920 = vmatprep.subr.bf16.mxu0 0
        %2921 = vmatpush2.bf16.msra.mxu0 0
        %2922 = vmatprep.subr.bf16.mxu0 0
        %2923 = vmatpush2.bf16.msra.mxu0 0
        %2924 = vmatprep.mubr.bf16.mxu0 0
        %2925 = vmatmul.mubr.bf16.gmra.mxu0 %v2451
        %v2926 = vpop.f32.mrf.mxu0
        %v2927 = vadd.f32 0.0, %v2926
        %v2928 = vpop.f32.mrf.mxu0
        %v2929 = vpop.f32.mrf.mxu0
        %v2930 = vadd.f32 0.0, %v2929
        %v2931 = vpop.f32.mrf.mxu0
        %2932 = vdwg.mxu0
        %v2933 = vpack.c.bf16 %v2930, %v2927
        %s2934 = scalar_lea.vmem %s4, 48
        %v2935 = vld [vmem:[%s2934] sm:$0xf]
        %v2936 = vld [vmem:[%s2934 + $0x4] sm:$0xf]
        %v2937 = vld [vmem:[%s2934 + $0x8] sm:$0xf]
        %v2938 = vld [vmem:[%s2934 + $0xc] sm:$0xf]
        %v2943 = vunpack.c.l.b16 %v2935
        %v2944 = vunpack.c.l.b16 %v2936
        %v2945 = vunpack.c.l.b16 %v2937
        %v2946 = vunpack.c.l.b16 %v2938
        %v2947 = vpack.c.b16 %v2944, %v2943
        %v2948 = vpack.c.b16 %v2946, %v2945
        %v2950 = vsel %vm2589, %v2947, 0
        %v2953 = vsel %vm2589, %v2948, 0
        %2955 = vmatprep.subr.bf16.mxu0 0
        %2956 = vmatpush1.bf16.msra.mxu0 0
        %2957 = vmatprep.subr.bf16.mxu0 0
        %2958 = vmatpush1.bf16.msra.mxu0 0
        %2959 = vmatprep.subr.bf16.mxu0 0
        %2960 = vmatpush1.bf16.msra.mxu0 0
        %2961 = vmatprep.subr.bf16.mxu0 0
        %2962 = vmatpush1.bf16.msra.mxu0 0
        %2963 = vmatprep.subr.bf16.mxu0 0
        %2964 = vmatpush1.bf16.msra.mxu0 0
        %2965 = vmatprep.subr.bf16.mxu0 0
        %2966 = vmatpush1.bf16.msra.mxu0 0
        %2967 = vmatprep.subr.bf16.mxu0 0
        %2968 = vmatpush1.bf16.msra.mxu0 0
        %2969 = vmatprep.subr.bf16.mxu0 0
        %2970 = vmatpush1.bf16.msra.mxu0 %v2933
        %2971 = vmatprep.subr.bf16.mxu0 0
        %2972 = vmatpush2.bf16.msra.mxu0 0
        %2973 = vmatprep.subr.bf16.mxu0 0
        %2974 = vmatpush2.bf16.msra.mxu0 0
        %2975 = vmatprep.subr.bf16.mxu0 0
        %2976 = vmatpush2.bf16.msra.mxu0 0
        %2977 = vmatprep.subr.bf16.mxu0 0
        %2978 = vmatpush2.bf16.msra.mxu0 0
        %2979 = vmatprep.subr.bf16.mxu0 0
        %2980 = vmatpush2.bf16.msra.mxu0 0
        %2981 = vmatprep.subr.bf16.mxu0 0
        %2982 = vmatpush2.bf16.msra.mxu0 0
        %2983 = vmatprep.subr.bf16.mxu0 0
        %2984 = vmatpush2.bf16.msra.mxu0 0
        %2985 = vmatprep.subr.bf16.mxu0 0
        %2986 = vmatpush2.bf16.msra.mxu0 0
        %2987 = vmatprep.mubr.bf16.mxu0 0
        %2988 = vmatmul.mubr.bf16.gmra.mxu0 %v2950
        %v2989 = vpop.f32.mrf.mxu0
        %v2990 = vadd.f32 0.0, %v2989
        %v2991 = vpop.f32.mrf.mxu0
        %v2992 = vpop.f32.mrf.mxu0
        %v2993 = vadd.f32 0.0, %v2992
        %v2994 = vpop.f32.mrf.mxu0
        %2995 = vmatprep.mubr.bf16.mxu0 0
        %2996 = vmatmul.mubr.bf16.gmra.mxu0 %v2953
        %v2997 = vpop.f32.mrf.mxu0
        %v2998 = vadd.f32 0.0, %v2997
        %v2999 = vpop.f32.mrf.mxu0
        %v3000 = vpop.f32.mrf.mxu0
        %v3001 = vadd.f32 0.0, %v3000
        %v3002 = vpop.f32.mrf.mxu0
        %3003 = vdwg.mxu0
        %v3004 = vadd.f32 %v2855, %v2990
        %v3005 = vadd.f32 %v2856, %v2993
        %v3006 = vadd.f32 %v2857, %v2998
        %v3007 = vadd.f32 %v2858, %v3001
        %s3008 = scalar_lea.vmem %s5, 128
        %v3009 = vld [vmem:[%s3008] sm:$0xf]
        %v3010 = vld [vmem:[%s3008 + $0x4] sm:$0xf]
        %v3011 = vld [vmem:[%s3008 + $0x8] sm:$0xf]
        %v3012 = vld [vmem:[%s3008 + $0xc] sm:$0xf]
        %v3013 = vld [vmem:[%s3008 + $0x10] sm:$0xf]
        %v3014 = vld [vmem:[%s3008 + $0x14] sm:$0xf]
        %v3015 = vld [vmem:[%s3008 + $0x18] sm:$0xf]
        %v3016 = vld [vmem:[%s3008 + $0x1c] sm:$0xf]
        %v3025 = vunpack.c.l.b16 %v3009
        %v3026 = vunpack.c.l.b16 %v3010
        %v3027 = vunpack.c.l.b16 %v3011
        %v3028 = vunpack.c.l.b16 %v3012
        %v3029 = vunpack.c.l.b16 %v3013
        %v3030 = vunpack.c.l.b16 %v3014
        %v3031 = vunpack.c.l.b16 %v3015
        %v3032 = vunpack.c.l.b16 %v3016
        %v3033 = vpack.c.b16 %v3026, %v3025
        %v3034 = vpack.c.b16 %v3028, %v3027
        %v3035 = vpack.c.b16 %v3030, %v3029
        %v3036 = vpack.c.b16 %v3032, %v3031
        %3041 = vmatprep.subr.bf16.mxu0 0
        %3042 = vmatpush1.bf16.msra.mxu0 0
        %3043 = vmatprep.subr.bf16.mxu0 0
        %3044 = vmatpush1.bf16.msra.mxu0 0
        %3045 = vmatprep.subr.bf16.mxu0 0
        %3046 = vmatpush1.bf16.msra.mxu0 0
        %3047 = vmatprep.subr.bf16.mxu0 0
        %3048 = vmatpush1.bf16.msra.mxu0 0
        %3049 = vmatprep.subr.bf16.mxu0 0
        %3050 = vmatpush1.bf16.msra.mxu0 %v3036
        %3051 = vmatprep.subr.bf16.mxu0 0
        %3052 = vmatpush1.bf16.msra.mxu0 %v3035
        %3053 = vmatprep.subr.bf16.mxu0 0
        %3054 = vmatpush1.bf16.msra.mxu0 %v3034
        %3055 = vmatprep.subr.bf16.mxu0 0
        %3056 = vmatpush1.bf16.msra.mxu0 %v3033
        %3057 = vmatprep.subr.bf16.mxu0 0
        %3058 = vmatpush2.bf16.msra.mxu0 0
        %3059 = vmatprep.subr.bf16.mxu0 0
        %3060 = vmatpush2.bf16.msra.mxu0 0
        %3061 = vmatprep.subr.bf16.mxu0 0
        %3062 = vmatpush2.bf16.msra.mxu0 0
        %3063 = vmatprep.subr.bf16.mxu0 0
        %3064 = vmatpush2.bf16.msra.mxu0 0
        %3065 = vmatprep.subr.bf16.mxu0 0
        %3066 = vmatpush2.bf16.msra.mxu0 0
        %3067 = vmatprep.subr.bf16.mxu0 0
        %3068 = vmatpush2.bf16.msra.mxu0 0
        %3069 = vmatprep.subr.bf16.mxu0 0
        %3070 = vmatpush2.bf16.msra.mxu0 0
        %3071 = vmatprep.subr.bf16.mxu0 0
        %3072 = vmatpush2.bf16.msra.mxu0 0
        %3073 = vmatprep.mubr.bf16.mxu0 0
        %3074 = vmatmul.mubr.bf16.gmra.mxu0 %v2451
        %v3075 = vpop.f32.mrf.mxu0
        %v3076 = vadd.f32 0.0, %v3075
        %v3077 = vpop.f32.mrf.mxu0
        %v3078 = vpop.f32.mrf.mxu0
        %v3079 = vadd.f32 0.0, %v3078
        %v3080 = vpop.f32.mrf.mxu0
        %3081 = vdwg.mxu0
        %v3082 = vpack.c.bf16 %v3079, %v3076
        %s3083 = scalar_lea.vmem %s4, 64
        %v3084 = vld [vmem:[%s3083] sm:$0xf]
        %v3085 = vld [vmem:[%s3083 + $0x4] sm:$0xf]
        %v3086 = vld [vmem:[%s3083 + $0x8] sm:$0xf]
        %v3087 = vld [vmem:[%s3083 + $0xc] sm:$0xf]
        %v3092 = vunpack.c.l.b16 %v3084
        %v3093 = vunpack.c.l.b16 %v3085
        %v3094 = vunpack.c.l.b16 %v3086
        %v3095 = vunpack.c.l.b16 %v3087
        %v3096 = vpack.c.b16 %v3093, %v3092
        %v3097 = vpack.c.b16 %v3095, %v3094
        %v3099 = vsel %vm2589, %v3096, 0
        %v3102 = vsel %vm2589, %v3097, 0
        %3104 = vmatprep.subr.bf16.mxu0 0
        %3105 = vmatpush1.bf16.msra.mxu0 0
        %3106 = vmatprep.subr.bf16.mxu0 0
        %3107 = vmatpush1.bf16.msra.mxu0 0
        %3108 = vmatprep.subr.bf16.mxu0 0
        %3109 = vmatpush1.bf16.msra.mxu0 0
        %3110 = vmatprep.subr.bf16.mxu0 0
        %3111 = vmatpush1.bf16.msra.mxu0 0
        %3112 = vmatprep.subr.bf16.mxu0 0
        %3113 = vmatpush1.bf16.msra.mxu0 0
        %3114 = vmatprep.subr.bf16.mxu0 0
        %3115 = vmatpush1.bf16.msra.mxu0 0
        %3116 = vmatprep.subr.bf16.mxu0 0
        %3117 = vmatpush1.bf16.msra.mxu0 0
        %3118 = vmatprep.subr.bf16.mxu0 0
        %3119 = vmatpush1.bf16.msra.mxu0 %v3082
        %3120 = vmatprep.subr.bf16.mxu0 0
        %3121 = vmatpush2.bf16.msra.mxu0 0
        %3122 = vmatprep.subr.bf16.mxu0 0
        %3123 = vmatpush2.bf16.msra.mxu0 0
        %3124 = vmatprep.subr.bf16.mxu0 0
        %3125 = vmatpush2.bf16.msra.mxu0 0
        %3126 = vmatprep.subr.bf16.mxu0 0
        %3127 = vmatpush2.bf16.msra.mxu0 0
        %3128 = vmatprep.subr.bf16.mxu0 0
        %3129 = vmatpush2.bf16.msra.mxu0 0
        %3130 = vmatprep.subr.bf16.mxu0 0
        %3131 = vmatpush2.bf16.msra.mxu0 0
        %3132 = vmatprep.subr.bf16.mxu0 0
        %3133 = vmatpush2.bf16.msra.mxu0 0
        %3134 = vmatprep.subr.bf16.mxu0 0
        %3135 = vmatpush2.bf16.msra.mxu0 0
        %3136 = vmatprep.mubr.bf16.mxu0 0
        %3137 = vmatmul.mubr.bf16.gmra.mxu0 %v3099
        %v3138 = vpop.f32.mrf.mxu0
        %v3139 = vadd.f32 0.0, %v3138
        %v3140 = vpop.f32.mrf.mxu0
        %v3141 = vpop.f32.mrf.mxu0
        %v3142 = vadd.f32 0.0, %v3141
        %v3143 = vpop.f32.mrf.mxu0
        %3144 = vmatprep.mubr.bf16.mxu0 0
        %3145 = vmatmul.mubr.bf16.gmra.mxu0 %v3102
        %v3146 = vpop.f32.mrf.mxu0
        %v3147 = vadd.f32 0.0, %v3146
        %v3148 = vpop.f32.mrf.mxu0
        %v3149 = vpop.f32.mrf.mxu0
        %v3150 = vadd.f32 0.0, %v3149
        %v3151 = vpop.f32.mrf.mxu0
        %3152 = vdwg.mxu0
        %v3153 = vadd.f32 %v3004, %v3139
        %v3154 = vadd.f32 %v3005, %v3142
        %v3155 = vadd.f32 %v3006, %v3147
        %v3156 = vadd.f32 %v3007, %v3150
        %s3157 = scalar_lea.vmem %s5, 160
        %v3158 = vld [vmem:[%s3157] sm:$0xf]
        %v3159 = vld [vmem:[%s3157 + $0x4] sm:$0xf]
        %v3160 = vld [vmem:[%s3157 + $0x8] sm:$0xf]
        %v3161 = vld [vmem:[%s3157 + $0xc] sm:$0xf]
        %v3162 = vld [vmem:[%s3157 + $0x10] sm:$0xf]
        %v3163 = vld [vmem:[%s3157 + $0x14] sm:$0xf]
        %v3164 = vld [vmem:[%s3157 + $0x18] sm:$0xf]
        %v3165 = vld [vmem:[%s3157 + $0x1c] sm:$0xf]
        %v3174 = vunpack.c.l.b16 %v3158
        %v3175 = vunpack.c.l.b16 %v3159
        %v3176 = vunpack.c.l.b16 %v3160
        %v3177 = vunpack.c.l.b16 %v3161
        %v3178 = vunpack.c.l.b16 %v3162
        %v3179 = vunpack.c.l.b16 %v3163
        %v3180 = vunpack.c.l.b16 %v3164
        %v3181 = vunpack.c.l.b16 %v3165
        %v3182 = vpack.c.b16 %v3175, %v3174
        %v3183 = vpack.c.b16 %v3177, %v3176
        %v3184 = vpack.c.b16 %v3179, %v3178
        %v3185 = vpack.c.b16 %v3181, %v3180
        %3190 = vmatprep.subr.bf16.mxu0 0
        %3191 = vmatpush1.bf16.msra.mxu0 0
        %3192 = vmatprep.subr.bf16.mxu0 0
        %3193 = vmatpush1.bf16.msra.mxu0 0
        %3194 = vmatprep.subr.bf16.mxu0 0
        %3195 = vmatpush1.bf16.msra.mxu0 0
        %3196 = vmatprep.subr.bf16.mxu0 0
        %3197 = vmatpush1.bf16.msra.mxu0 0
        %3198 = vmatprep.subr.bf16.mxu0 0
        %3199 = vmatpush1.bf16.msra.mxu0 %v3185
        %3200 = vmatprep.subr.bf16.mxu0 0
        %3201 = vmatpush1.bf16.msra.mxu0 %v3184
        %3202 = vmatprep.subr.bf16.mxu0 0
        %3203 = vmatpush1.bf16.msra.mxu0 %v3183
        %3204 = vmatprep.subr.bf16.mxu0 0
        %3205 = vmatpush1.bf16.msra.mxu0 %v3182
        %3206 = vmatprep.subr.bf16.mxu0 0
        %3207 = vmatpush2.bf16.msra.mxu0 0
        %3208 = vmatprep.subr.bf16.mxu0 0
        %3209 = vmatpush2.bf16.msra.mxu0 0
        %3210 = vmatprep.subr.bf16.mxu0 0
        %3211 = vmatpush2.bf16.msra.mxu0 0
        %3212 = vmatprep.subr.bf16.mxu0 0
        %3213 = vmatpush2.bf16.msra.mxu0 0
        %3214 = vmatprep.subr.bf16.mxu0 0
        %3215 = vmatpush2.bf16.msra.mxu0 0
        %3216 = vmatprep.subr.bf16.mxu0 0
        %3217 = vmatpush2.bf16.msra.mxu0 0
        %3218 = vmatprep.subr.bf16.mxu0 0
        %3219 = vmatpush2.bf16.msra.mxu0 0
        %3220 = vmatprep.subr.bf16.mxu0 0
        %3221 = vmatpush2.bf16.msra.mxu0 0
        %3222 = vmatprep.mubr.bf16.mxu0 0
        %3223 = vmatmul.mubr.bf16.gmra.mxu0 %v2451
        %v3224 = vpop.f32.mrf.mxu0
        %v3225 = vadd.f32 0.0, %v3224
        %v3226 = vpop.f32.mrf.mxu0
        %v3227 = vpop.f32.mrf.mxu0
        %v3228 = vadd.f32 0.0, %v3227
        %v3229 = vpop.f32.mrf.mxu0
        %3230 = vdwg.mxu0
        %v3231 = vpack.c.bf16 %v3228, %v3225
        %s3232 = scalar_lea.vmem %s4, 80
        %v3233 = vld [vmem:[%s3232] sm:$0xf]
        %v3234 = vld [vmem:[%s3232 + $0x4] sm:$0xf]
        %v3235 = vld [vmem:[%s3232 + $0x8] sm:$0xf]
        %v3236 = vld [vmem:[%s3232 + $0xc] sm:$0xf]
        %v3241 = vunpack.c.l.b16 %v3233
        %v3242 = vunpack.c.l.b16 %v3234
        %v3243 = vunpack.c.l.b16 %v3235
        %v3244 = vunpack.c.l.b16 %v3236
        %v3245 = vpack.c.b16 %v3242, %v3241
        %v3246 = vpack.c.b16 %v3244, %v3243
        %v3248 = vsel %vm2589, %v3245, 0
        %v3251 = vsel %vm2589, %v3246, 0
        %3253 = vmatprep.subr.bf16.mxu0 0
        %3254 = vmatpush1.bf16.msra.mxu0 0
        %3255 = vmatprep.subr.bf16.mxu0 0
        %3256 = vmatpush1.bf16.msra.mxu0 0
        %3257 = vmatprep.subr.bf16.mxu0 0
        %3258 = vmatpush1.bf16.msra.mxu0 0
        %3259 = vmatprep.subr.bf16.mxu0 0
        %3260 = vmatpush1.bf16.msra.mxu0 0
        %3261 = vmatprep.subr.bf16.mxu0 0
        %3262 = vmatpush1.bf16.msra.mxu0 0
        %3263 = vmatprep.subr.bf16.mxu0 0
        %3264 = vmatpush1.bf16.msra.mxu0 0
        %3265 = vmatprep.subr.bf16.mxu0 0
        %3266 = vmatpush1.bf16.msra.mxu0 0
        %3267 = vmatprep.subr.bf16.mxu0 0
        %3268 = vmatpush1.bf16.msra.mxu0 %v3231
        %3269 = vmatprep.subr.bf16.mxu0 0
        %3270 = vmatpush2.bf16.msra.mxu0 0
        %3271 = vmatprep.subr.bf16.mxu0 0
        %3272 = vmatpush2.bf16.msra.mxu0 0
        %3273 = vmatprep.subr.bf16.mxu0 0
        %3274 = vmatpush2.bf16.msra.mxu0 0
        %3275 = vmatprep.subr.bf16.mxu0 0
        %3276 = vmatpush2.bf16.msra.mxu0 0
        %3277 = vmatprep.subr.bf16.mxu0 0
        %3278 = vmatpush2.bf16.msra.mxu0 0
        %3279 = vmatprep.subr.bf16.mxu0 0
        %3280 = vmatpush2.bf16.msra.mxu0 0
        %3281 = vmatprep.subr.bf16.mxu0 0
        %3282 = vmatpush2.bf16.msra.mxu0 0
        %3283 = vmatprep.subr.bf16.mxu0 0
        %3284 = vmatpush2.bf16.msra.mxu0 0
        %3285 = vmatprep.mubr.bf16.mxu0 0
        %3286 = vmatmul.mubr.bf16.gmra.mxu0 %v3248
        %v3287 = vpop.f32.mrf.mxu0
        %v3288 = vadd.f32 0.0, %v3287
        %v3289 = vpop.f32.mrf.mxu0
        %v3290 = vpop.f32.mrf.mxu0
        %v3291 = vadd.f32 0.0, %v3290
        %v3292 = vpop.f32.mrf.mxu0
        %3293 = vmatprep.mubr.bf16.mxu0 0
        %3294 = vmatmul.mubr.bf16.gmra.mxu0 %v3251
        %v3295 = vpop.f32.mrf.mxu0
        %v3296 = vadd.f32 0.0, %v3295
        %v3297 = vpop.f32.mrf.mxu0
        %v3298 = vpop.f32.mrf.mxu0
        %v3299 = vadd.f32 0.0, %v3298
        %v3300 = vpop.f32.mrf.mxu0
        %3301 = vdwg.mxu0
        %v3302 = vadd.f32 %v3153, %v3288
        %v3303 = vadd.f32 %v3154, %v3291
        %v3304 = vadd.f32 %v3155, %v3296
        %v3305 = vadd.f32 %v3156, %v3299
        %s3306 = scalar_lea.vmem %s5, 192
        %v3307 = vld [vmem:[%s3306] sm:$0xf]
        %v3308 = vld [vmem:[%s3306 + $0x4] sm:$0xf]
        %v3309 = vld [vmem:[%s3306 + $0x8] sm:$0xf]
        %v3310 = vld [vmem:[%s3306 + $0xc] sm:$0xf]
        %v3311 = vld [vmem:[%s3306 + $0x10] sm:$0xf]
        %v3312 = vld [vmem:[%s3306 + $0x14] sm:$0xf]
        %v3313 = vld [vmem:[%s3306 + $0x18] sm:$0xf]
        %v3314 = vld [vmem:[%s3306 + $0x1c] sm:$0xf]
        %v3323 = vunpack.c.l.b16 %v3307
        %v3324 = vunpack.c.l.b16 %v3308
        %v3325 = vunpack.c.l.b16 %v3309
        %v3326 = vunpack.c.l.b16 %v3310
        %v3327 = vunpack.c.l.b16 %v3311
        %v3328 = vunpack.c.l.b16 %v3312
        %v3329 = vunpack.c.l.b16 %v3313
        %v3330 = vunpack.c.l.b16 %v3314
        %v3331 = vpack.c.b16 %v3324, %v3323
        %v3332 = vpack.c.b16 %v3326, %v3325
        %v3333 = vpack.c.b16 %v3328, %v3327
        %v3334 = vpack.c.b16 %v3330, %v3329
        %3339 = vmatprep.subr.bf16.mxu0 0
        %3340 = vmatpush1.bf16.msra.mxu0 0
        %3341 = vmatprep.subr.bf16.mxu0 0
        %3342 = vmatpush1.bf16.msra.mxu0 0
        %3343 = vmatprep.subr.bf16.mxu0 0
        %3344 = vmatpush1.bf16.msra.mxu0 0
        %3345 = vmatprep.subr.bf16.mxu0 0
        %3346 = vmatpush1.bf16.msra.mxu0 0
        %3347 = vmatprep.subr.bf16.mxu0 0
        %3348 = vmatpush1.bf16.msra.mxu0 %v3334
        %3349 = vmatprep.subr.bf16.mxu0 0
        %3350 = vmatpush1.bf16.msra.mxu0 %v3333
        %3351 = vmatprep.subr.bf16.mxu0 0
        %3352 = vmatpush1.bf16.msra.mxu0 %v3332
        %3353 = vmatprep.subr.bf16.mxu0 0
        %3354 = vmatpush1.bf16.msra.mxu0 %v3331
        %3355 = vmatprep.subr.bf16.mxu0 0
        %3356 = vmatpush2.bf16.msra.mxu0 0
        %3357 = vmatprep.subr.bf16.mxu0 0
        %3358 = vmatpush2.bf16.msra.mxu0 0
        %3359 = vmatprep.subr.bf16.mxu0 0
        %3360 = vmatpush2.bf16.msra.mxu0 0
        %3361 = vmatprep.subr.bf16.mxu0 0
        %3362 = vmatpush2.bf16.msra.mxu0 0
        %3363 = vmatprep.subr.bf16.mxu0 0
        %3364 = vmatpush2.bf16.msra.mxu0 0
        %3365 = vmatprep.subr.bf16.mxu0 0
        %3366 = vmatpush2.bf16.msra.mxu0 0
        %3367 = vmatprep.subr.bf16.mxu0 0
        %3368 = vmatpush2.bf16.msra.mxu0 0
        %3369 = vmatprep.subr.bf16.mxu0 0
        %3370 = vmatpush2.bf16.msra.mxu0 0
        %3371 = vmatprep.mubr.bf16.mxu0 0
        %3372 = vmatmul.mubr.bf16.gmra.mxu0 %v2451
        %v3373 = vpop.f32.mrf.mxu0
        %v3374 = vadd.f32 0.0, %v3373
        %v3375 = vpop.f32.mrf.mxu0
        %v3376 = vpop.f32.mrf.mxu0
        %v3377 = vadd.f32 0.0, %v3376
        %v3378 = vpop.f32.mrf.mxu0
        %3379 = vdwg.mxu0
        %v3380 = vpack.c.bf16 %v3377, %v3374
        %s3381 = scalar_lea.vmem %s4, 96
        %v3382 = vld [vmem:[%s3381] sm:$0xf]
        %v3383 = vld [vmem:[%s3381 + $0x4] sm:$0xf]
        %v3384 = vld [vmem:[%s3381 + $0x8] sm:$0xf]
        %v3385 = vld [vmem:[%s3381 + $0xc] sm:$0xf]
        %v3390 = vunpack.c.l.b16 %v3382
        %v3391 = vunpack.c.l.b16 %v3383
        %v3392 = vunpack.c.l.b16 %v3384
        %v3393 = vunpack.c.l.b16 %v3385
        %v3394 = vpack.c.b16 %v3391, %v3390
        %v3395 = vpack.c.b16 %v3393, %v3392
        %v3397 = vsel %vm2589, %v3394, 0
        %v3400 = vsel %vm2589, %v3395, 0
        %3402 = vmatprep.subr.bf16.mxu0 0
        %3403 = vmatpush1.bf16.msra.mxu0 0
        %3404 = vmatprep.subr.bf16.mxu0 0
        %3405 = vmatpush1.bf16.msra.mxu0 0
        %3406 = vmatprep.subr.bf16.mxu0 0
        %3407 = vmatpush1.bf16.msra.mxu0 0
        %3408 = vmatprep.subr.bf16.mxu0 0
        %3409 = vmatpush1.bf16.msra.mxu0 0
        %3410 = vmatprep.subr.bf16.mxu0 0
        %3411 = vmatpush1.bf16.msra.mxu0 0
        %3412 = vmatprep.subr.bf16.mxu0 0
        %3413 = vmatpush1.bf16.msra.mxu0 0
        %3414 = vmatprep.subr.bf16.mxu0 0
        %3415 = vmatpush1.bf16.msra.mxu0 0
        %3416 = vmatprep.subr.bf16.mxu0 0
        %3417 = vmatpush1.bf16.msra.mxu0 %v3380
        %3418 = vmatprep.subr.bf16.mxu0 0
        %3419 = vmatpush2.bf16.msra.mxu0 0
        %3420 = vmatprep.subr.bf16.mxu0 0
        %3421 = vmatpush2.bf16.msra.mxu0 0
        %3422 = vmatprep.subr.bf16.mxu0 0
        %3423 = vmatpush2.bf16.msra.mxu0 0
        %3424 = vmatprep.subr.bf16.mxu0 0
        %3425 = vmatpush2.bf16.msra.mxu0 0
        %3426 = vmatprep.subr.bf16.mxu0 0
        %3427 = vmatpush2.bf16.msra.mxu0 0
        %3428 = vmatprep.subr.bf16.mxu0 0
        %3429 = vmatpush2.bf16.msra.mxu0 0
        %3430 = vmatprep.subr.bf16.mxu0 0
        %3431 = vmatpush2.bf16.msra.mxu0 0
        %3432 = vmatprep.subr.bf16.mxu0 0
        %3433 = vmatpush2.bf16.msra.mxu0 0
        %3434 = vmatprep.mubr.bf16.mxu0 0
        %3435 = vmatmul.mubr.bf16.gmra.mxu0 %v3397
        %v3436 = vpop.f32.mrf.mxu0
        %v3437 = vadd.f32 0.0, %v3436
        %v3438 = vpop.f32.mrf.mxu0
        %v3439 = vpop.f32.mrf.mxu0
        %v3440 = vadd.f32 0.0, %v3439
        %v3441 = vpop.f32.mrf.mxu0
        %3442 = vmatprep.mubr.bf16.mxu0 0
        %3443 = vmatmul.mubr.bf16.gmra.mxu0 %v3400
        %v3444 = vpop.f32.mrf.mxu0
        %v3445 = vadd.f32 0.0, %v3444
        %v3446 = vpop.f32.mrf.mxu0
        %v3447 = vpop.f32.mrf.mxu0
        %v3448 = vadd.f32 0.0, %v3447
        %v3449 = vpop.f32.mrf.mxu0
        %3450 = vdwg.mxu0
        %v3451 = vadd.f32 %v3302, %v3437
        %v3452 = vadd.f32 %v3303, %v3440
        %v3453 = vadd.f32 %v3304, %v3445
        %v3454 = vadd.f32 %v3305, %v3448
        %s3455 = scalar_lea.vmem %s5, 224
        %v3456 = vld [vmem:[%s3455] sm:$0xf]
        %v3457 = vld [vmem:[%s3455 + $0x4] sm:$0xf]
        %v3458 = vld [vmem:[%s3455 + $0x8] sm:$0xf]
        %v3459 = vld [vmem:[%s3455 + $0xc] sm:$0xf]
        %v3460 = vld [vmem:[%s3455 + $0x10] sm:$0xf]
        %v3461 = vld [vmem:[%s3455 + $0x14] sm:$0xf]
        %v3462 = vld [vmem:[%s3455 + $0x18] sm:$0xf]
        %v3463 = vld [vmem:[%s3455 + $0x1c] sm:$0xf]
        %v3472 = vunpack.c.l.b16 %v3456
        %v3473 = vunpack.c.l.b16 %v3457
        %v3474 = vunpack.c.l.b16 %v3458
        %v3475 = vunpack.c.l.b16 %v3459
        %v3476 = vunpack.c.l.b16 %v3460
        %v3477 = vunpack.c.l.b16 %v3461
        %v3478 = vunpack.c.l.b16 %v3462
        %v3479 = vunpack.c.l.b16 %v3463
        %v3480 = vpack.c.b16 %v3473, %v3472
        %v3481 = vpack.c.b16 %v3475, %v3474
        %v3482 = vpack.c.b16 %v3477, %v3476
        %v3483 = vpack.c.b16 %v3479, %v3478
        %3488 = vmatprep.subr.bf16.mxu0 0
        %3489 = vmatpush1.bf16.msra.mxu0 0
        %3490 = vmatprep.subr.bf16.mxu0 0
        %3491 = vmatpush1.bf16.msra.mxu0 0
        %3492 = vmatprep.subr.bf16.mxu0 0
        %3493 = vmatpush1.bf16.msra.mxu0 0
        %3494 = vmatprep.subr.bf16.mxu0 0
        %3495 = vmatpush1.bf16.msra.mxu0 0
        %3496 = vmatprep.subr.bf16.mxu0 0
        %3497 = vmatpush1.bf16.msra.mxu0 %v3483
        %3498 = vmatprep.subr.bf16.mxu0 0
        %3499 = vmatpush1.bf16.msra.mxu0 %v3482
        %3500 = vmatprep.subr.bf16.mxu0 0
        %3501 = vmatpush1.bf16.msra.mxu0 %v3481
        %3502 = vmatprep.subr.bf16.mxu0 0
        %3503 = vmatpush1.bf16.msra.mxu0 %v3480
        %3504 = vmatprep.subr.bf16.mxu0 0
        %3505 = vmatpush2.bf16.msra.mxu0 0
        %3506 = vmatprep.subr.bf16.mxu0 0
        %3507 = vmatpush2.bf16.msra.mxu0 0
        %3508 = vmatprep.subr.bf16.mxu0 0
        %3509 = vmatpush2.bf16.msra.mxu0 0
        %3510 = vmatprep.subr.bf16.mxu0 0
        %3511 = vmatpush2.bf16.msra.mxu0 0
        %3512 = vmatprep.subr.bf16.mxu0 0
        %3513 = vmatpush2.bf16.msra.mxu0 0
        %3514 = vmatprep.subr.bf16.mxu0 0
        %3515 = vmatpush2.bf16.msra.mxu0 0
        %3516 = vmatprep.subr.bf16.mxu0 0
        %3517 = vmatpush2.bf16.msra.mxu0 0
        %3518 = vmatprep.subr.bf16.mxu0 0
        %3519 = vmatpush2.bf16.msra.mxu0 0
        %3520 = vmatprep.mubr.bf16.mxu0 0
        %3521 = vmatmul.mubr.bf16.gmra.mxu0 %v2451
        %v3522 = vpop.f32.mrf.mxu0
        %v3523 = vadd.f32 0.0, %v3522
        %v3524 = vpop.f32.mrf.mxu0
        %v3525 = vpop.f32.mrf.mxu0
        %v3526 = vadd.f32 0.0, %v3525
        %v3527 = vpop.f32.mrf.mxu0
        %3528 = vdwg.mxu0
        %v3529 = vpack.c.bf16 %v3526, %v3523
        %s3530 = scalar_lea.vmem %s4, 112
        %v3531 = vld [vmem:[%s3530] sm:$0xf]
        %v3532 = vld [vmem:[%s3530 + $0x4] sm:$0xf]
        %v3533 = vld [vmem:[%s3530 + $0x8] sm:$0xf]
        %v3534 = vld [vmem:[%s3530 + $0xc] sm:$0xf]
        %v3539 = vunpack.c.l.b16 %v3531
        %v3540 = vunpack.c.l.b16 %v3532
        %v3541 = vunpack.c.l.b16 %v3533
        %v3542 = vunpack.c.l.b16 %v3534
        %v3543 = vpack.c.b16 %v3540, %v3539
        %v3544 = vpack.c.b16 %v3542, %v3541
        %v3546 = vsel %vm2589, %v3543, 0
        %v3549 = vsel %vm2589, %v3544, 0
        %3551 = vmatprep.subr.bf16.mxu0 0
        %3552 = vmatpush1.bf16.msra.mxu0 0
        %3553 = vmatprep.subr.bf16.mxu0 0
        %3554 = vmatpush1.bf16.msra.mxu0 0
        %3555 = vmatprep.subr.bf16.mxu0 0
        %3556 = vmatpush1.bf16.msra.mxu0 0
        %3557 = vmatprep.subr.bf16.mxu0 0
        %3558 = vmatpush1.bf16.msra.mxu0 0
        %3559 = vmatprep.subr.bf16.mxu0 0
        %3560 = vmatpush1.bf16.msra.mxu0 0
        %3561 = vmatprep.subr.bf16.mxu0 0
        %3562 = vmatpush1.bf16.msra.mxu0 0
        %3563 = vmatprep.subr.bf16.mxu0 0
        %3564 = vmatpush1.bf16.msra.mxu0 0
        %3565 = vmatprep.subr.bf16.mxu0 0
        %3566 = vmatpush1.bf16.msra.mxu0 %v3529
        %3567 = vmatprep.subr.bf16.mxu0 0
        %3568 = vmatpush2.bf16.msra.mxu0 0
        %3569 = vmatprep.subr.bf16.mxu0 0
        %3570 = vmatpush2.bf16.msra.mxu0 0
        %3571 = vmatprep.subr.bf16.mxu0 0
        %3572 = vmatpush2.bf16.msra.mxu0 0
        %3573 = vmatprep.subr.bf16.mxu0 0
        %3574 = vmatpush2.bf16.msra.mxu0 0
        %3575 = vmatprep.subr.bf16.mxu0 0
        %3576 = vmatpush2.bf16.msra.mxu0 0
        %3577 = vmatprep.subr.bf16.mxu0 0
        %3578 = vmatpush2.bf16.msra.mxu0 0
        %3579 = vmatprep.subr.bf16.mxu0 0
        %3580 = vmatpush2.bf16.msra.mxu0 0
        %3581 = vmatprep.subr.bf16.mxu0 0
        %3582 = vmatpush2.bf16.msra.mxu0 0
        %3583 = vmatprep.mubr.bf16.mxu0 0
        %3584 = vmatmul.mubr.bf16.gmra.mxu0 %v3546
        %v3585 = vpop.f32.mrf.mxu0
        %v3586 = vadd.f32 0.0, %v3585
        %v3587 = vpop.f32.mrf.mxu0
        %v3588 = vpop.f32.mrf.mxu0
        %v3589 = vadd.f32 0.0, %v3588
        %v3590 = vpop.f32.mrf.mxu0
        %3591 = vmatprep.mubr.bf16.mxu0 0
        %3592 = vmatmul.mubr.bf16.gmra.mxu0 %v3549
        %v3593 = vpop.f32.mrf.mxu0
        %v3594 = vadd.f32 0.0, %v3593
        %v3595 = vpop.f32.mrf.mxu0
        %v3596 = vpop.f32.mrf.mxu0
        %v3597 = vadd.f32 0.0, %v3596
        %v3598 = vpop.f32.mrf.mxu0
        %3599 = vdwg.mxu0
        %v3600 = vadd.f32 %v3451, %v3586
        %v3601 = vadd.f32 %v3452, %v3589
        %v3602 = vadd.f32 %v3453, %v3594
        %v3603 = vadd.f32 %v3454, %v3597
        %s3604 = scalar_lea.vmem %s5, 256
        %v3605 = vld [vmem:[%s3604] sm:$0xf]
        %v3606 = vld [vmem:[%s3604 + $0x4] sm:$0xf]
        %v3607 = vld [vmem:[%s3604 + $0x8] sm:$0xf]
        %v3608 = vld [vmem:[%s3604 + $0xc] sm:$0xf]
        %v3609 = vld [vmem:[%s3604 + $0x10] sm:$0xf]
        %v3610 = vld [vmem:[%s3604 + $0x14] sm:$0xf]
        %v3611 = vld [vmem:[%s3604 + $0x18] sm:$0xf]
        %v3612 = vld [vmem:[%s3604 + $0x1c] sm:$0xf]
        %v3621 = vunpack.c.l.b16 %v3605
        %v3622 = vunpack.c.l.b16 %v3606
        %v3623 = vunpack.c.l.b16 %v3607
        %v3624 = vunpack.c.l.b16 %v3608
        %v3625 = vunpack.c.l.b16 %v3609
        %v3626 = vunpack.c.l.b16 %v3610
        %v3627 = vunpack.c.l.b16 %v3611
        %v3628 = vunpack.c.l.b16 %v3612
        %v3629 = vpack.c.b16 %v3622, %v3621
        %v3630 = vpack.c.b16 %v3624, %v3623
        %v3631 = vpack.c.b16 %v3626, %v3625
        %v3632 = vpack.c.b16 %v3628, %v3627
        %3637 = vmatprep.subr.bf16.mxu0 0
        %3638 = vmatpush1.bf16.msra.mxu0 0
        %3639 = vmatprep.subr.bf16.mxu0 0
        %3640 = vmatpush1.bf16.msra.mxu0 0
        %3641 = vmatprep.subr.bf16.mxu0 0
        %3642 = vmatpush1.bf16.msra.mxu0 0
        %3643 = vmatprep.subr.bf16.mxu0 0
        %3644 = vmatpush1.bf16.msra.mxu0 0
        %3645 = vmatprep.subr.bf16.mxu0 0
        %3646 = vmatpush1.bf16.msra.mxu0 %v3632
        %3647 = vmatprep.subr.bf16.mxu0 0
        %3648 = vmatpush1.bf16.msra.mxu0 %v3631
        %3649 = vmatprep.subr.bf16.mxu0 0
        %3650 = vmatpush1.bf16.msra.mxu0 %v3630
        %3651 = vmatprep.subr.bf16.mxu0 0
        %3652 = vmatpush1.bf16.msra.mxu0 %v3629
        %3653 = vmatprep.subr.bf16.mxu0 0
        %3654 = vmatpush2.bf16.msra.mxu0 0
        %3655 = vmatprep.subr.bf16.mxu0 0
        %3656 = vmatpush2.bf16.msra.mxu0 0
        %3657 = vmatprep.subr.bf16.mxu0 0
        %3658 = vmatpush2.bf16.msra.mxu0 0
        %3659 = vmatprep.subr.bf16.mxu0 0
        %3660 = vmatpush2.bf16.msra.mxu0 0
        %3661 = vmatprep.subr.bf16.mxu0 0
        %3662 = vmatpush2.bf16.msra.mxu0 0
        %3663 = vmatprep.subr.bf16.mxu0 0
        %3664 = vmatpush2.bf16.msra.mxu0 0
        %3665 = vmatprep.subr.bf16.mxu0 0
        %3666 = vmatpush2.bf16.msra.mxu0 0
        %3667 = vmatprep.subr.bf16.mxu0 0
        %3668 = vmatpush2.bf16.msra.mxu0 0
        %3669 = vmatprep.mubr.bf16.mxu0 0
        %3670 = vmatmul.mubr.bf16.gmra.mxu0 %v2451
        %v3671 = vpop.f32.mrf.mxu0
        %v3672 = vadd.f32 0.0, %v3671
        %v3673 = vpop.f32.mrf.mxu0
        %v3674 = vpop.f32.mrf.mxu0
        %v3675 = vadd.f32 0.0, %v3674
        %v3676 = vpop.f32.mrf.mxu0
        %3677 = vdwg.mxu0
        %v3678 = vpack.c.bf16 %v3675, %v3672
        %s3679 = scalar_lea.vmem %s4, 128
        %v3680 = vld [vmem:[%s3679] sm:$0xf]
        %v3681 = vld [vmem:[%s3679 + $0x4] sm:$0xf]
        %v3682 = vld [vmem:[%s3679 + $0x8] sm:$0xf]
        %v3683 = vld [vmem:[%s3679 + $0xc] sm:$0xf]
        %v3688 = vunpack.c.l.b16 %v3680
        %v3689 = vunpack.c.l.b16 %v3681
        %v3690 = vunpack.c.l.b16 %v3682
        %v3691 = vunpack.c.l.b16 %v3683
        %v3692 = vpack.c.b16 %v3689, %v3688
        %v3693 = vpack.c.b16 %v3691, %v3690
        %v3695 = vsel %vm2589, %v3692, 0
        %v3698 = vsel %vm2589, %v3693, 0
        %3700 = vmatprep.subr.bf16.mxu0 0
        %3701 = vmatpush1.bf16.msra.mxu0 0
        %3702 = vmatprep.subr.bf16.mxu0 0
        %3703 = vmatpush1.bf16.msra.mxu0 0
        %3704 = vmatprep.subr.bf16.mxu0 0
        %3705 = vmatpush1.bf16.msra.mxu0 0
        %3706 = vmatprep.subr.bf16.mxu0 0
        %3707 = vmatpush1.bf16.msra.mxu0 0
        %3708 = vmatprep.subr.bf16.mxu0 0
        %3709 = vmatpush1.bf16.msra.mxu0 0
        %3710 = vmatprep.subr.bf16.mxu0 0
        %3711 = vmatpush1.bf16.msra.mxu0 0
        %3712 = vmatprep.subr.bf16.mxu0 0
        %3713 = vmatpush1.bf16.msra.mxu0 0
        %3714 = vmatprep.subr.bf16.mxu0 0
        %3715 = vmatpush1.bf16.msra.mxu0 %v3678
        %3716 = vmatprep.subr.bf16.mxu0 0
        %3717 = vmatpush2.bf16.msra.mxu0 0
        %3718 = vmatprep.subr.bf16.mxu0 0
        %3719 = vmatpush2.bf16.msra.mxu0 0
        %3720 = vmatprep.subr.bf16.mxu0 0
        %3721 = vmatpush2.bf16.msra.mxu0 0
        %3722 = vmatprep.subr.bf16.mxu0 0
        %3723 = vmatpush2.bf16.msra.mxu0 0
        %3724 = vmatprep.subr.bf16.mxu0 0
        %3725 = vmatpush2.bf16.msra.mxu0 0
        %3726 = vmatprep.subr.bf16.mxu0 0
        %3727 = vmatpush2.bf16.msra.mxu0 0
        %3728 = vmatprep.subr.bf16.mxu0 0
        %3729 = vmatpush2.bf16.msra.mxu0 0
        %3730 = vmatprep.subr.bf16.mxu0 0
        %3731 = vmatpush2.bf16.msra.mxu0 0
        %3732 = vmatprep.mubr.bf16.mxu0 0
        %3733 = vmatmul.mubr.bf16.gmra.mxu0 %v3695
        %v3734 = vpop.f32.mrf.mxu0
        %v3735 = vadd.f32 0.0, %v3734
        %v3736 = vpop.f32.mrf.mxu0
        %v3737 = vpop.f32.mrf.mxu0
        %v3738 = vadd.f32 0.0, %v3737
        %v3739 = vpop.f32.mrf.mxu0
        %3740 = vmatprep.mubr.bf16.mxu0 0
        %3741 = vmatmul.mubr.bf16.gmra.mxu0 %v3698
        %v3742 = vpop.f32.mrf.mxu0
        %v3743 = vadd.f32 0.0, %v3742
        %v3744 = vpop.f32.mrf.mxu0
        %v3745 = vpop.f32.mrf.mxu0
        %v3746 = vadd.f32 0.0, %v3745
        %v3747 = vpop.f32.mrf.mxu0
        %3748 = vdwg.mxu0
        %v3749 = vadd.f32 %v3600, %v3735
        %v3750 = vadd.f32 %v3601, %v3738
        %v3751 = vadd.f32 %v3602, %v3743
        %v3752 = vadd.f32 %v3603, %v3746
        %v3753 = vld [vmem:[%s6] sm:$0xff]
        %v3754 = vld [vmem:[%s6 + $0x8] sm:$0xff]
        %v3755 = vld [vmem:[%s6 + $0x10] sm:$0xff]
        %v3756 = vld [vmem:[%s6 + $0x18] sm:$0xff]
        %3758 = vset.pattern.permute.xlu0 0
        %3759 = vperm.xlu0 %3758, %v3753
        %v3760 = vpop.permute.xlu0 %3759
        %3763 = vset.pattern.permute.xlu0 0
        %3764 = vperm.xlu0 %3763, %v3754
        %v3765 = vpop.permute.xlu0 %3764
        %3768 = vset.pattern.permute.xlu0 0
        %3769 = vperm.xlu0 %3768, %v3755
        %v3770 = vpop.permute.xlu0 %3769
        %3773 = vset.pattern.permute.xlu0 0
        %3774 = vperm.xlu0 %3773, %v3756
        %v3775 = vpop.permute.xlu0 %3774
        %v3777 = vadd.f32 %v3749, %v3760
        %v3778 = vadd.f32 %v3750, %v3765
        %v3779 = vadd.f32 %v3751, %v3770
        %v3780 = vadd.f32 %v3752, %v3775
        %v3781 = vmax.f32 %v3777, 0.0
        %v3782 = vmax.f32 %v3778, 0.0
        %v3783 = vmax.f32 %v3779, 0.0
        %v3784 = vmax.f32 %v3780, 0.0
        %v3785 = vpack.c.bf16 %v3782, %v3781
        %v3786 = vpack.c.bf16 %v3784, %v3783
        %v3787 = vld [vmem:[%s7] sm:$0xf]
        %v3788 = vld [vmem:[%s7 + $0x4] sm:$0xf]
        %v3789 = vld [vmem:[%s8] sm:$0x1]
        %v3791 = vlaneseq
        %v3792 = vshrl.u32 %v3791, 7
        %v3793 = vsub.s32 0, %v3792
        %v3794 = vrot.slane %v3789, %v3793
        %v3798 = vunpack.c.l.b16 %v3787
        %v3799 = vunpack.c.l.b16 %v3788
        %v3800 = vpack.c.b16 %v3799, %v3798
        %v3803 = vsel %vm2589, %v3785, 0
        %v3806 = vsel %vm2589, %v3786, 0
        %3808 = vmatprep.subr.bf16.mxu0 0
        %3809 = vmatpush1.bf16.msra.mxu0 0
        %3810 = vmatprep.subr.bf16.mxu0 0
        %3811 = vmatpush1.bf16.msra.mxu0 0
        %3812 = vmatprep.subr.bf16.mxu0 0
        %3813 = vmatpush1.bf16.msra.mxu0 0
        %3814 = vmatprep.subr.bf16.mxu0 0
        %3815 = vmatpush1.bf16.msra.mxu0 0
        %3816 = vmatprep.subr.bf16.mxu0 0
        %3817 = vmatpush1.bf16.msra.mxu0 0
        %3818 = vmatprep.subr.bf16.mxu0 0
        %3819 = vmatpush1.bf16.msra.mxu0 0
        %3820 = vmatprep.subr.bf16.mxu0 0
        %3821 = vmatpush1.bf16.msra.mxu0 0
        %3822 = vmatprep.subr.bf16.mxu0 0
        %3823 = vmatpush1.bf16.msra.mxu0 %v3800
        %3824 = vmatprep.subr.bf16.mxu0 0
        %3825 = vmatpush2.bf16.msra.mxu0 0
        %3826 = vmatprep.subr.bf16.mxu0 0
        %3827 = vmatpush2.bf16.msra.mxu0 0
        %3828 = vmatprep.subr.bf16.mxu0 0
        %3829 = vmatpush2.bf16.msra.mxu0 0
        %3830 = vmatprep.subr.bf16.mxu0 0
        %3831 = vmatpush2.bf16.msra.mxu0 0
        %3832 = vmatprep.subr.bf16.mxu0 0
        %3833 = vmatpush2.bf16.msra.mxu0 0
        %3834 = vmatprep.subr.bf16.mxu0 0
        %3835 = vmatpush2.bf16.msra.mxu0 0
        %3836 = vmatprep.subr.bf16.mxu0 0
        %3837 = vmatpush2.bf16.msra.mxu0 0
        %3838 = vmatprep.subr.bf16.mxu0 0
        %3839 = vmatpush2.bf16.msra.mxu0 0
        %3840 = vmatprep.mubr.bf16.mxu0 0
        %3841 = vmatmul.mubr.bf16.gmra.mxu0 %v3803
        %v3842 = vpop.f32.mrf.mxu0
        %v3843 = vadd.f32 %v3794, %v3842
        %v3844 = vpop.f32.mrf.mxu0
        %v3845 = vpop.f32.mrf.mxu0
        %v3846 = vadd.f32 %v3794, %v3845
        %v3847 = vpop.f32.mrf.mxu0
        %3848 = vmatprep.mubr.bf16.mxu0 0
        %3849 = vmatmul.mubr.bf16.gmra.mxu0 %v3806
        %v3850 = vpop.f32.mrf.mxu0
        %v3851 = vadd.f32 %v3794, %v3850
        %v3852 = vpop.f32.mrf.mxu0
        %v3853 = vpop.f32.mrf.mxu0
        %v3854 = vadd.f32 %v3794, %v3853
        %v3855 = vpop.f32.mrf.mxu0
        %3856 = vdwg.mxu0
        %3857 = vst [vmem:[%s347] sm:$0xff] %v3843
        %3858 = vst [vmem:[%s347 + $0x8] sm:$0xff] %v3846
        %3859 = vst [vmem:[%s347 + $0x10] sm:$0xff] %v3851
        %3860 = vst [vmem:[%s347 + $0x18] sm:$0xff] %v3854
        %p3861 = scmp.lt.s32.totalorder %s21, 1
        %s3862 = scalar_select %p3861, %s21, 1
        %s3863 = smul.addr %s3862, 4
        %s3864 = smul.addr %s3863, 8
        %s3865 = scalar_lea.vmem %s9, %s3864
        // Predicated region
        $region61: #{encoder_forward.1} parent=55 // pred_check
          %p3866 = pneg %p233
        $region62: #{encoder_forward.1} parent=55 // pred_check_branch
          %3868 = sbr.rel (%p3866) target = $region64
        $region63: #{encoder_forward.1} parent=55 // pred_region
          _
        $region64: #{encoder_forward.1} parent=55 // pred_fallthru
          _
      $region56: #{encoder_forward.1} parent=5 // pred_fallthru
        _
      %p3869 = scmp.le.s32.totalorder 2, %s16
      // Predicated region
      $region65: #{encoder_forward.1} parent=5 // pred_check
        %p3870 = pneg %p3869
      $region66: #{encoder_forward.1} parent=5 // pred_check_branch
        %3872 = sbr.rel (%p3870) target = $region68
      $region67: #{encoder_forward.1} parent=5 // pred_region
        %s3873 = ssub.s32 %s16, 2
        // Predicated region
        $region69: #{encoder_forward.1} parent=67 // pred_check
          %p3874 = pneg %p239
        $region70: #{encoder_forward.1} parent=67 // pred_check_branch
          %3876 = sbr.rel (%p3874) target = $region72
        $region71: #{encoder_forward.1} parent=67 // pred_region
          %p3877 = scmp.lt.s32.totalorder %s22, 1
          %s3878 = scalar_select %p3877, %s22, 1
          %s3879 = smul.addr %s3878, 4
          %s3880 = smul.addr %s3879, 8
          %s3881 = scalar_lea.vmem %s9, %s3880
        $region72: #{encoder_forward.1} parent=67 // pred_fallthru
          _
      $region68: #{encoder_forward.1} parent=5 // pred_fallthru
        _
    $region6: #{encoder_forward.1} parent=1 // loop_footer
      %s20 = sadd.s32 1, %s16
    $region7: #{encoder_forward.1} parent=1 // loop_footer_branch
      %15 = sbr.rel target = $region3
    $region8: #{encoder_forward.1} parent=1 // loop_exit
      _
    %3882 = vsyncpa [#allocation3], 1
    %s3883 = scalar_lea.sflag [#allocation3], 1
    %3884 = vsyncpa %s3883, 1

</llo_original>
